<compile_context>
chip_gen: v6e
topology: v6e:2x2x1
jax: 0.10.0
libtpu: 0.0.40
codegen_flags: <defaults>
</compile_context>

<pallas_src>
import jax
import jax.numpy as jnp
from jax import lax
from jax.experimental import pallas as pl
from jax.experimental.pallas import tpu as pltpu


def lstm_fc_softmax_kernel(gx0_ref, whh0_ref, wih1_ref, whh1_ref, b1_ref,
                           fcw_ref, fcb_ref, out_ref, h0_all_ref):
    """gx0_ref: (L, B, 4H) f32 layer-0 input gates (BN + bias + 0.5-prescale
    folded).  whh0/wih1/whh1: (H, 4H) bf16 with the same i/f/o prescale.
    fcw_ref: (O, H) f32.  out_ref: (B, O).  h0_all_ref: (L*B, H) f32 scratch."""
    L, B, G = gx0_ref.shape
    H = G // 4
    O = out_ref.shape[1]

    # Loop-invariant weight loads hoisted out of both recurrences (~6 vregs).
    whh0 = whh0_ref[...]
    wih1 = wih1_ref[...]
    whh1 = whh1_ref[...]
    b1 = b1_ref[...]

    # sigma(x) = 0.5*tanh(0.5*x) + 0.5; the 0.5 input prescale lives in the
    # prepared weights, so one full-width tanh + one masked FMA realises
    # sigmoid on the i/f/o lane blocks and tanh on the g block (PyTorch gate
    # order i, f, g, o).  Masks built once, outside the loops.
    lane = lax.broadcasted_iota(jnp.int32, (B, G), 1)
    is_g = (lane >= 2 * H) & (lane < 3 * H)
    gate_scale = jnp.where(is_g, 1.0, 0.5)
    gate_shift = jnp.where(is_g, 0.0, 0.5)

    def cell(halved_gates, c_prev):
        act = jnp.tanh(halved_gates)                 # one EUP push, full width
        gates = act * gate_scale + gate_shift        # sigma on i/f/o, tanh on g
        i = gates[:, 0:H]
        f = gates[:, H:2 * H]
        g = gates[:, 2 * H:3 * H]
        o = gates[:, 3 * H:4 * H]
        c_new = f * c_prev + i * g
        h_new = o * jnp.tanh(c_new)
        return h_new, c_new

    zeros = jnp.zeros((B, H), jnp.float32)

    # ---- Pass 1: layer-0 recurrence (only h0 @ whh0 on the serial chain). ---
    h0, c0 = zeros, zeros
    for t in range(L):
        g0 = gx0_ref[t] + jnp.dot(h0.astype(jnp.bfloat16), whh0,
                                  preferred_element_type=jnp.float32)
        h0, c0 = cell(g0, c0)
        h0_all_ref[pl.ds(t * B, B), :] = h0      # stash (off the dep chain)

    # ---- Hoisted layer-1 input projection: one batched matmul off-chain. ----
    gx1 = jnp.dot(h0_all_ref[...].astype(jnp.bfloat16), wih1,
                  preferred_element_type=jnp.float32) + b1        # (L*B, 4H)

    # ---- Pass 2: layer-1 recurrence (only h1 @ whh1 on the serial chain). ---
    # TODO(synk): nn.LSTM's inter-layer Dropout(0.3) and the post-fc Dropout
    # are identity in eval mode; omitted.
    h1, c1 = zeros, zeros
    for t in range(L):
        g1 = gx1[t * B:(t + 1) * B, :] + jnp.dot(
            h1.astype(jnp.bfloat16), whh1, preferred_element_type=jnp.float32)
        h1, c1 = cell(g1, c1)

    # fc on the last timestep's hidden of the top layer + Softmax(dim=1).
    if O == 1:
        # N=1 head: lane reduction on VPU/XLU instead of an MXU push/pop.
        logits = jnp.sum(h1 * fcw_ref[...], axis=1, keepdims=True) + fcb_ref[...]
    else:
        logits = lax.dot_general(
            h1.astype(jnp.bfloat16), fcw_ref[...].astype(jnp.bfloat16),
            (((1,), (1,)), ((), ())),
            preferred_element_type=jnp.float32) + fcb_ref[...]
    m = jnp.max(logits, axis=1, keepdims=True)
    e = jnp.exp(logits - m)
    out_ref[...] = e * pl.reciprocal(jnp.sum(e, axis=1, keepdims=True),
                                     approx=True)


def prepare_params(params, eps=1e-5):
    """One-time weight prep (param-load time, not per call):
      * fold eval-mode BatchNorm into the layer-0 input projection,
      * fold the sigma(x)=0.5*tanh(0.5x)+0.5 prescale (0.5 on i/f/o gate
        columns) into every gate weight / bias,
      * transpose matmul weights to (K, 4H), fuse per-layer bias pairs,
      * cast the in-kernel matmul weights to bf16 for the MXU."""
    H = params["whh0"].shape[1]
    scale = params["bn_gamma"] / jnp.sqrt(params["bn_var"] + eps)      # (C,)
    shift = params["bn_beta"] - params["bn_mean"] * scale              # (C,)
    colscale = jnp.ones((4 * H,), jnp.float32)
    colscale = colscale.at[:2 * H].set(0.5).at[3 * H:].set(0.5)        # i,f,o
    wih0_t = params["wih0"].T * scale[:, None] * colscale[None, :]     # (C,4H)
    b0 = (shift @ params["wih0"].T + params["bih0"] + params["bhh0"]) * colscale
    f32 = lambda a: a.astype(jnp.float32)
    bf16 = lambda a: a.astype(jnp.bfloat16)
    return dict(
        wih0_t=f32(wih0_t),                       # wrapper-side einsum stays f32
        b0=f32(b0.reshape(1, 4 * H)),
        whh0_t=bf16(params["whh0"].T * colscale[None, :]),   # (H,4H) bf16
        wih1_t=bf16(params["wih1"].T * colscale[None, :]),
        whh1_t=bf16(params["whh1"].T * colscale[None, :]),
        b1=f32(((params["bih1"] + params["bhh1"]) * colscale).reshape(1, 4 * H)),
        fcw_oh=f32(params["fcw"]),                # (O, H), used by the VPU head
        fcb=f32(params["fcb"].reshape(1, -1)),
    )


def _pick_b_block(B, num_tensorcores):
    """v5e/v6e (1 TC): one block, grid=(1,) -- no per-step grid overhead.
    v7x (2 TC): ~B/num_tc rounded up to a sublane multiple so each TensorCore
    gets one big block via dimension_semantics=('parallel',)."""
    if num_tensorcores <= 1 or B < 8 * num_tensorcores:
        return B
    blk = -(-B // num_tensorcores)        # ceil(B / num_tc)
    blk = -(-blk // 8) * 8                # round up to sublane multiple
    return blk if B % blk == 0 else B


def lstm_classifier_forward(x1, x2, prep, *, num_tensorcores=1):
    # --- plain-JAX glue: concat + hoisted (BN-folded) layer-0 projection -----
    x = jnp.concatenate([x1, x2], axis=1).astype(jnp.float32)      # (B, C, L)
    B, C, L = x.shape
    H = prep["whh0_t"].shape[0]
    G = 4 * H
    O = prep["fcw_oh"].shape[0]

    # Produce gx0 directly in its time-major (L, B, 4H) layout (transpose the
    # tiny x first) so no separate transpose of the kernel's largest input is
    # materialized and gx0_ref[t] slabs stay lane-dense (G = 4H last).
    xt = jnp.transpose(x, (2, 0, 1))                               # (L, B, C)
    gx0 = jnp.einsum("lbc,cg->lbg", xt, prep["wih0_t"],
                     precision=lax.Precision.HIGHEST) + prep["b0"]

    b_block = _pick_b_block(B, num_tensorcores)
    grid = (B // b_block,)

    return pl.pallas_call(
        lstm_fc_softmax_kernel,
        out_shape=jax.ShapeDtypeStruct((B, O), jnp.float32),
        grid=grid,
        in_specs=[
            pl.BlockSpec((L, b_block, G), lambda b: (0, b, 0)),    # gx0
            pl.BlockSpec((H, G), lambda b: (0, 0)),                # whh0' bf16
            pl.BlockSpec((H, G), lambda b: (0, 0)),                # wih1' bf16
            pl.BlockSpec((H, G), lambda b: (0, 0)),                # whh1' bf16
            pl.BlockSpec((1, G), lambda b: (0, 0)),                # b1'
            pl.BlockSpec((O, H), lambda b: (0, 0)),                # fc weight
            pl.BlockSpec((1, O), lambda b: (0, 0)),                # fc bias
        ],
        out_specs=pl.BlockSpec((b_block, O), lambda b: (b, 0)),
        scratch_shapes=[pltpu.VMEM((L * b_block, H), jnp.float32)],  # h0 stash
        compiler_params=pltpu.CompilerParams(
            dimension_semantics=("parallel",)),
    )(gx0, prep["whh0_t"], prep["wih1_t"], prep["whh1_t"], prep["b1"],
      prep["fcw_oh"], prep["fcb"])


def init_params(key, in_ch, hidden_size, output_size):
    H = hidden_size
    k = 1.0 / jnp.sqrt(jnp.float32(H))
    keys = jax.random.split(key, 12)
    u = lambda kk, shape: jax.random.uniform(kk, shape, jnp.float32, -k, k)
    return dict(
        # LSTM layer 0 (input size = in_ch)
        wih0=u(keys[0], (4 * H, in_ch)),
        whh0=u(keys[1], (4 * H, H)),
        bih0=u(keys[2], (4 * H,)),
        bhh0=u(keys[3], (4 * H,)),
        # LSTM layer 1 (input size = H)
        wih1=u(keys[4], (4 * H, H)),
        whh1=u(keys[5], (4 * H, H)),
        bih1=u(keys[6], (4 * H,)),
        bhh1=u(keys[7], (4 * H,)),
        # fc: Linear(H, output_size)
        fcw=u(keys[8], (output_size, H)),
        fcb=u(keys[9], (output_size,)),
        # BatchNorm1d(in_ch) — default init / running stats (eval mode)
        bn_gamma=jnp.ones((in_ch,), jnp.float32),
        bn_beta=jnp.zeros((in_ch,), jnp.float32),
        bn_mean=jnp.zeros((in_ch,), jnp.float32),
        bn_var=jnp.ones((in_ch,), jnp.float32),
    )


if __name__ == "__main__":
    key = jax.random.PRNGKey(0)
    B, L = 2, 16
    c1_ch, c2_ch = 2, 2                # x1 / x2 channels; in_ch = 4 after concat
    in_ch = c1_ch + c2_ch
    H, O = 32, 1                       # hidden_size, output_size

    kp, kx1, kx2 = jax.random.split(key, 3)
    params = init_params(kp, in_ch, H, O)
    prep = prepare_params(params)      # one-time fused/transposed/bf16 weights

    x1 = jax.random.normal(kx1, (B, c1_ch, L), jnp.float32)
    x2 = jax.random.normal(kx2, (B, c2_ch, L), jnp.float32)

    out = jax.jit(lstm_classifier_forward)(x1, x2, prep)
    jax.block_until_ready(out)
    assert out.shape == (B, O)
    assert bool(jnp.all(jnp.isfinite(out)))
    print("KERNEL_OK")
</pallas_src>

<mosaic_0001>
module attributes {stable_mosaic.version = 11 : i64} {
  func.func @lstm_fc_softmax_kernel(%arg0: i32, %arg1: memref<16x2x128xf32, #tpu.memory_space<vmem>>, %arg2: memref<32x128xbf16, #tpu.memory_space<vmem>>, %arg3: memref<32x128xbf16, #tpu.memory_space<vmem>>, %arg4: memref<32x128xbf16, #tpu.memory_space<vmem>>, %arg5: memref<1x128xf32, #tpu.memory_space<vmem>>, %arg6: memref<1x32xf32, #tpu.memory_space<vmem>>, %arg7: memref<1x1xf32, #tpu.memory_space<vmem>>, %arg8: memref<2x1xf32, #tpu.memory_space<vmem>>, %arg9: memref<32x32xf32, #tpu.memory_space<vmem>>) attributes {dimension_semantics = [#tpu.dimension_semantics<parallel>], iteration_bounds = array<i64: 1>, scalar_prefetch = 0 : i64, scratch_operands = 1 : i64, tpu.core_type = #tpu.core_type<tc>, window_params = [{transform_indices = @transform_0, window_bounds = array<i64: 16, 2, 128>}, {pipeline_mode = #tpu.pipeline_mode<synchronous>, transform_indices = @transform_1, window_bounds = array<i64: 32, 128>}, {pipeline_mode = #tpu.pipeline_mode<synchronous>, transform_indices = @transform_2, window_bounds = array<i64: 32, 128>}, {pipeline_mode = #tpu.pipeline_mode<synchronous>, transform_indices = @transform_3, window_bounds = array<i64: 32, 128>}, {pipeline_mode = #tpu.pipeline_mode<synchronous>, transform_indices = @transform_4, window_bounds = array<i64: 1, 128>}, {pipeline_mode = #tpu.pipeline_mode<synchronous>, transform_indices = @transform_5, window_bounds = array<i64: 1, 32>}, {pipeline_mode = #tpu.pipeline_mode<synchronous>, transform_indices = @transform_6, window_bounds = array<i64: 1, 1>}, {transform_indices = @transform_7, window_bounds = array<i64: 2, 1>}]} {
    %c0 = arith.constant 0 : index
    %c0_0 = arith.constant 0 : index
    %0 = vector.load %arg2[%c0, %c0_0] : memref<32x128xbf16, #tpu.memory_space<vmem>>, vector<32x128xbf16>
    %c0_1 = arith.constant 0 : index
    %c0_2 = arith.constant 0 : index
    %1 = vector.load %arg3[%c0_1, %c0_2] : memref<32x128xbf16, #tpu.memory_space<vmem>>, vector<32x128xbf16>
    %c0_3 = arith.constant 0 : index
    %c0_4 = arith.constant 0 : index
    %2 = vector.load %arg4[%c0_3, %c0_4] : memref<32x128xbf16, #tpu.memory_space<vmem>>, vector<32x128xbf16>
    %c0_5 = arith.constant 0 : index
    %c0_6 = arith.constant 0 : index
    %3 = vector.load %arg5[%c0_5, %c0_6] : memref<1x128xf32, #tpu.memory_space<vmem>>, vector<1x128xf32>
    %4 = tpu.iota {dimensions = array<i32: 1>} : vector<2x128xi32>
    %c64_i32 = arith.constant 64 : i32
    %5 = vector.broadcast %c64_i32 : i32 to vector<2x128xi32>
    %6 = arith.cmpi sge, %4, %5 : vector<2x128xi32>
    %c96_i32 = arith.constant 96 : i32
    %7 = vector.broadcast %c96_i32 : i32 to vector<2x128xi32>
    %8 = arith.cmpi slt, %4, %7 : vector<2x128xi32>
    %9 = arith.andi %6, %8 : vector<2x128xi1>
    %cst = arith.constant 1.000000e+00 : f32
    %cst_7 = arith.constant 5.000000e-01 : f32
    %10 = vector.broadcast %cst : f32 to vector<2x128xf32>
    %11 = vector.broadcast %cst_7 : f32 to vector<2x128xf32>
    %12 = arith.select %9, %10, %11 : vector<2x128xi1>, vector<2x128xf32>
    %cst_8 = arith.constant 0.000000e+00 : f32
    %cst_9 = arith.constant 5.000000e-01 : f32
    %13 = vector.broadcast %cst_8 : f32 to vector<2x128xf32>
    %14 = vector.broadcast %cst_9 : f32 to vector<2x128xf32>
    %15 = arith.select %9, %13, %14 : vector<2x128xi1>, vector<2x128xf32>
    %cst_10 = arith.constant 0.000000e+00 : f32
    %16 = vector.broadcast %cst_10 : f32 to vector<2x32xf32>
    %c0_11 = arith.constant 0 : index
    %c0_12 = arith.constant 0 : index
    %c0_13 = arith.constant 0 : index
    %17 = vector.load %arg1[%c0_11, %c0_12, %c0_13] : memref<16x2x128xf32, #tpu.memory_space<vmem>>, vector<1x2x128xf32>
    %18 = vector.shape_cast %17 : vector<1x2x128xf32> to vector<2x128xf32>
    %19 = arith.truncf %16 : vector<2x32xf32> to vector<2x32xbf16>
    %cst_14 = arith.constant dense<0.000000e+00> : vector<2x128xf32>
    %20 = tpu.matmul %19, %0, %cst_14 {dimension_numbers = #tpu.dot_dimension_numbers<[1], [0], [0], [1], [0, 0, 1, 1], [], []>} : vector<2x32xbf16>, vector<32x128xbf16>, vector<2x128xf32> -> vector<2x128xf32>
    %21 = arith.addf %18, %20 : vector<2x128xf32>
    %22 = math.tanh %21 : vector<2x128xf32>
    %23 = arith.mulf %22, %12 : vector<2x128xf32>
    %24 = arith.addf %23, %15 : vector<2x128xf32>
    %25 = vector.extract_strided_slice %24 {offsets = [0, 0], sizes = [2, 32], strides = [1, 1]} : vector<2x128xf32> to vector<2x32xf32>
    %26 = vector.extract_strided_slice %24 {offsets = [0, 32], sizes = [2, 32], strides = [1, 1]} : vector<2x128xf32> to vector<2x32xf32>
    %27 = vector.extract_strided_slice %24 {offsets = [0, 64], sizes = [2, 32], strides = [1, 1]} : vector<2x128xf32> to vector<2x32xf32>
    %28 = vector.extract_strided_slice %24 {offsets = [0, 96], sizes = [2, 32], strides = [1, 1]} : vector<2x128xf32> to vector<2x32xf32>
    %29 = arith.mulf %26, %16 : vector<2x32xf32>
    %30 = arith.mulf %25, %27 : vector<2x32xf32>
    %31 = arith.addf %29, %30 : vector<2x32xf32>
    %32 = math.tanh %31 : vector<2x32xf32>
    %33 = arith.mulf %28, %32 : vector<2x32xf32>
    %c0_15 = arith.constant 0 : index
    %c0_16 = arith.constant 0 : index
    %34 = vector.load %arg9[%c0_15, %c0_16] : memref<32x32xf32, #tpu.memory_space<vmem>>, vector<2x32xf32>
    tpu.vector_store %arg9[%c0_15, %c0_16], %33 {strides = array<i32>} : memref<32x32xf32, #tpu.memory_space<vmem>>, vector<2x32xf32>,
    %c1 = arith.constant 1 : index
    %c0_17 = arith.constant 0 : index
    %c0_18 = arith.constant 0 : index
    %35 = vector.load %arg1[%c1, %c0_17, %c0_18] : memref<16x2x128xf32, #tpu.memory_space<vmem>>, vector<1x2x128xf32>
    %36 = vector.shape_cast %35 : vector<1x2x128xf32> to vector<2x128xf32>
    %37 = arith.truncf %33 : vector<2x32xf32> to vector<2x32xbf16>
    %cst_19 = arith.constant dense<0.000000e+00> : vector<2x128xf32>
    %38 = tpu.matmul %37, %0, %cst_19 {dimension_numbers = #tpu.dot_dimension_numbers<[1], [0], [0], [1], [0, 0, 1, 1], [], []>} : vector<2x32xbf16>, vector<32x128xbf16>, vector<2x128xf32> -> vector<2x128xf32>
    %39 = arith.addf %36, %38 : vector<2x128xf32>
    %40 = math.tanh %39 : vector<2x128xf32>
    %41 = arith.mulf %40, %12 : vector<2x128xf32>
    %42 = arith.addf %41, %15 : vector<2x128xf32>
    %43 = vector.extract_strided_slice %42 {offsets = [0, 0], sizes = [2, 32], strides = [1, 1]} : vector<2x128xf32> to vector<2x32xf32>
    %44 = vector.extract_strided_slice %42 {offsets = [0, 32], sizes = [2, 32], strides = [1, 1]} : vector<2x128xf32> to vector<2x32xf32>
    %45 = vector.extract_strided_slice %42 {offsets = [0, 64], sizes = [2, 32], strides = [1, 1]} : vector<2x128xf32> to vector<2x32xf32>
    %46 = vector.extract_strided_slice %42 {offsets = [0, 96], sizes = [2, 32], strides = [1, 1]} : vector<2x128xf32> to vector<2x32xf32>
    %47 = arith.mulf %44, %31 : vector<2x32xf32>
    %48 = arith.mulf %43, %45 : vector<2x32xf32>
    %49 = arith.addf %47, %48 : vector<2x32xf32>
    %50 = math.tanh %49 : vector<2x32xf32>
    %51 = arith.mulf %46, %50 : vector<2x32xf32>
    %c2 = arith.constant 2 : index
    %c0_20 = arith.constant 0 : index
    %52 = vector.load %arg9[%c2, %c0_20] : memref<32x32xf32, #tpu.memory_space<vmem>>, vector<2x32xf32>
    tpu.vector_store %arg9[%c2, %c0_20], %51 {strides = array<i32>} : memref<32x32xf32, #tpu.memory_space<vmem>>, vector<2x32xf32>,
    %c2_21 = arith.constant 2 : index
    %c0_22 = arith.constant 0 : index
    %c0_23 = arith.constant 0 : index
    %53 = vector.load %arg1[%c2_21, %c0_22, %c0_23] : memref<16x2x128xf32, #tpu.memory_space<vmem>>, vector<1x2x128xf32>
    %54 = vector.shape_cast %53 : vector<1x2x128xf32> to vector<2x128xf32>
    %55 = arith.truncf %51 : vector<2x32xf32> to vector<2x32xbf16>
    %cst_24 = arith.constant dense<0.000000e+00> : vector<2x128xf32>
    %56 = tpu.matmul %55, %0, %cst_24 {dimension_numbers = #tpu.dot_dimension_numbers<[1], [0], [0], [1], [0, 0, 1, 1], [], []>} : vector<2x32xbf16>, vector<32x128xbf16>, vector<2x128xf32> -> vector<2x128xf32>
    %57 = arith.addf %54, %56 : vector<2x128xf32>
    %58 = math.tanh %57 : vector<2x128xf32>
    %59 = arith.mulf %58, %12 : vector<2x128xf32>
    %60 = arith.addf %59, %15 : vector<2x128xf32>
    %61 = vector.extract_strided_slice %60 {offsets = [0, 0], sizes = [2, 32], strides = [1, 1]} : vector<2x128xf32> to vector<2x32xf32>
    %62 = vector.extract_strided_slice %60 {offsets = [0, 32], sizes = [2, 32], strides = [1, 1]} : vector<2x128xf32> to vector<2x32xf32>
    %63 = vector.extract_strided_slice %60 {offsets = [0, 64], sizes = [2, 32], strides = [1, 1]} : vector<2x128xf32> to vector<2x32xf32>
    %64 = vector.extract_strided_slice %60 {offsets = [0, 96], sizes = [2, 32], strides = [1, 1]} : vector<2x128xf32> to vector<2x32xf32>
    %65 = arith.mulf %62, %49 : vector<2x32xf32>
    %66 = arith.mulf %61, %63 : vector<2x32xf32>
    %67 = arith.addf %65, %66 : vector<2x32xf32>
    %68 = math.tanh %67 : vector<2x32xf32>
    %69 = arith.mulf %64, %68 : vector<2x32xf32>
    %c4 = arith.constant 4 : index
    %c0_25 = arith.constant 0 : index
    %70 = vector.load %arg9[%c4, %c0_25] : memref<32x32xf32, #tpu.memory_space<vmem>>, vector<2x32xf32>
    tpu.vector_store %arg9[%c4, %c0_25], %69 {strides = array<i32>} : memref<32x32xf32, #tpu.memory_space<vmem>>, vector<2x32xf32>,
    %c3 = arith.constant 3 : index
    %c0_26 = arith.constant 0 : index
    %c0_27 = arith.constant 0 : index
    %71 = vector.load %arg1[%c3, %c0_26, %c0_27] : memref<16x2x128xf32, #tpu.memory_space<vmem>>, vector<1x2x128xf32>
    %72 = vector.shape_cast %71 : vector<1x2x128xf32> to vector<2x128xf32>
    %73 = arith.truncf %69 : vector<2x32xf32> to vector<2x32xbf16>
    %cst_28 = arith.constant dense<0.000000e+00> : vector<2x128xf32>
    %74 = tpu.matmul %73, %0, %cst_28 {dimension_numbers = #tpu.dot_dimension_numbers<[1], [0], [0], [1], [0, 0, 1, 1], [], []>} : vector<2x32xbf16>, vector<32x128xbf16>, vector<2x128xf32> -> vector<2x128xf32>
    %75 = arith.addf %72, %74 : vector<2x128xf32>
    %76 = math.tanh %75 : vector<2x128xf32>
    %77 = arith.mulf %76, %12 : vector<2x128xf32>
    %78 = arith.addf %77, %15 : vector<2x128xf32>
    %79 = vector.extract_strided_slice %78 {offsets = [0, 0], sizes = [2, 32], strides = [1, 1]} : vector<2x128xf32> to vector<2x32xf32>
    %80 = vector.extract_strided_slice %78 {offsets = [0, 32], sizes = [2, 32], strides = [1, 1]} : vector<2x128xf32> to vector<2x32xf32>
    %81 = vector.extract_strided_slice %78 {offsets = [0, 64], sizes = [2, 32], strides = [1, 1]} : vector<2x128xf32> to vector<2x32xf32>
    %82 = vector.extract_strided_slice %78 {offsets = [0, 96], sizes = [2, 32], strides = [1, 1]} : vector<2x128xf32> to vector<2x32xf32>
    %83 = arith.mulf %80, %67 : vector<2x32xf32>
    %84 = arith.mulf %79, %81 : vector<2x32xf32>
    %85 = arith.addf %83, %84 : vector<2x32xf32>
    %86 = math.tanh %85 : vector<2x32xf32>
    %87 = arith.mulf %82, %86 : vector<2x32xf32>
    %c6 = arith.constant 6 : index
    %c0_29 = arith.constant 0 : index
    %88 = vector.load %arg9[%c6, %c0_29] : memref<32x32xf32, #tpu.memory_space<vmem>>, vector<2x32xf32>
    tpu.vector_store %arg9[%c6, %c0_29], %87 {strides = array<i32>} : memref<32x32xf32, #tpu.memory_space<vmem>>, vector<2x32xf32>,
    %c4_30 = arith.constant 4 : index
    %c0_31 = arith.constant 0 : index
    %c0_32 = arith.constant 0 : index
    %89 = vector.load %arg1[%c4_30, %c0_31, %c0_32] : memref<16x2x128xf32, #tpu.memory_space<vmem>>, vector<1x2x128xf32>
    %90 = vector.shape_cast %89 : vector<1x2x128xf32> to vector<2x128xf32>
    %91 = arith.truncf %87 : vector<2x32xf32> to vector<2x32xbf16>
    %cst_33 = arith.constant dense<0.000000e+00> : vector<2x128xf32>
    %92 = tpu.matmul %91, %0, %cst_33 {dimension_numbers = #tpu.dot_dimension_numbers<[1], [0], [0], [1], [0, 0, 1, 1], [], []>} : vector<2x32xbf16>, vector<32x128xbf16>, vector<2x128xf32> -> vector<2x128xf32>
    %93 = arith.addf %90, %92 : vector<2x128xf32>
    %94 = math.tanh %93 : vector<2x128xf32>
    %95 = arith.mulf %94, %12 : vector<2x128xf32>
    %96 = arith.addf %95, %15 : vector<2x128xf32>
    %97 = vector.extract_strided_slice %96 {offsets = [0, 0], sizes = [2, 32], strides = [1, 1]} : vector<2x128xf32> to vector<2x32xf32>
    %98 = vector.extract_strided_slice %96 {offsets = [0, 32], sizes = [2, 32], strides = [1, 1]} : vector<2x128xf32> to vector<2x32xf32>
    %99 = vector.extract_strided_slice %96 {offsets = [0, 64], sizes = [2, 32], strides = [1, 1]} : vector<2x128xf32> to vector<2x32xf32>
    %100 = vector.extract_strided_slice %96 {offsets = [0, 96], sizes = [2, 32], strides = [1, 1]} : vector<2x128xf32> to vector<2x32xf32>
    %101 = arith.mulf %98, %85 : vector<2x32xf32>
    %102 = arith.mulf %97, %99 : vector<2x32xf32>
    %103 = arith.addf %101, %102 : vector<2x32xf32>
    %104 = math.tanh %103 : vector<2x32xf32>
    %105 = arith.mulf %100, %104 : vector<2x32xf32>
    %c8 = arith.constant 8 : index
    %c0_34 = arith.constant 0 : index
    %106 = vector.load %arg9[%c8, %c0_34] : memref<32x32xf32, #tpu.memory_space<vmem>>, vector<2x32xf32>
    tpu.vector_store %arg9[%c8, %c0_34], %105 {strides = array<i32>} : memref<32x32xf32, #tpu.memory_space<vmem>>, vector<2x32xf32>,
    %c5 = arith.constant 5 : index
    %c0_35 = arith.constant 0 : index
    %c0_36 = arith.constant 0 : index
    %107 = vector.load %arg1[%c5, %c0_35, %c0_36] : memref<16x2x128xf32, #tpu.memory_space<vmem>>, vector<1x2x128xf32>
    %108 = vector.shape_cast %107 : vector<1x2x128xf32> to vector<2x128xf32>
    %109 = arith.truncf %105 : vector<2x32xf32> to vector<2x32xbf16>
    %cst_37 = arith.constant dense<0.000000e+00> : vector<2x128xf32>
    %110 = tpu.matmul %109, %0, %cst_37 {dimension_numbers = #tpu.dot_dimension_numbers<[1], [0], [0], [1], [0, 0, 1, 1], [], []>} : vector<2x32xbf16>, vector<32x128xbf16>, vector<2x128xf32> -> vector<2x128xf32>
    %111 = arith.addf %108, %110 : vector<2x128xf32>
    %112 = math.tanh %111 : vector<2x128xf32>
    %113 = arith.mulf %112, %12 : vector<2x128xf32>
    %114 = arith.addf %113, %15 : vector<2x128xf32>
    %115 = vector.extract_strided_slice %114 {offsets = [0, 0], sizes = [2, 32], strides = [1, 1]} : vector<2x128xf32> to vector<2x32xf32>
    %116 = vector.extract_strided_slice %114 {offsets = [0, 32], sizes = [2, 32], strides = [1, 1]} : vector<2x128xf32> to vector<2x32xf32>
    %117 = vector.extract_strided_slice %114 {offsets = [0, 64], sizes = [2, 32], strides = [1, 1]} : vector<2x128xf32> to vector<2x32xf32>
    %118 = vector.extract_strided_slice %114 {offsets = [0, 96], sizes = [2, 32], strides = [1, 1]} : vector<2x128xf32> to vector<2x32xf32>
    %119 = arith.mulf %116, %103 : vector<2x32xf32>
    %120 = arith.mulf %115, %117 : vector<2x32xf32>
    %121 = arith.addf %119, %120 : vector<2x32xf32>
    %122 = math.tanh %121 : vector<2x32xf32>
    %123 = arith.mulf %118, %122 : vector<2x32xf32>
    %c10 = arith.constant 10 : index
    %c0_38 = arith.constant 0 : index
    %124 = vector.load %arg9[%c10, %c0_38] : memref<32x32xf32, #tpu.memory_space<vmem>>, vector<2x32xf32>
    tpu.vector_store %arg9[%c10, %c0_38], %123 {strides = array<i32>} : memref<32x32xf32, #tpu.memory_space<vmem>>, vector<2x32xf32>,
    %c6_39 = arith.constant 6 : index
    %c0_40 = arith.constant 0 : index
    %c0_41 = arith.constant 0 : index
    %125 = vector.load %arg1[%c6_39, %c0_40, %c0_41] : memref<16x2x128xf32, #tpu.memory_space<vmem>>, vector<1x2x128xf32>
    %126 = vector.shape_cast %125 : vector<1x2x128xf32> to vector<2x128xf32>
    %127 = arith.truncf %123 : vector<2x32xf32> to vector<2x32xbf16>
    %cst_42 = arith.constant dense<0.000000e+00> : vector<2x128xf32>
    %128 = tpu.matmul %127, %0, %cst_42 {dimension_numbers = #tpu.dot_dimension_numbers<[1], [0], [0], [1], [0, 0, 1, 1], [], []>} : vector<2x32xbf16>, vector<32x128xbf16>, vector<2x128xf32> -> vector<2x128xf32>
    %129 = arith.addf %126, %128 : vector<2x128xf32>
    %130 = math.tanh %129 : vector<2x128xf32>
    %131 = arith.mulf %130, %12 : vector<2x128xf32>
    %132 = arith.addf %131, %15 : vector<2x128xf32>
    %133 = vector.extract_strided_slice %132 {offsets = [0, 0], sizes = [2, 32], strides = [1, 1]} : vector<2x128xf32> to vector<2x32xf32>
    %134 = vector.extract_strided_slice %132 {offsets = [0, 32], sizes = [2, 32], strides = [1, 1]} : vector<2x128xf32> to vector<2x32xf32>
    %135 = vector.extract_strided_slice %132 {offsets = [0, 64], sizes = [2, 32], strides = [1, 1]} : vector<2x128xf32> to vector<2x32xf32>
    %136 = vector.extract_strided_slice %132 {offsets = [0, 96], sizes = [2, 32], strides = [1, 1]} : vector<2x128xf32> to vector<2x32xf32>
    %137 = arith.mulf %134, %121 : vector<2x32xf32>
    %138 = arith.mulf %133, %135 : vector<2x32xf32>
    %139 = arith.addf %137, %138 : vector<2x32xf32>
    %140 = math.tanh %139 : vector<2x32xf32>
    %141 = arith.mulf %136, %140 : vector<2x32xf32>
    %c12 = arith.constant 12 : index
    %c0_43 = arith.constant 0 : index
    %142 = vector.load %arg9[%c12, %c0_43] : memref<32x32xf32, #tpu.memory_space<vmem>>, vector<2x32xf32>
    tpu.vector_store %arg9[%c12, %c0_43], %141 {strides = array<i32>} : memref<32x32xf32, #tpu.memory_space<vmem>>, vector<2x32xf32>,
    %c7 = arith.constant 7 : index
    %c0_44 = arith.constant 0 : index
    %c0_45 = arith.constant 0 : index
    %143 = vector.load %arg1[%c7, %c0_44, %c0_45] : memref<16x2x128xf32, #tpu.memory_space<vmem>>, vector<1x2x128xf32>
    %144 = vector.shape_cast %143 : vector<1x2x128xf32> to vector<2x128xf32>
    %145 = arith.truncf %141 : vector<2x32xf32> to vector<2x32xbf16>
    %cst_46 = arith.constant dense<0.000000e+00> : vector<2x128xf32>
    %146 = tpu.matmul %145, %0, %cst_46 {dimension_numbers = #tpu.dot_dimension_numbers<[1], [0], [0], [1], [0, 0, 1, 1], [], []>} : vector<2x32xbf16>, vector<32x128xbf16>, vector<2x128xf32> -> vector<2x128xf32>
    %147 = arith.addf %144, %146 : vector<2x128xf32>
    %148 = math.tanh %147 : vector<2x128xf32>
    %149 = arith.mulf %148, %12 : vector<2x128xf32>
    %150 = arith.addf %149, %15 : vector<2x128xf32>
    %151 = vector.extract_strided_slice %150 {offsets = [0, 0], sizes = [2, 32], strides = [1, 1]} : vector<2x128xf32> to vector<2x32xf32>
    %152 = vector.extract_strided_slice %150 {offsets = [0, 32], sizes = [2, 32], strides = [1, 1]} : vector<2x128xf32> to vector<2x32xf32>
    %153 = vector.extract_strided_slice %150 {offsets = [0, 64], sizes = [2, 32], strides = [1, 1]} : vector<2x128xf32> to vector<2x32xf32>
    %154 = vector.extract_strided_slice %150 {offsets = [0, 96], sizes = [2, 32], strides = [1, 1]} : vector<2x128xf32> to vector<2x32xf32>
    %155 = arith.mulf %152, %139 : vector<2x32xf32>
    %156 = arith.mulf %151, %153 : vector<2x32xf32>
    %157 = arith.addf %155, %156 : vector<2x32xf32>
    %158 = math.tanh %157 : vector<2x32xf32>
    %159 = arith.mulf %154, %158 : vector<2x32xf32>
    %c14 = arith.constant 14 : index
    %c0_47 = arith.constant 0 : index
    %160 = vector.load %arg9[%c14, %c0_47] : memref<32x32xf32, #tpu.memory_space<vmem>>, vector<2x32xf32>
    tpu.vector_store %arg9[%c14, %c0_47], %159 {strides = array<i32>} : memref<32x32xf32, #tpu.memory_space<vmem>>, vector<2x32xf32>,
    %c8_48 = arith.constant 8 : index
    %c0_49 = arith.constant 0 : index
    %c0_50 = arith.constant 0 : index
    %161 = vector.load %arg1[%c8_48, %c0_49, %c0_50] : memref<16x2x128xf32, #tpu.memory_space<vmem>>, vector<1x2x128xf32>
    %162 = vector.shape_cast %161 : vector<1x2x128xf32> to vector<2x128xf32>
    %163 = arith.truncf %159 : vector<2x32xf32> to vector<2x32xbf16>
    %cst_51 = arith.constant dense<0.000000e+00> : vector<2x128xf32>
    %164 = tpu.matmul %163, %0, %cst_51 {dimension_numbers = #tpu.dot_dimension_numbers<[1], [0], [0], [1], [0, 0, 1, 1], [], []>} : vector<2x32xbf16>, vector<32x128xbf16>, vector<2x128xf32> -> vector<2x128xf32>
    %165 = arith.addf %162, %164 : vector<2x128xf32>
    %166 = math.tanh %165 : vector<2x128xf32>
    %167 = arith.mulf %166, %12 : vector<2x128xf32>
    %168 = arith.addf %167, %15 : vector<2x128xf32>
    %169 = vector.extract_strided_slice %168 {offsets = [0, 0], sizes = [2, 32], strides = [1, 1]} : vector<2x128xf32> to vector<2x32xf32>
    %170 = vector.extract_strided_slice %168 {offsets = [0, 32], sizes = [2, 32], strides = [1, 1]} : vector<2x128xf32> to vector<2x32xf32>
    %171 = vector.extract_strided_slice %168 {offsets = [0, 64], sizes = [2, 32], strides = [1, 1]} : vector<2x128xf32> to vector<2x32xf32>
    %172 = vector.extract_strided_slice %168 {offsets = [0, 96], sizes = [2, 32], strides = [1, 1]} : vector<2x128xf32> to vector<2x32xf32>
    %173 = arith.mulf %170, %157 : vector<2x32xf32>
    %174 = arith.mulf %169, %171 : vector<2x32xf32>
    %175 = arith.addf %173, %174 : vector<2x32xf32>
    %176 = math.tanh %175 : vector<2x32xf32>
    %177 = arith.mulf %172, %176 : vector<2x32xf32>
    %c16 = arith.constant 16 : index
    %c0_52 = arith.constant 0 : index
    %178 = vector.load %arg9[%c16, %c0_52] : memref<32x32xf32, #tpu.memory_space<vmem>>, vector<2x32xf32>
    tpu.vector_store %arg9[%c16, %c0_52], %177 {strides = array<i32>} : memref<32x32xf32, #tpu.memory_space<vmem>>, vector<2x32xf32>,
    %c9 = arith.constant 9 : index
    %c0_53 = arith.constant 0 : index
    %c0_54 = arith.constant 0 : index
    %179 = vector.load %arg1[%c9, %c0_53, %c0_54] : memref<16x2x128xf32, #tpu.memory_space<vmem>>, vector<1x2x128xf32>
    %180 = vector.shape_cast %179 : vector<1x2x128xf32> to vector<2x128xf32>
    %181 = arith.truncf %177 : vector<2x32xf32> to vector<2x32xbf16>
    %cst_55 = arith.constant dense<0.000000e+00> : vector<2x128xf32>
    %182 = tpu.matmul %181, %0, %cst_55 {dimension_numbers = #tpu.dot_dimension_numbers<[1], [0], [0], [1], [0, 0, 1, 1], [], []>} : vector<2x32xbf16>, vector<32x128xbf16>, vector<2x128xf32> -> vector<2x128xf32>
    %183 = arith.addf %180, %182 : vector<2x128xf32>
    %184 = math.tanh %183 : vector<2x128xf32>
    %185 = arith.mulf %184, %12 : vector<2x128xf32>
    %186 = arith.addf %185, %15 : vector<2x128xf32>
    %187 = vector.extract_strided_slice %186 {offsets = [0, 0], sizes = [2, 32], strides = [1, 1]} : vector<2x128xf32> to vector<2x32xf32>
    %188 = vector.extract_strided_slice %186 {offsets = [0, 32], sizes = [2, 32], strides = [1, 1]} : vector<2x128xf32> to vector<2x32xf32>
    %189 = vector.extract_strided_slice %186 {offsets = [0, 64], sizes = [2, 32], strides = [1, 1]} : vector<2x128xf32> to vector<2x32xf32>
    %190 = vector.extract_strided_slice %186 {offsets = [0, 96], sizes = [2, 32], strides = [1, 1]} : vector<2x128xf32> to vector<2x32xf32>
    %191 = arith.mulf %188, %175 : vector<2x32xf32>
    %192 = arith.mulf %187, %189 : vector<2x32xf32>
    %193 = arith.addf %191, %192 : vector<2x32xf32>
    %194 = math.tanh %193 : vector<2x32xf32>
    %195 = arith.mulf %190, %194 : vector<2x32xf32>
    %c18 = arith.constant 18 : index
    %c0_56 = arith.constant 0 : index
    %196 = vector.load %arg9[%c18, %c0_56] : memref<32x32xf32, #tpu.memory_space<vmem>>, vector<2x32xf32>
    tpu.vector_store %arg9[%c18, %c0_56], %195 {strides = array<i32>} : memref<32x32xf32, #tpu.memory_space<vmem>>, vector<2x32xf32>,
    %c10_57 = arith.constant 10 : index
    %c0_58 = arith.constant 0 : index
    %c0_59 = arith.constant 0 : index
    %197 = vector.load %arg1[%c10_57, %c0_58, %c0_59] : memref<16x2x128xf32, #tpu.memory_space<vmem>>, vector<1x2x128xf32>
    %198 = vector.shape_cast %197 : vector<1x2x128xf32> to vector<2x128xf32>
    %199 = arith.truncf %195 : vector<2x32xf32> to vector<2x32xbf16>
    %cst_60 = arith.constant dense<0.000000e+00> : vector<2x128xf32>
    %200 = tpu.matmul %199, %0, %cst_60 {dimension_numbers = #tpu.dot_dimension_numbers<[1], [0], [0], [1], [0, 0, 1, 1], [], []>} : vector<2x32xbf16>, vector<32x128xbf16>, vector<2x128xf32> -> vector<2x128xf32>
    %201 = arith.addf %198, %200 : vector<2x128xf32>
    %202 = math.tanh %201 : vector<2x128xf32>
    %203 = arith.mulf %202, %12 : vector<2x128xf32>
    %204 = arith.addf %203, %15 : vector<2x128xf32>
    %205 = vector.extract_strided_slice %204 {offsets = [0, 0], sizes = [2, 32], strides = [1, 1]} : vector<2x128xf32> to vector<2x32xf32>
    %206 = vector.extract_strided_slice %204 {offsets = [0, 32], sizes = [2, 32], strides = [1, 1]} : vector<2x128xf32> to vector<2x32xf32>
    %207 = vector.extract_strided_slice %204 {offsets = [0, 64], sizes = [2, 32], strides = [1, 1]} : vector<2x128xf32> to vector<2x32xf32>
    %208 = vector.extract_strided_slice %204 {offsets = [0, 96], sizes = [2, 32], strides = [1, 1]} : vector<2x128xf32> to vector<2x32xf32>
    %209 = arith.mulf %206, %193 : vector<2x32xf32>
    %210 = arith.mulf %205, %207 : vector<2x32xf32>
    %211 = arith.addf %209, %210 : vector<2x32xf32>
    %212 = math.tanh %211 : vector<2x32xf32>
    %213 = arith.mulf %208, %212 : vector<2x32xf32>
    %c20 = arith.constant 20 : index
    %c0_61 = arith.constant 0 : index
    %214 = vector.load %arg9[%c20, %c0_61] : memref<32x32xf32, #tpu.memory_space<vmem>>, vector<2x32xf32>
    tpu.vector_store %arg9[%c20, %c0_61], %213 {strides = array<i32>} : memref<32x32xf32, #tpu.memory_space<vmem>>, vector<2x32xf32>,
    %c11 = arith.constant 11 : index
    %c0_62 = arith.constant 0 : index
    %c0_63 = arith.constant 0 : index
    %215 = vector.load %arg1[%c11, %c0_62, %c0_63] : memref<16x2x128xf32, #tpu.memory_space<vmem>>, vector<1x2x128xf32>
    %216 = vector.shape_cast %215 : vector<1x2x128xf32> to vector<2x128xf32>
    %217 = arith.truncf %213 : vector<2x32xf32> to vector<2x32xbf16>
    %cst_64 = arith.constant dense<0.000000e+00> : vector<2x128xf32>
    %218 = tpu.matmul %217, %0, %cst_64 {dimension_numbers = #tpu.dot_dimension_numbers<[1], [0], [0], [1], [0, 0, 1, 1], [], []>} : vector<2x32xbf16>, vector<32x128xbf16>, vector<2x128xf32> -> vector<2x128xf32>
    %219 = arith.addf %216, %218 : vector<2x128xf32>
    %220 = math.tanh %219 : vector<2x128xf32>
    %221 = arith.mulf %220, %12 : vector<2x128xf32>
    %222 = arith.addf %221, %15 : vector<2x128xf32>
    %223 = vector.extract_strided_slice %222 {offsets = [0, 0], sizes = [2, 32], strides = [1, 1]} : vector<2x128xf32> to vector<2x32xf32>
    %224 = vector.extract_strided_slice %222 {offsets = [0, 32], sizes = [2, 32], strides = [1, 1]} : vector<2x128xf32> to vector<2x32xf32>
    %225 = vector.extract_strided_slice %222 {offsets = [0, 64], sizes = [2, 32], strides = [1, 1]} : vector<2x128xf32> to vector<2x32xf32>
    %226 = vector.extract_strided_slice %222 {offsets = [0, 96], sizes = [2, 32], strides = [1, 1]} : vector<2x128xf32> to vector<2x32xf32>
    %227 = arith.mulf %224, %211 : vector<2x32xf32>
    %228 = arith.mulf %223, %225 : vector<2x32xf32>
    %229 = arith.addf %227, %228 : vector<2x32xf32>
    %230 = math.tanh %229 : vector<2x32xf32>
    %231 = arith.mulf %226, %230 : vector<2x32xf32>
    %c22 = arith.constant 22 : index
    %c0_65 = arith.constant 0 : index
    %232 = vector.load %arg9[%c22, %c0_65] : memref<32x32xf32, #tpu.memory_space<vmem>>, vector<2x32xf32>
    tpu.vector_store %arg9[%c22, %c0_65], %231 {strides = array<i32>} : memref<32x32xf32, #tpu.memory_space<vmem>>, vector<2x32xf32>,
    %c12_66 = arith.constant 12 : index
    %c0_67 = arith.constant 0 : index
    %c0_68 = arith.constant 0 : index
    %233 = vector.load %arg1[%c12_66, %c0_67, %c0_68] : memref<16x2x128xf32, #tpu.memory_space<vmem>>, vector<1x2x128xf32>
    %234 = vector.shape_cast %233 : vector<1x2x128xf32> to vector<2x128xf32>
    %235 = arith.truncf %231 : vector<2x32xf32> to vector<2x32xbf16>
    %cst_69 = arith.constant dense<0.000000e+00> : vector<2x128xf32>
    %236 = tpu.matmul %235, %0, %cst_69 {dimension_numbers = #tpu.dot_dimension_numbers<[1], [0], [0], [1], [0, 0, 1, 1], [], []>} : vector<2x32xbf16>, vector<32x128xbf16>, vector<2x128xf32> -> vector<2x128xf32>
    %237 = arith.addf %234, %236 : vector<2x128xf32>
    %238 = math.tanh %237 : vector<2x128xf32>
    %239 = arith.mulf %238, %12 : vector<2x128xf32>
    %240 = arith.addf %239, %15 : vector<2x128xf32>
    %241 = vector.extract_strided_slice %240 {offsets = [0, 0], sizes = [2, 32], strides = [1, 1]} : vector<2x128xf32> to vector<2x32xf32>
    %242 = vector.extract_strided_slice %240 {offsets = [0, 32], sizes = [2, 32], strides = [1, 1]} : vector<2x128xf32> to vector<2x32xf32>
    %243 = vector.extract_strided_slice %240 {offsets = [0, 64], sizes = [2, 32], strides = [1, 1]} : vector<2x128xf32> to vector<2x32xf32>
    %244 = vector.extract_strided_slice %240 {offsets = [0, 96], sizes = [2, 32], strides = [1, 1]} : vector<2x128xf32> to vector<2x32xf32>
    %245 = arith.mulf %242, %229 : vector<2x32xf32>
    %246 = arith.mulf %241, %243 : vector<2x32xf32>
    %247 = arith.addf %245, %246 : vector<2x32xf32>
    %248 = math.tanh %247 : vector<2x32xf32>
    %249 = arith.mulf %244, %248 : vector<2x32xf32>
    %c24 = arith.constant 24 : index
    %c0_70 = arith.constant 0 : index
    %250 = vector.load %arg9[%c24, %c0_70] : memref<32x32xf32, #tpu.memory_space<vmem>>, vector<2x32xf32>
    tpu.vector_store %arg9[%c24, %c0_70], %249 {strides = array<i32>} : memref<32x32xf32, #tpu.memory_space<vmem>>, vector<2x32xf32>,
    %c13 = arith.constant 13 : index
    %c0_71 = arith.constant 0 : index
    %c0_72 = arith.constant 0 : index
    %251 = vector.load %arg1[%c13, %c0_71, %c0_72] : memref<16x2x128xf32, #tpu.memory_space<vmem>>, vector<1x2x128xf32>
    %252 = vector.shape_cast %251 : vector<1x2x128xf32> to vector<2x128xf32>
    %253 = arith.truncf %249 : vector<2x32xf32> to vector<2x32xbf16>
    %cst_73 = arith.constant dense<0.000000e+00> : vector<2x128xf32>
    %254 = tpu.matmul %253, %0, %cst_73 {dimension_numbers = #tpu.dot_dimension_numbers<[1], [0], [0], [1], [0, 0, 1, 1], [], []>} : vector<2x32xbf16>, vector<32x128xbf16>, vector<2x128xf32> -> vector<2x128xf32>
    %255 = arith.addf %252, %254 : vector<2x128xf32>
    %256 = math.tanh %255 : vector<2x128xf32>
    %257 = arith.mulf %256, %12 : vector<2x128xf32>
    %258 = arith.addf %257, %15 : vector<2x128xf32>
    %259 = vector.extract_strided_slice %258 {offsets = [0, 0], sizes = [2, 32], strides = [1, 1]} : vector<2x128xf32> to vector<2x32xf32>
    %260 = vector.extract_strided_slice %258 {offsets = [0, 32], sizes = [2, 32], strides = [1, 1]} : vector<2x128xf32> to vector<2x32xf32>
    %261 = vector.extract_strided_slice %258 {offsets = [0, 64], sizes = [2, 32], strides = [1, 1]} : vector<2x128xf32> to vector<2x32xf32>
    %262 = vector.extract_strided_slice %258 {offsets = [0, 96], sizes = [2, 32], strides = [1, 1]} : vector<2x128xf32> to vector<2x32xf32>
    %263 = arith.mulf %260, %247 : vector<2x32xf32>
    %264 = arith.mulf %259, %261 : vector<2x32xf32>
    %265 = arith.addf %263, %264 : vector<2x32xf32>
    %266 = math.tanh %265 : vector<2x32xf32>
    %267 = arith.mulf %262, %266 : vector<2x32xf32>
    %c26 = arith.constant 26 : index
    %c0_74 = arith.constant 0 : index
    %268 = vector.load %arg9[%c26, %c0_74] : memref<32x32xf32, #tpu.memory_space<vmem>>, vector<2x32xf32>
    tpu.vector_store %arg9[%c26, %c0_74], %267 {strides = array<i32>} : memref<32x32xf32, #tpu.memory_space<vmem>>, vector<2x32xf32>,
    %c14_75 = arith.constant 14 : index
    %c0_76 = arith.constant 0 : index
    %c0_77 = arith.constant 0 : index
    %269 = vector.load %arg1[%c14_75, %c0_76, %c0_77] : memref<16x2x128xf32, #tpu.memory_space<vmem>>, vector<1x2x128xf32>
    %270 = vector.shape_cast %269 : vector<1x2x128xf32> to vector<2x128xf32>
    %271 = arith.truncf %267 : vector<2x32xf32> to vector<2x32xbf16>
    %cst_78 = arith.constant dense<0.000000e+00> : vector<2x128xf32>
    %272 = tpu.matmul %271, %0, %cst_78 {dimension_numbers = #tpu.dot_dimension_numbers<[1], [0], [0], [1], [0, 0, 1, 1], [], []>} : vector<2x32xbf16>, vector<32x128xbf16>, vector<2x128xf32> -> vector<2x128xf32>
    %273 = arith.addf %270, %272 : vector<2x128xf32>
    %274 = math.tanh %273 : vector<2x128xf32>
    %275 = arith.mulf %274, %12 : vector<2x128xf32>
    %276 = arith.addf %275, %15 : vector<2x128xf32>
    %277 = vector.extract_strided_slice %276 {offsets = [0, 0], sizes = [2, 32], strides = [1, 1]} : vector<2x128xf32> to vector<2x32xf32>
    %278 = vector.extract_strided_slice %276 {offsets = [0, 32], sizes = [2, 32], strides = [1, 1]} : vector<2x128xf32> to vector<2x32xf32>
    %279 = vector.extract_strided_slice %276 {offsets = [0, 64], sizes = [2, 32], strides = [1, 1]} : vector<2x128xf32> to vector<2x32xf32>
    %280 = vector.extract_strided_slice %276 {offsets = [0, 96], sizes = [2, 32], strides = [1, 1]} : vector<2x128xf32> to vector<2x32xf32>
    %281 = arith.mulf %278, %265 : vector<2x32xf32>
    %282 = arith.mulf %277, %279 : vector<2x32xf32>
    %283 = arith.addf %281, %282 : vector<2x32xf32>
    %284 = math.tanh %283 : vector<2x32xf32>
    %285 = arith.mulf %280, %284 : vector<2x32xf32>
    %c28 = arith.constant 28 : index
    %c0_79 = arith.constant 0 : index
    %286 = vector.load %arg9[%c28, %c0_79] : memref<32x32xf32, #tpu.memory_space<vmem>>, vector<2x32xf32>
    tpu.vector_store %arg9[%c28, %c0_79], %285 {strides = array<i32>} : memref<32x32xf32, #tpu.memory_space<vmem>>, vector<2x32xf32>,
    %c15 = arith.constant 15 : index
    %c0_80 = arith.constant 0 : index
    %c0_81 = arith.constant 0 : index
    %287 = vector.load %arg1[%c15, %c0_80, %c0_81] : memref<16x2x128xf32, #tpu.memory_space<vmem>>, vector<1x2x128xf32>
    %288 = vector.shape_cast %287 : vector<1x2x128xf32> to vector<2x128xf32>
    %289 = arith.truncf %285 : vector<2x32xf32> to vector<2x32xbf16>
    %cst_82 = arith.constant dense<0.000000e+00> : vector<2x128xf32>
    %290 = tpu.matmul %289, %0, %cst_82 {dimension_numbers = #tpu.dot_dimension_numbers<[1], [0], [0], [1], [0, 0, 1, 1], [], []>} : vector<2x32xbf16>, vector<32x128xbf16>, vector<2x128xf32> -> vector<2x128xf32>
    %291 = arith.addf %288, %290 : vector<2x128xf32>
    %292 = math.tanh %291 : vector<2x128xf32>
    %293 = arith.mulf %292, %12 : vector<2x128xf32>
    %294 = arith.addf %293, %15 : vector<2x128xf32>
    %295 = vector.extract_strided_slice %294 {offsets = [0, 0], sizes = [2, 32], strides = [1, 1]} : vector<2x128xf32> to vector<2x32xf32>
    %296 = vector.extract_strided_slice %294 {offsets = [0, 32], sizes = [2, 32], strides = [1, 1]} : vector<2x128xf32> to vector<2x32xf32>
    %297 = vector.extract_strided_slice %294 {offsets = [0, 64], sizes = [2, 32], strides = [1, 1]} : vector<2x128xf32> to vector<2x32xf32>
    %298 = vector.extract_strided_slice %294 {offsets = [0, 96], sizes = [2, 32], strides = [1, 1]} : vector<2x128xf32> to vector<2x32xf32>
    %299 = arith.mulf %296, %283 : vector<2x32xf32>
    %300 = arith.mulf %295, %297 : vector<2x32xf32>
    %301 = arith.addf %299, %300 : vector<2x32xf32>
    %302 = math.tanh %301 : vector<2x32xf32>
    %303 = arith.mulf %298, %302 : vector<2x32xf32>
    %c30 = arith.constant 30 : index
    %c0_83 = arith.constant 0 : index
    %304 = vector.load %arg9[%c30, %c0_83] : memref<32x32xf32, #tpu.memory_space<vmem>>, vector<2x32xf32>
    tpu.vector_store %arg9[%c30, %c0_83], %303 {strides = array<i32>} : memref<32x32xf32, #tpu.memory_space<vmem>>, vector<2x32xf32>,
    %c0_84 = arith.constant 0 : index
    %c0_85 = arith.constant 0 : index
    %305 = vector.load %arg9[%c0_84, %c0_85] : memref<32x32xf32, #tpu.memory_space<vmem>>, vector<32x32xf32>
    %306 = arith.truncf %305 : vector<32x32xf32> to vector<32x32xbf16>
    %cst_86 = arith.constant dense<0.000000e+00> : vector<32x128xf32>
    %307 = tpu.matmul %306, %1, %cst_86 {dimension_numbers = #tpu.dot_dimension_numbers<[1], [0], [0], [1], [0, 0, 1, 1], [], []>} : vector<32x32xbf16>, vector<32x128xbf16>, vector<32x128xf32> -> vector<32x128xf32>
    %308 = vector.broadcast %3 : vector<1x128xf32> to vector<32x128xf32>
    %309 = arith.addf %307, %308 : vector<32x128xf32>
    %310 = vector.extract_strided_slice %309 {offsets = [0, 0], sizes = [2, 128], strides = [1, 1]} : vector<32x128xf32> to vector<2x128xf32>
    %311 = arith.truncf %16 : vector<2x32xf32> to vector<2x32xbf16>
    %cst_87 = arith.constant dense<0.000000e+00> : vector<2x128xf32>
    %312 = tpu.matmul %311, %2, %cst_87 {dimension_numbers = #tpu.dot_dimension_numbers<[1], [0], [0], [1], [0, 0, 1, 1], [], []>} : vector<2x32xbf16>, vector<32x128xbf16>, vector<2x128xf32> -> vector<2x128xf32>
    %313 = arith.addf %310, %312 : vector<2x128xf32>
    %314 = math.tanh %313 : vector<2x128xf32>
    %315 = arith.mulf %314, %12 : vector<2x128xf32>
    %316 = arith.addf %315, %15 : vector<2x128xf32>
    %317 = vector.extract_strided_slice %316 {offsets = [0, 0], sizes = [2, 32], strides = [1, 1]} : vector<2x128xf32> to vector<2x32xf32>
    %318 = vector.extract_strided_slice %316 {offsets = [0, 32], sizes = [2, 32], strides = [1, 1]} : vector<2x128xf32> to vector<2x32xf32>
    %319 = vector.extract_strided_slice %316 {offsets = [0, 64], sizes = [2, 32], strides = [1, 1]} : vector<2x128xf32> to vector<2x32xf32>
    %320 = vector.extract_strided_slice %316 {offsets = [0, 96], sizes = [2, 32], strides = [1, 1]} : vector<2x128xf32> to vector<2x32xf32>
    %321 = arith.mulf %318, %16 : vector<2x32xf32>
    %322 = arith.mulf %317, %319 : vector<2x32xf32>
    %323 = arith.addf %321, %322 : vector<2x32xf32>
    %324 = math.tanh %323 : vector<2x32xf32>
    %325 = arith.mulf %320, %324 : vector<2x32xf32>
    %326 = vector.extract_strided_slice %309 {offsets = [2, 0], sizes = [2, 128], strides = [1, 1]} : vector<32x128xf32> to vector<2x128xf32>
    %327 = arith.truncf %325 : vector<2x32xf32> to vector<2x32xbf16>
    %cst_88 = arith.constant dense<0.000000e+00> : vector<2x128xf32>
    %328 = tpu.matmul %327, %2, %cst_88 {dimension_numbers = #tpu.dot_dimension_numbers<[1], [0], [0], [1], [0, 0, 1, 1], [], []>} : vector<2x32xbf16>, vector<32x128xbf16>, vector<2x128xf32> -> vector<2x128xf32>
    %329 = arith.addf %326, %328 : vector<2x128xf32>
    %330 = math.tanh %329 : vector<2x128xf32>
    %331 = arith.mulf %330, %12 : vector<2x128xf32>
    %332 = arith.addf %331, %15 : vector<2x128xf32>
    %333 = vector.extract_strided_slice %332 {offsets = [0, 0], sizes = [2, 32], strides = [1, 1]} : vector<2x128xf32> to vector<2x32xf32>
    %334 = vector.extract_strided_slice %332 {offsets = [0, 32], sizes = [2, 32], strides = [1, 1]} : vector<2x128xf32> to vector<2x32xf32>
    %335 = vector.extract_strided_slice %332 {offsets = [0, 64], sizes = [2, 32], strides = [1, 1]} : vector<2x128xf32> to vector<2x32xf32>
    %336 = vector.extract_strided_slice %332 {offsets = [0, 96], sizes = [2, 32], strides = [1, 1]} : vector<2x128xf32> to vector<2x32xf32>
    %337 = arith.mulf %334, %323 : vector<2x32xf32>
    %338 = arith.mulf %333, %335 : vector<2x32xf32>
    %339 = arith.addf %337, %338 : vector<2x32xf32>
    %340 = math.tanh %339 : vector<2x32xf32>
    %341 = arith.mulf %336, %340 : vector<2x32xf32>
    %342 = vector.extract_strided_slice %309 {offsets = [4, 0], sizes = [2, 128], strides = [1, 1]} : vector<32x128xf32> to vector<2x128xf32>
    %343 = arith.truncf %341 : vector<2x32xf32> to vector<2x32xbf16>
    %cst_89 = arith.constant dense<0.000000e+00> : vector<2x128xf32>
    %344 = tpu.matmul %343, %2, %cst_89 {dimension_numbers = #tpu.dot_dimension_numbers<[1], [0], [0], [1], [0, 0, 1, 1], [], []>} : vector<2x32xbf16>, vector<32x128xbf16>, vector<2x128xf32> -> vector<2x128xf32>
    %345 = arith.addf %342, %344 : vector<2x128xf32>
    %346 = math.tanh %345 : vector<2x128xf32>
    %347 = arith.mulf %346, %12 : vector<2x128xf32>
    %348 = arith.addf %347, %15 : vector<2x128xf32>
    %349 = vector.extract_strided_slice %348 {offsets = [0, 0], sizes = [2, 32], strides = [1, 1]} : vector<2x128xf32> to vector<2x32xf32>
    %350 = vector.extract_strided_slice %348 {offsets = [0, 32], sizes = [2, 32], strides = [1, 1]} : vector<2x128xf32> to vector<2x32xf32>
    %351 = vector.extract_strided_slice %348 {offsets = [0, 64], sizes = [2, 32], strides = [1, 1]} : vector<2x128xf32> to vector<2x32xf32>
    %352 = vector.extract_strided_slice %348 {offsets = [0, 96], sizes = [2, 32], strides = [1, 1]} : vector<2x128xf32> to vector<2x32xf32>
    %353 = arith.mulf %350, %339 : vector<2x32xf32>
    %354 = arith.mulf %349, %351 : vector<2x32xf32>
    %355 = arith.addf %353, %354 : vector<2x32xf32>
    %356 = math.tanh %355 : vector<2x32xf32>
    %357 = arith.mulf %352, %356 : vector<2x32xf32>
    %358 = vector.extract_strided_slice %309 {offsets = [6, 0], sizes = [2, 128], strides = [1, 1]} : vector<32x128xf32> to vector<2x128xf32>
    %359 = arith.truncf %357 : vector<2x32xf32> to vector<2x32xbf16>
    %cst_90 = arith.constant dense<0.000000e+00> : vector<2x128xf32>
    %360 = tpu.matmul %359, %2, %cst_90 {dimension_numbers = #tpu.dot_dimension_numbers<[1], [0], [0], [1], [0, 0, 1, 1], [], []>} : vector<2x32xbf16>, vector<32x128xbf16>, vector<2x128xf32> -> vector<2x128xf32>
    %361 = arith.addf %358, %360 : vector<2x128xf32>
    %362 = math.tanh %361 : vector<2x128xf32>
    %363 = arith.mulf %362, %12 : vector<2x128xf32>
    %364 = arith.addf %363, %15 : vector<2x128xf32>
    %365 = vector.extract_strided_slice %364 {offsets = [0, 0], sizes = [2, 32], strides = [1, 1]} : vector<2x128xf32> to vector<2x32xf32>
    %366 = vector.extract_strided_slice %364 {offsets = [0, 32], sizes = [2, 32], strides = [1, 1]} : vector<2x128xf32> to vector<2x32xf32>
    %367 = vector.extract_strided_slice %364 {offsets = [0, 64], sizes = [2, 32], strides = [1, 1]} : vector<2x128xf32> to vector<2x32xf32>
    %368 = vector.extract_strided_slice %364 {offsets = [0, 96], sizes = [2, 32], strides = [1, 1]} : vector<2x128xf32> to vector<2x32xf32>
    %369 = arith.mulf %366, %355 : vector<2x32xf32>
    %370 = arith.mulf %365, %367 : vector<2x32xf32>
    %371 = arith.addf %369, %370 : vector<2x32xf32>
    %372 = math.tanh %371 : vector<2x32xf32>
    %373 = arith.mulf %368, %372 : vector<2x32xf32>
    %374 = vector.extract_strided_slice %309 {offsets = [8, 0], sizes = [2, 128], strides = [1, 1]} : vector<32x128xf32> to vector<2x128xf32>
    %375 = arith.truncf %373 : vector<2x32xf32> to vector<2x32xbf16>
    %cst_91 = arith.constant dense<0.000000e+00> : vector<2x128xf32>
    %376 = tpu.matmul %375, %2, %cst_91 {dimension_numbers = #tpu.dot_dimension_numbers<[1], [0], [0], [1], [0, 0, 1, 1], [], []>} : vector<2x32xbf16>, vector<32x128xbf16>, vector<2x128xf32> -> vector<2x128xf32>
    %377 = arith.addf %374, %376 : vector<2x128xf32>
    %378 = math.tanh %377 : vector<2x128xf32>
    %379 = arith.mulf %378, %12 : vector<2x128xf32>
    %380 = arith.addf %379, %15 : vector<2x128xf32>
    %381 = vector.extract_strided_slice %380 {offsets = [0, 0], sizes = [2, 32], strides = [1, 1]} : vector<2x128xf32> to vector<2x32xf32>
    %382 = vector.extract_strided_slice %380 {offsets = [0, 32], sizes = [2, 32], strides = [1, 1]} : vector<2x128xf32> to vector<2x32xf32>
    %383 = vector.extract_strided_slice %380 {offsets = [0, 64], sizes = [2, 32], strides = [1, 1]} : vector<2x128xf32> to vector<2x32xf32>
    %384 = vector.extract_strided_slice %380 {offsets = [0, 96], sizes = [2, 32], strides = [1, 1]} : vector<2x128xf32> to vector<2x32xf32>
    %385 = arith.mulf %382, %371 : vector<2x32xf32>
    %386 = arith.mulf %381, %383 : vector<2x32xf32>
    %387 = arith.addf %385, %386 : vector<2x32xf32>
    %388 = math.tanh %387 : vector<2x32xf32>
    %389 = arith.mulf %384, %388 : vector<2x32xf32>
    %390 = vector.extract_strided_slice %309 {offsets = [10, 0], sizes = [2, 128], strides = [1, 1]} : vector<32x128xf32> to vector<2x128xf32>
    %391 = arith.truncf %389 : vector<2x32xf32> to vector<2x32xbf16>
    %cst_92 = arith.constant dense<0.000000e+00> : vector<2x128xf32>
    %392 = tpu.matmul %391, %2, %cst_92 {dimension_numbers = #tpu.dot_dimension_numbers<[1], [0], [0], [1], [0, 0, 1, 1], [], []>} : vector<2x32xbf16>, vector<32x128xbf16>, vector<2x128xf32> -> vector<2x128xf32>
    %393 = arith.addf %390, %392 : vector<2x128xf32>
    %394 = math.tanh %393 : vector<2x128xf32>
    %395 = arith.mulf %394, %12 : vector<2x128xf32>
    %396 = arith.addf %395, %15 : vector<2x128xf32>
    %397 = vector.extract_strided_slice %396 {offsets = [0, 0], sizes = [2, 32], strides = [1, 1]} : vector<2x128xf32> to vector<2x32xf32>
    %398 = vector.extract_strided_slice %396 {offsets = [0, 32], sizes = [2, 32], strides = [1, 1]} : vector<2x128xf32> to vector<2x32xf32>
    %399 = vector.extract_strided_slice %396 {offsets = [0, 64], sizes = [2, 32], strides = [1, 1]} : vector<2x128xf32> to vector<2x32xf32>
    %400 = vector.extract_strided_slice %396 {offsets = [0, 96], sizes = [2, 32], strides = [1, 1]} : vector<2x128xf32> to vector<2x32xf32>
    %401 = arith.mulf %398, %387 : vector<2x32xf32>
    %402 = arith.mulf %397, %399 : vector<2x32xf32>
    %403 = arith.addf %401, %402 : vector<2x32xf32>
    %404 = math.tanh %403 : vector<2x32xf32>
    %405 = arith.mulf %400, %404 : vector<2x32xf32>
    %406 = vector.extract_strided_slice %309 {offsets = [12, 0], sizes = [2, 128], strides = [1, 1]} : vector<32x128xf32> to vector<2x128xf32>
    %407 = arith.truncf %405 : vector<2x32xf32> to vector<2x32xbf16>
    %cst_93 = arith.constant dense<0.000000e+00> : vector<2x128xf32>
    %408 = tpu.matmul %407, %2, %cst_93 {dimension_numbers = #tpu.dot_dimension_numbers<[1], [0], [0], [1], [0, 0, 1, 1], [], []>} : vector<2x32xbf16>, vector<32x128xbf16>, vector<2x128xf32> -> vector<2x128xf32>
    %409 = arith.addf %406, %408 : vector<2x128xf32>
    %410 = math.tanh %409 : vector<2x128xf32>
    %411 = arith.mulf %410, %12 : vector<2x128xf32>
    %412 = arith.addf %411, %15 : vector<2x128xf32>
    %413 = vector.extract_strided_slice %412 {offsets = [0, 0], sizes = [2, 32], strides = [1, 1]} : vector<2x128xf32> to vector<2x32xf32>
    %414 = vector.extract_strided_slice %412 {offsets = [0, 32], sizes = [2, 32], strides = [1, 1]} : vector<2x128xf32> to vector<2x32xf32>
    %415 = vector.extract_strided_slice %412 {offsets = [0, 64], sizes = [2, 32], strides = [1, 1]} : vector<2x128xf32> to vector<2x32xf32>
    %416 = vector.extract_strided_slice %412 {offsets = [0, 96], sizes = [2, 32], strides = [1, 1]} : vector<2x128xf32> to vector<2x32xf32>
    %417 = arith.mulf %414, %403 : vector<2x32xf32>
    %418 = arith.mulf %413, %415 : vector<2x32xf32>
    %419 = arith.addf %417, %418 : vector<2x32xf32>
    %420 = math.tanh %419 : vector<2x32xf32>
    %421 = arith.mulf %416, %420 : vector<2x32xf32>
    %422 = vector.extract_strided_slice %309 {offsets = [14, 0], sizes = [2, 128], strides = [1, 1]} : vector<32x128xf32> to vector<2x128xf32>
    %423 = arith.truncf %421 : vector<2x32xf32> to vector<2x32xbf16>
    %cst_94 = arith.constant dense<0.000000e+00> : vector<2x128xf32>
    %424 = tpu.matmul %423, %2, %cst_94 {dimension_numbers = #tpu.dot_dimension_numbers<[1], [0], [0], [1], [0, 0, 1, 1], [], []>} : vector<2x32xbf16>, vector<32x128xbf16>, vector<2x128xf32> -> vector<2x128xf32>
    %425 = arith.addf %422, %424 : vector<2x128xf32>
    %426 = math.tanh %425 : vector<2x128xf32>
    %427 = arith.mulf %426, %12 : vector<2x128xf32>
    %428 = arith.addf %427, %15 : vector<2x128xf32>
    %429 = vector.extract_strided_slice %428 {offsets = [0, 0], sizes = [2, 32], strides = [1, 1]} : vector<2x128xf32> to vector<2x32xf32>
    %430 = vector.extract_strided_slice %428 {offsets = [0, 32], sizes = [2, 32], strides = [1, 1]} : vector<2x128xf32> to vector<2x32xf32>
    %431 = vector.extract_strided_slice %428 {offsets = [0, 64], sizes = [2, 32], strides = [1, 1]} : vector<2x128xf32> to vector<2x32xf32>
    %432 = vector.extract_strided_slice %428 {offsets = [0, 96], sizes = [2, 32], strides = [1, 1]} : vector<2x128xf32> to vector<2x32xf32>
    %433 = arith.mulf %430, %419 : vector<2x32xf32>
    %434 = arith.mulf %429, %431 : vector<2x32xf32>
    %435 = arith.addf %433, %434 : vector<2x32xf32>
    %436 = math.tanh %435 : vector<2x32xf32>
    %437 = arith.mulf %432, %436 : vector<2x32xf32>
    %438 = vector.extract_strided_slice %309 {offsets = [16, 0], sizes = [2, 128], strides = [1, 1]} : vector<32x128xf32> to vector<2x128xf32>
    %439 = arith.truncf %437 : vector<2x32xf32> to vector<2x32xbf16>
    %cst_95 = arith.constant dense<0.000000e+00> : vector<2x128xf32>
    %440 = tpu.matmul %439, %2, %cst_95 {dimension_numbers = #tpu.dot_dimension_numbers<[1], [0], [0], [1], [0, 0, 1, 1], [], []>} : vector<2x32xbf16>, vector<32x128xbf16>, vector<2x128xf32> -> vector<2x128xf32>
    %441 = arith.addf %438, %440 : vector<2x128xf32>
    %442 = math.tanh %441 : vector<2x128xf32>
    %443 = arith.mulf %442, %12 : vector<2x128xf32>
    %444 = arith.addf %443, %15 : vector<2x128xf32>
    %445 = vector.extract_strided_slice %444 {offsets = [0, 0], sizes = [2, 32], strides = [1, 1]} : vector<2x128xf32> to vector<2x32xf32>
    %446 = vector.extract_strided_slice %444 {offsets = [0, 32], sizes = [2, 32], strides = [1, 1]} : vector<2x128xf32> to vector<2x32xf32>
    %447 = vector.extract_strided_slice %444 {offsets = [0, 64], sizes = [2, 32], strides = [1, 1]} : vector<2x128xf32> to vector<2x32xf32>
    %448 = vector.extract_strided_slice %444 {offsets = [0, 96], sizes = [2, 32], strides = [1, 1]} : vector<2x128xf32> to vector<2x32xf32>
    %449 = arith.mulf %446, %435 : vector<2x32xf32>
    %450 = arith.mulf %445, %447 : vector<2x32xf32>
    %451 = arith.addf %449, %450 : vector<2x32xf32>
    %452 = math.tanh %451 : vector<2x32xf32>
    %453 = arith.mulf %448, %452 : vector<2x32xf32>
    %454 = vector.extract_strided_slice %309 {offsets = [18, 0], sizes = [2, 128], strides = [1, 1]} : vector<32x128xf32> to vector<2x128xf32>
    %455 = arith.truncf %453 : vector<2x32xf32> to vector<2x32xbf16>
    %cst_96 = arith.constant dense<0.000000e+00> : vector<2x128xf32>
    %456 = tpu.matmul %455, %2, %cst_96 {dimension_numbers = #tpu.dot_dimension_numbers<[1], [0], [0], [1], [0, 0, 1, 1], [], []>} : vector<2x32xbf16>, vector<32x128xbf16>, vector<2x128xf32> -> vector<2x128xf32>
    %457 = arith.addf %454, %456 : vector<2x128xf32>
    %458 = math.tanh %457 : vector<2x128xf32>
    %459 = arith.mulf %458, %12 : vector<2x128xf32>
    %460 = arith.addf %459, %15 : vector<2x128xf32>
    %461 = vector.extract_strided_slice %460 {offsets = [0, 0], sizes = [2, 32], strides = [1, 1]} : vector<2x128xf32> to vector<2x32xf32>
    %462 = vector.extract_strided_slice %460 {offsets = [0, 32], sizes = [2, 32], strides = [1, 1]} : vector<2x128xf32> to vector<2x32xf32>
    %463 = vector.extract_strided_slice %460 {offsets = [0, 64], sizes = [2, 32], strides = [1, 1]} : vector<2x128xf32> to vector<2x32xf32>
    %464 = vector.extract_strided_slice %460 {offsets = [0, 96], sizes = [2, 32], strides = [1, 1]} : vector<2x128xf32> to vector<2x32xf32>
    %465 = arith.mulf %462, %451 : vector<2x32xf32>
    %466 = arith.mulf %461, %463 : vector<2x32xf32>
    %467 = arith.addf %465, %466 : vector<2x32xf32>
    %468 = math.tanh %467 : vector<2x32xf32>
    %469 = arith.mulf %464, %468 : vector<2x32xf32>
    %470 = vector.extract_strided_slice %309 {offsets = [20, 0], sizes = [2, 128], strides = [1, 1]} : vector<32x128xf32> to vector<2x128xf32>
    %471 = arith.truncf %469 : vector<2x32xf32> to vector<2x32xbf16>
    %cst_97 = arith.constant dense<0.000000e+00> : vector<2x128xf32>
    %472 = tpu.matmul %471, %2, %cst_97 {dimension_numbers = #tpu.dot_dimension_numbers<[1], [0], [0], [1], [0, 0, 1, 1], [], []>} : vector<2x32xbf16>, vector<32x128xbf16>, vector<2x128xf32> -> vector<2x128xf32>
    %473 = arith.addf %470, %472 : vector<2x128xf32>
    %474 = math.tanh %473 : vector<2x128xf32>
    %475 = arith.mulf %474, %12 : vector<2x128xf32>
    %476 = arith.addf %475, %15 : vector<2x128xf32>
    %477 = vector.extract_strided_slice %476 {offsets = [0, 0], sizes = [2, 32], strides = [1, 1]} : vector<2x128xf32> to vector<2x32xf32>
    %478 = vector.extract_strided_slice %476 {offsets = [0, 32], sizes = [2, 32], strides = [1, 1]} : vector<2x128xf32> to vector<2x32xf32>
    %479 = vector.extract_strided_slice %476 {offsets = [0, 64], sizes = [2, 32], strides = [1, 1]} : vector<2x128xf32> to vector<2x32xf32>
    %480 = vector.extract_strided_slice %476 {offsets = [0, 96], sizes = [2, 32], strides = [1, 1]} : vector<2x128xf32> to vector<2x32xf32>
    %481 = arith.mulf %478, %467 : vector<2x32xf32>
    %482 = arith.mulf %477, %479 : vector<2x32xf32>
    %483 = arith.addf %481, %482 : vector<2x32xf32>
    %484 = math.tanh %483 : vector<2x32xf32>
    %485 = arith.mulf %480, %484 : vector<2x32xf32>
    %486 = vector.extract_strided_slice %309 {offsets = [22, 0], sizes = [2, 128], strides = [1, 1]} : vector<32x128xf32> to vector<2x128xf32>
    %487 = arith.truncf %485 : vector<2x32xf32> to vector<2x32xbf16>
    %cst_98 = arith.constant dense<0.000000e+00> : vector<2x128xf32>
    %488 = tpu.matmul %487, %2, %cst_98 {dimension_numbers = #tpu.dot_dimension_numbers<[1], [0], [0], [1], [0, 0, 1, 1], [], []>} : vector<2x32xbf16>, vector<32x128xbf16>, vector<2x128xf32> -> vector<2x128xf32>
    %489 = arith.addf %486, %488 : vector<2x128xf32>
    %490 = math.tanh %489 : vector<2x128xf32>
    %491 = arith.mulf %490, %12 : vector<2x128xf32>
    %492 = arith.addf %491, %15 : vector<2x128xf32>
    %493 = vector.extract_strided_slice %492 {offsets = [0, 0], sizes = [2, 32], strides = [1, 1]} : vector<2x128xf32> to vector<2x32xf32>
    %494 = vector.extract_strided_slice %492 {offsets = [0, 32], sizes = [2, 32], strides = [1, 1]} : vector<2x128xf32> to vector<2x32xf32>
    %495 = vector.extract_strided_slice %492 {offsets = [0, 64], sizes = [2, 32], strides = [1, 1]} : vector<2x128xf32> to vector<2x32xf32>
    %496 = vector.extract_strided_slice %492 {offsets = [0, 96], sizes = [2, 32], strides = [1, 1]} : vector<2x128xf32> to vector<2x32xf32>
    %497 = arith.mulf %494, %483 : vector<2x32xf32>
    %498 = arith.mulf %493, %495 : vector<2x32xf32>
    %499 = arith.addf %497, %498 : vector<2x32xf32>
    %500 = math.tanh %499 : vector<2x32xf32>
    %501 = arith.mulf %496, %500 : vector<2x32xf32>
    %502 = vector.extract_strided_slice %309 {offsets = [24, 0], sizes = [2, 128], strides = [1, 1]} : vector<32x128xf32> to vector<2x128xf32>
    %503 = arith.truncf %501 : vector<2x32xf32> to vector<2x32xbf16>
    %cst_99 = arith.constant dense<0.000000e+00> : vector<2x128xf32>
    %504 = tpu.matmul %503, %2, %cst_99 {dimension_numbers = #tpu.dot_dimension_numbers<[1], [0], [0], [1], [0, 0, 1, 1], [], []>} : vector<2x32xbf16>, vector<32x128xbf16>, vector<2x128xf32> -> vector<2x128xf32>
    %505 = arith.addf %502, %504 : vector<2x128xf32>
    %506 = math.tanh %505 : vector<2x128xf32>
    %507 = arith.mulf %506, %12 : vector<2x128xf32>
    %508 = arith.addf %507, %15 : vector<2x128xf32>
    %509 = vector.extract_strided_slice %508 {offsets = [0, 0], sizes = [2, 32], strides = [1, 1]} : vector<2x128xf32> to vector<2x32xf32>
    %510 = vector.extract_strided_slice %508 {offsets = [0, 32], sizes = [2, 32], strides = [1, 1]} : vector<2x128xf32> to vector<2x32xf32>
    %511 = vector.extract_strided_slice %508 {offsets = [0, 64], sizes = [2, 32], strides = [1, 1]} : vector<2x128xf32> to vector<2x32xf32>
    %512 = vector.extract_strided_slice %508 {offsets = [0, 96], sizes = [2, 32], strides = [1, 1]} : vector<2x128xf32> to vector<2x32xf32>
    %513 = arith.mulf %510, %499 : vector<2x32xf32>
    %514 = arith.mulf %509, %511 : vector<2x32xf32>
    %515 = arith.addf %513, %514 : vector<2x32xf32>
    %516 = math.tanh %515 : vector<2x32xf32>
    %517 = arith.mulf %512, %516 : vector<2x32xf32>
    %518 = vector.extract_strided_slice %309 {offsets = [26, 0], sizes = [2, 128], strides = [1, 1]} : vector<32x128xf32> to vector<2x128xf32>
    %519 = arith.truncf %517 : vector<2x32xf32> to vector<2x32xbf16>
    %cst_100 = arith.constant dense<0.000000e+00> : vector<2x128xf32>
    %520 = tpu.matmul %519, %2, %cst_100 {dimension_numbers = #tpu.dot_dimension_numbers<[1], [0], [0], [1], [0, 0, 1, 1], [], []>} : vector<2x32xbf16>, vector<32x128xbf16>, vector<2x128xf32> -> vector<2x128xf32>
    %521 = arith.addf %518, %520 : vector<2x128xf32>
    %522 = math.tanh %521 : vector<2x128xf32>
    %523 = arith.mulf %522, %12 : vector<2x128xf32>
    %524 = arith.addf %523, %15 : vector<2x128xf32>
    %525 = vector.extract_strided_slice %524 {offsets = [0, 0], sizes = [2, 32], strides = [1, 1]} : vector<2x128xf32> to vector<2x32xf32>
    %526 = vector.extract_strided_slice %524 {offsets = [0, 32], sizes = [2, 32], strides = [1, 1]} : vector<2x128xf32> to vector<2x32xf32>
    %527 = vector.extract_strided_slice %524 {offsets = [0, 64], sizes = [2, 32], strides = [1, 1]} : vector<2x128xf32> to vector<2x32xf32>
    %528 = vector.extract_strided_slice %524 {offsets = [0, 96], sizes = [2, 32], strides = [1, 1]} : vector<2x128xf32> to vector<2x32xf32>
    %529 = arith.mulf %526, %515 : vector<2x32xf32>
    %530 = arith.mulf %525, %527 : vector<2x32xf32>
    %531 = arith.addf %529, %530 : vector<2x32xf32>
    %532 = math.tanh %531 : vector<2x32xf32>
    %533 = arith.mulf %528, %532 : vector<2x32xf32>
    %534 = vector.extract_strided_slice %309 {offsets = [28, 0], sizes = [2, 128], strides = [1, 1]} : vector<32x128xf32> to vector<2x128xf32>
    %535 = arith.truncf %533 : vector<2x32xf32> to vector<2x32xbf16>
    %cst_101 = arith.constant dense<0.000000e+00> : vector<2x128xf32>
    %536 = tpu.matmul %535, %2, %cst_101 {dimension_numbers = #tpu.dot_dimension_numbers<[1], [0], [0], [1], [0, 0, 1, 1], [], []>} : vector<2x32xbf16>, vector<32x128xbf16>, vector<2x128xf32> -> vector<2x128xf32>
    %537 = arith.addf %534, %536 : vector<2x128xf32>
    %538 = math.tanh %537 : vector<2x128xf32>
    %539 = arith.mulf %538, %12 : vector<2x128xf32>
    %540 = arith.addf %539, %15 : vector<2x128xf32>
    %541 = vector.extract_strided_slice %540 {offsets = [0, 0], sizes = [2, 32], strides = [1, 1]} : vector<2x128xf32> to vector<2x32xf32>
    %542 = vector.extract_strided_slice %540 {offsets = [0, 32], sizes = [2, 32], strides = [1, 1]} : vector<2x128xf32> to vector<2x32xf32>
    %543 = vector.extract_strided_slice %540 {offsets = [0, 64], sizes = [2, 32], strides = [1, 1]} : vector<2x128xf32> to vector<2x32xf32>
    %544 = vector.extract_strided_slice %540 {offsets = [0, 96], sizes = [2, 32], strides = [1, 1]} : vector<2x128xf32> to vector<2x32xf32>
    %545 = arith.mulf %542, %531 : vector<2x32xf32>
    %546 = arith.mulf %541, %543 : vector<2x32xf32>
    %547 = arith.addf %545, %546 : vector<2x32xf32>
    %548 = math.tanh %547 : vector<2x32xf32>
    %549 = arith.mulf %544, %548 : vector<2x32xf32>
    %550 = vector.extract_strided_slice %309 {offsets = [30, 0], sizes = [2, 128], strides = [1, 1]} : vector<32x128xf32> to vector<2x128xf32>
    %551 = arith.truncf %549 : vector<2x32xf32> to vector<2x32xbf16>
    %cst_102 = arith.constant dense<0.000000e+00> : vector<2x128xf32>
    %552 = tpu.matmul %551, %2, %cst_102 {dimension_numbers = #tpu.dot_dimension_numbers<[1], [0], [0], [1], [0, 0, 1, 1], [], []>} : vector<2x32xbf16>, vector<32x128xbf16>, vector<2x128xf32> -> vector<2x128xf32>
    %553 = arith.addf %550, %552 : vector<2x128xf32>
    %554 = math.tanh %553 : vector<2x128xf32>
    %555 = arith.mulf %554, %12 : vector<2x128xf32>
    %556 = arith.addf %555, %15 : vector<2x128xf32>
    %557 = vector.extract_strided_slice %556 {offsets = [0, 0], sizes = [2, 32], strides = [1, 1]} : vector<2x128xf32> to vector<2x32xf32>
    %558 = vector.extract_strided_slice %556 {offsets = [0, 32], sizes = [2, 32], strides = [1, 1]} : vector<2x128xf32> to vector<2x32xf32>
    %559 = vector.extract_strided_slice %556 {offsets = [0, 64], sizes = [2, 32], strides = [1, 1]} : vector<2x128xf32> to vector<2x32xf32>
    %560 = vector.extract_strided_slice %556 {offsets = [0, 96], sizes = [2, 32], strides = [1, 1]} : vector<2x128xf32> to vector<2x32xf32>
    %561 = arith.mulf %558, %547 : vector<2x32xf32>
    %562 = arith.mulf %557, %559 : vector<2x32xf32>
    %563 = arith.addf %561, %562 : vector<2x32xf32>
    %564 = math.tanh %563 : vector<2x32xf32>
    %565 = arith.mulf %560, %564 : vector<2x32xf32>
    %c0_103 = arith.constant 0 : index
    %c0_104 = arith.constant 0 : index
    %566 = vector.load %arg6[%c0_103, %c0_104] : memref<1x32xf32, #tpu.memory_space<vmem>>, vector<1x32xf32>
    %567 = vector.broadcast %566 : vector<1x32xf32> to vector<2x32xf32>
    %568 = arith.mulf %565, %567 : vector<2x32xf32>
    %cst_105 = arith.constant dense<0.000000e+00> : vector<2xf32>
    %569 = vector.multi_reduction <add>, %568, %cst_105 [1] : vector<2x32xf32> to vector<2xf32>
    %570 = vector.shape_cast %569 : vector<2xf32> to vector<2x1xf32>
    %c0_106 = arith.constant 0 : index
    %c0_107 = arith.constant 0 : index
    %571 = vector.load %arg7[%c0_106, %c0_107] : memref<1x1xf32, #tpu.memory_space<vmem>>, vector<1x1xf32>
    %572 = vector.broadcast %571 : vector<1x1xf32> to vector<2x1xf32>
    %573 = arith.addf %570, %572 : vector<2x1xf32>
    %cst_108 = arith.constant dense<0xFF800000> : vector<2xf32>
    %574 = vector.multi_reduction <maximumf>, %573, %cst_108 [1] : vector<2x1xf32> to vector<2xf32>
    %575 = vector.shape_cast %574 : vector<2xf32> to vector<2x1xf32>
    %576 = arith.subf %573, %575 : vector<2x1xf32>
    %577 = math.exp %576 : vector<2x1xf32>
    %cst_109 = arith.constant dense<0.000000e+00> : vector<2xf32>
    %578 = vector.multi_reduction <add>, %577, %cst_109 [1] : vector<2x1xf32> to vector<2xf32>
    %579 = vector.shape_cast %578 : vector<2xf32> to vector<2x1xf32>
    %580 = tpu.reciprocal %579 {approx = true} : vector<2x1xf32> -> vector<2x1xf32>
    %581 = arith.mulf %577, %580 : vector<2x1xf32>
    %c0_110 = arith.constant 0 : index
    %c0_111 = arith.constant 0 : index
    %582 = vector.load %arg8[%c0_110, %c0_111] : memref<2x1xf32, #tpu.memory_space<vmem>>, vector<2x1xf32>
    tpu.vector_store %arg8[%c0_110, %c0_111], %581 {strides = array<i32>} : memref<2x1xf32, #tpu.memory_space<vmem>>, vector<2x1xf32>,
    return
  }
  func.func @transform_0(%arg0: i32) -> (i32, i32, i32) {
    %c0_i32 = arith.constant 0 : i32
    %c0_i32_0 = arith.constant 0 : i32
    %c0_i32_1 = arith.constant 0 : i32
    return %c0_i32, %arg0, %c0_i32_0 : i32, i32, i32
  }
  func.func @transform_1(%arg0: i32) -> (i32, i32) {
    %c0_i32 = arith.constant 0 : i32
    %c0_i32_0 = arith.constant 0 : i32
    %c0_i32_1 = arith.constant 0 : i32
    return %c0_i32, %c0_i32_0 : i32, i32
  }
  func.func @transform_2(%arg0: i32) -> (i32, i32) {
    %c0_i32 = arith.constant 0 : i32
    %c0_i32_0 = arith.constant 0 : i32
    %c0_i32_1 = arith.constant 0 : i32
    return %c0_i32, %c0_i32_0 : i32, i32
  }
  func.func @transform_3(%arg0: i32) -> (i32, i32) {
    %c0_i32 = arith.constant 0 : i32
    %c0_i32_0 = arith.constant 0 : i32
    %c0_i32_1 = arith.constant 0 : i32
    return %c0_i32, %c0_i32_0 : i32, i32
  }
  func.func @transform_4(%arg0: i32) -> (i32, i32) {
    %c0_i32 = arith.constant 0 : i32
    %c0_i32_0 = arith.constant 0 : i32
    %c0_i32_1 = arith.constant 0 : i32
    return %c0_i32, %c0_i32_0 : i32, i32
  }
  func.func @transform_5(%arg0: i32) -> (i32, i32) {
    %c0_i32 = arith.constant 0 : i32
    %c0_i32_0 = arith.constant 0 : i32
    %c0_i32_1 = arith.constant 0 : i32
    return %c0_i32, %c0_i32_0 : i32, i32
  }
  func.func @transform_6(%arg0: i32) -> (i32, i32) {
    %c0_i32 = arith.constant 0 : i32
    %c0_i32_0 = arith.constant 0 : i32
    %c0_i32_1 = arith.constant 0 : i32
    return %c0_i32, %c0_i32_0 : i32, i32
  }
  func.func @transform_7(%arg0: i32) -> (i32, i32) {
    %c0_i32 = arith.constant 0 : i32
    %c0_i32_0 = arith.constant 0 : i32
    return %arg0, %c0_i32 : i32, i32
  }
}

</mosaic_0001>

<llo_original>
// kernel: lstm_classifier_forward.1
$region0: #{lstm_classifier_forward.1}
  #allocation0 [shape = 'u32[]', space=smem, size = 0x4, offset = 0x4, fixed_abs, tag = 'smem constant byte address 0x4 - core index']
  #allocation1 [shape = 'u32[144,128]{1,0:T(1,128)}', space=vmem, size = 0x12000, scoped, tag = 'internal scratch']
  #allocation2 [shape = 'f32[32,32]{1,0:T(8,128)}', space=vmem, size = 0x4000, scoped, tag = 'scratch operand']
  #allocation3 [shape = 'f32[1,1]{1,0:T(1,128)S(1)}', space=vmem, size = 0x200, scoped, tag = 'scoped memory for lstm_classifier_forward.1']
  %s0 = inlined_call_operand.vmem [shape: f32[16,2,128], index: 0, kind: input, shape index: {}]
  %s1 = inlined_call_operand.vmem [shape: bf16[32,128], index: 1, kind: input, shape index: {}]
  %s2 = inlined_call_operand.vmem [shape: bf16[32,128], index: 2, kind: input, shape index: {}]
  %s3 = inlined_call_operand.vmem [shape: bf16[32,128], index: 3, kind: input, shape index: {}]
  %s4 = inlined_call_operand.vmem [shape: f32[1,128], index: 4, kind: input, shape index: {}]
  %s5 = inlined_call_operand.vmem [shape: f32[1,32], index: 5, kind: input, shape index: {}]
  %s6 = inlined_call_operand.<no memory space> [shape: f32[1,1], index: 6, kind: input, shape index: {}]
  %s7 = inlined_call_operand.vmem [shape: f32[2,1], index: 7, kind: output, shape index: {}]
  %s8 = sld [smem:[#allocation0]]
  $region38: #{lstm_classifier_forward.1} parent=0
    _
  %s10 = ssub.s32 1, %s8
  %s11 = scalar_select 0, %s10, %s8
  %v12 = vstv %s6
  %13 = vst [vmem:[#allocation3] sm:$0x1] %v12
  // Predicated region
  $region2: #{lstm_classifier_forward.1} parent=0 // pred_check
    _
  $region3: #{lstm_classifier_forward.1} parent=0 // pred_check_branch
    %15 = sbr.rel (0) target = $region5
  $region4: #{lstm_classifier_forward.1} parent=0 // pred_region
    _
  $region5: #{lstm_classifier_forward.1} parent=0 // pred_fallthru
    _
  // Predicated region
  $region6: #{lstm_classifier_forward.1} parent=0 // pred_check
    _
  $region7: #{lstm_classifier_forward.1} parent=0 // pred_check_branch
    %17 = sbr.rel (0) target = $region9
  $region8: #{lstm_classifier_forward.1} parent=0 // pred_region
    _
  $region9: #{lstm_classifier_forward.1} parent=0 // pred_fallthru
    _
  // Predicated region
  $region10: #{lstm_classifier_forward.1} parent=0 // pred_check
    _
  $region11: #{lstm_classifier_forward.1} parent=0 // pred_check_branch
    %19 = sbr.rel (0) target = $region13
  $region12: #{lstm_classifier_forward.1} parent=0 // pred_region
    _
  $region13: #{lstm_classifier_forward.1} parent=0 // pred_fallthru
    _
  // Predicated region
  $region14: #{lstm_classifier_forward.1} parent=0 // pred_check
    _
  $region15: #{lstm_classifier_forward.1} parent=0 // pred_check_branch
    %21 = sbr.rel (0) target = $region17
  $region16: #{lstm_classifier_forward.1} parent=0 // pred_region
    _
  $region17: #{lstm_classifier_forward.1} parent=0 // pred_fallthru
    _
  // Predicated region
  $region18: #{lstm_classifier_forward.1} parent=0 // pred_check
    _
  $region19: #{lstm_classifier_forward.1} parent=0 // pred_check_branch
    %23 = sbr.rel (0) target = $region21
  $region20: #{lstm_classifier_forward.1} parent=0 // pred_region
    _
  $region21: #{lstm_classifier_forward.1} parent=0 // pred_fallthru
    _
  // Predicated region
  $region22: #{lstm_classifier_forward.1} parent=0 // pred_check
    _
  $region23: #{lstm_classifier_forward.1} parent=0 // pred_check_branch
    %25 = sbr.rel (0) target = $region25
  $region24: #{lstm_classifier_forward.1} parent=0 // pred_region
    _
  $region25: #{lstm_classifier_forward.1} parent=0 // pred_fallthru
    _
  // Predicated region
  $region26: #{lstm_classifier_forward.1} parent=0 // pred_check
    _
  $region27: #{lstm_classifier_forward.1} parent=0 // pred_check_branch
    %27 = sbr.rel (0) target = $region29
  $region28: #{lstm_classifier_forward.1} parent=0 // pred_region
    _
  $region29: #{lstm_classifier_forward.1} parent=0 // pred_fallthru
    _
  %v29 = vld [vmem:[%s1] sm:$0xf]
  %v30 = vld [vmem:[%s1 + $0x4] sm:$0xf]
  %v31 = vld [vmem:[%s1 + $0x8] sm:$0xf]
  %v32 = vld [vmem:[%s1 + $0xc] sm:$0xf]
  %v33 = vld [vmem:[%s2] sm:$0xf]
  %v34 = vld [vmem:[%s2 + $0x4] sm:$0xf]
  %v35 = vld [vmem:[%s2 + $0x8] sm:$0xf]
  %v36 = vld [vmem:[%s2 + $0xc] sm:$0xf]
  %v37 = vld [vmem:[%s3] sm:$0xf]
  %v38 = vld [vmem:[%s3 + $0x4] sm:$0xf]
  %v39 = vld [vmem:[%s3 + $0x8] sm:$0xf]
  %v40 = vld [vmem:[%s3 + $0xc] sm:$0xf]
  %v41 = vld [vmem:[%s4] sm:$0x1]
  %v42 = vlaneseq
  %v43 = vand.u32 %v42, 127
  %vm44 = vcmp.ge.s32.totalorder %v43, 64
  %vm45 = vcmp.lt.s32.totalorder %v43, 96
  %vm46 = vmand %vm44, %vm45
  %v47 = vsel %vm46, 1.0, 0.5
  %v48 = vsel %vm46, 0.0, 0.5
  %v49 = vld [vmem:[%s0] sm:$0x3]
  %v54 = vunpack.c.l.b16 %v29
  %v55 = vunpack.c.l.b16 %v30
  %v56 = vunpack.c.l.b16 %v31
  %v57 = vunpack.c.l.b16 %v32
  %v58 = vpack.c.b16 %v55, %v54
  %v59 = vpack.c.b16 %v57, %v56
  %vm62 = vcmask 261120
  %v64 = vsel %vm62, 0, 0
  %66 = vmatprep.subr.bf16.mxu0 0
  %67 = vmatpush1.bf16.msra.mxu0 0
  %68 = vmatprep.subr.bf16.mxu0 0
  %69 = vmatpush1.bf16.msra.mxu0 0
  %70 = vmatprep.subr.bf16.mxu0 0
  %71 = vmatpush1.bf16.msra.mxu0 0
  %72 = vmatprep.subr.bf16.mxu0 0
  %73 = vmatpush1.bf16.msra.mxu0 0
  %74 = vmatprep.subr.bf16.mxu0 0
  %75 = vmatpush1.bf16.msra.mxu0 0
  %76 = vmatprep.subr.bf16.mxu0 0
  %77 = vmatpush1.bf16.msra.mxu0 0
  %78 = vmatprep.subr.bf16.mxu0 0
  %79 = vmatpush1.bf16.msra.mxu0 %v59
  %80 = vmatprep.subr.bf16.mxu0 0
  %81 = vmatpush1.bf16.msra.mxu0 %v58
  %82 = vmatprep.subr.bf16.mxu0 0
  %83 = vmatpush2.bf16.msra.mxu0 0
  %84 = vmatprep.subr.bf16.mxu0 0
  %85 = vmatpush2.bf16.msra.mxu0 0
  %86 = vmatprep.subr.bf16.mxu0 0
  %87 = vmatpush2.bf16.msra.mxu0 0
  %88 = vmatprep.subr.bf16.mxu0 0
  %89 = vmatpush2.bf16.msra.mxu0 0
  %90 = vmatprep.subr.bf16.mxu0 0
  %91 = vmatpush2.bf16.msra.mxu0 0
  %92 = vmatprep.subr.bf16.mxu0 0
  %93 = vmatpush2.bf16.msra.mxu0 0
  %94 = vmatprep.subr.bf16.mxu0 0
  %95 = vmatpush2.bf16.msra.mxu0 0
  %96 = vmatprep.subr.bf16.mxu0 0
  %97 = vmatpush2.bf16.msra.mxu0 0
  %98 = vmatprep.mubr.bf16.mxu0 0
  %99 = vmatmul.mubr.bf16.gmra.mxu0 %v64
  %v100 = vpop.f32.mrf.mxu0
  %v101 = vadd.f32 0.0, %v100
  %v102 = vpop.f32.mrf.mxu0
  %v103 = vpop.f32.mrf.mxu0
  %v104 = vpop.f32.mrf.mxu0
  %105 = vdwg.mxu0
  %v106 = vadd.f32 %v49, %v101
  %v107 = vtanh.pop %v106
  %v108 = vmul.f32 %v107, %v47
  %v109 = vadd.f32 %v108, %v48
  %v110 = vmul.f32 %v109, 0.0
  %112 = vrot.lane.b32.xlu0 %v109, 64
  %v113 = vpop.permute.xlu0 %112
  %v115 = vmul.f32 %v109, %v113
  %117 = vrot.lane.b32.xlu0 %v115, 32
  %v118 = vpop.permute.xlu0 %117
  %v120 = vadd.f32 %v110, %v118
  %v121 = vtanh.pop %v120
  %123 = vrot.lane.b32.xlu0 %v121, 64
  %v124 = vpop.permute.xlu0 %123
  %v126 = vmul.f32 %v109, %v124
  %128 = vrot.lane.b32.xlu0 %v126, 32
  %v129 = vpop.permute.xlu0 %128
  %vm131 = vcmask 254976
  %132 = vst.msk [vmem:[#allocation2] sm:$0x3] %vm131, %v129
  %s133 = scalar_lea.vmem %s0, 2
  %v134 = vld [vmem:[%s133] sm:$0x3]
  %v135 = vpack.c.bf16 %v126, %v126
  %137 = vrot.lane.b32.xlu0 %v135, 32
  %v138 = vpop.permute.xlu0 %137
  %v140 = vsel %vm62, %v138, 0
  %142 = vmatprep.subr.bf16.mxu0 0
  %143 = vmatpush1.bf16.msra.mxu0 0
  %144 = vmatprep.subr.bf16.mxu0 0
  %145 = vmatpush1.bf16.msra.mxu0 0
  %146 = vmatprep.subr.bf16.mxu0 0
  %147 = vmatpush1.bf16.msra.mxu0 0
  %148 = vmatprep.subr.bf16.mxu0 0
  %149 = vmatpush1.bf16.msra.mxu0 0
  %150 = vmatprep.subr.bf16.mxu0 0
  %151 = vmatpush1.bf16.msra.mxu0 0
  %152 = vmatprep.subr.bf16.mxu0 0
  %153 = vmatpush1.bf16.msra.mxu0 0
  %154 = vmatprep.subr.bf16.mxu0 0
  %155 = vmatpush1.bf16.msra.mxu0 %v59
  %156 = vmatprep.subr.bf16.mxu0 0
  %157 = vmatpush1.bf16.msra.mxu0 %v58
  %158 = vmatprep.subr.bf16.mxu0 0
  %159 = vmatpush2.bf16.msra.mxu0 0
  %160 = vmatprep.subr.bf16.mxu0 0
  %161 = vmatpush2.bf16.msra.mxu0 0
  %162 = vmatprep.subr.bf16.mxu0 0
  %163 = vmatpush2.bf16.msra.mxu0 0
  %164 = vmatprep.subr.bf16.mxu0 0
  %165 = vmatpush2.bf16.msra.mxu0 0
  %166 = vmatprep.subr.bf16.mxu0 0
  %167 = vmatpush2.bf16.msra.mxu0 0
  %168 = vmatprep.subr.bf16.mxu0 0
  %169 = vmatpush2.bf16.msra.mxu0 0
  %170 = vmatprep.subr.bf16.mxu0 0
  %171 = vmatpush2.bf16.msra.mxu0 0
  %172 = vmatprep.subr.bf16.mxu0 0
  %173 = vmatpush2.bf16.msra.mxu0 0
  %174 = vmatprep.mubr.bf16.mxu0 0
  %175 = vmatmul.mubr.bf16.gmra.mxu0 %v140
  %v176 = vpop.f32.mrf.mxu0
  %v177 = vadd.f32 0.0, %v176
  %v178 = vpop.f32.mrf.mxu0
  %v179 = vpop.f32.mrf.mxu0
  %v180 = vpop.f32.mrf.mxu0
  %181 = vdwg.mxu0
  %v182 = vadd.f32 %v134, %v177
  %v183 = vtanh.pop %v182
  %v184 = vmul.f32 %v183, %v47
  %v185 = vadd.f32 %v184, %v48
  %v186 = vmul.f32 %v185, %v120
  %188 = vrot.lane.b32.xlu0 %v185, 64
  %v189 = vpop.permute.xlu0 %188
  %v191 = vmul.f32 %v185, %v189
  %193 = vrot.lane.b32.xlu0 %v191, 32
  %v194 = vpop.permute.xlu0 %193
  %v196 = vadd.f32 %v186, %v194
  %v197 = vtanh.pop %v196
  %199 = vrot.lane.b32.xlu0 %v197, 64
  %v200 = vpop.permute.xlu0 %199
  %v202 = vmul.f32 %v185, %v200
  %204 = vrot.lane.b32.xlu0 %v202, 32
  %v205 = vpop.permute.xlu0 %204
  %207 = vst.msk [vmem:[#allocation2 + $0x2] sm:$0x3] %vm131, %v205
  %s208 = scalar_lea.vmem %s0, 4
  %v209 = vld [vmem:[%s208] sm:$0x3]
  %v210 = vpack.c.bf16 %v202, %v202
  %212 = vrot.lane.b32.xlu0 %v210, 32
  %v213 = vpop.permute.xlu0 %212
  %v215 = vsel %vm62, %v213, 0
  %217 = vmatprep.subr.bf16.mxu0 0
  %218 = vmatpush1.bf16.msra.mxu0 0
  %219 = vmatprep.subr.bf16.mxu0 0
  %220 = vmatpush1.bf16.msra.mxu0 0
  %221 = vmatprep.subr.bf16.mxu0 0
  %222 = vmatpush1.bf16.msra.mxu0 0
  %223 = vmatprep.subr.bf16.mxu0 0
  %224 = vmatpush1.bf16.msra.mxu0 0
  %225 = vmatprep.subr.bf16.mxu0 0
  %226 = vmatpush1.bf16.msra.mxu0 0
  %227 = vmatprep.subr.bf16.mxu0 0
  %228 = vmatpush1.bf16.msra.mxu0 0
  %229 = vmatprep.subr.bf16.mxu0 0
  %230 = vmatpush1.bf16.msra.mxu0 %v59
  %231 = vmatprep.subr.bf16.mxu0 0
  %232 = vmatpush1.bf16.msra.mxu0 %v58
  %233 = vmatprep.subr.bf16.mxu0 0
  %234 = vmatpush2.bf16.msra.mxu0 0
  %235 = vmatprep.subr.bf16.mxu0 0
  %236 = vmatpush2.bf16.msra.mxu0 0
  %237 = vmatprep.subr.bf16.mxu0 0
  %238 = vmatpush2.bf16.msra.mxu0 0
  %239 = vmatprep.subr.bf16.mxu0 0
  %240 = vmatpush2.bf16.msra.mxu0 0
  %241 = vmatprep.subr.bf16.mxu0 0
  %242 = vmatpush2.bf16.msra.mxu0 0
  %243 = vmatprep.subr.bf16.mxu0 0
  %244 = vmatpush2.bf16.msra.mxu0 0
  %245 = vmatprep.subr.bf16.mxu0 0
  %246 = vmatpush2.bf16.msra.mxu0 0
  %247 = vmatprep.subr.bf16.mxu0 0
  %248 = vmatpush2.bf16.msra.mxu0 0
  %249 = vmatprep.mubr.bf16.mxu0 0
  %250 = vmatmul.mubr.bf16.gmra.mxu0 %v215
  %v251 = vpop.f32.mrf.mxu0
  %v252 = vadd.f32 0.0, %v251
  %v253 = vpop.f32.mrf.mxu0
  %v254 = vpop.f32.mrf.mxu0
  %v255 = vpop.f32.mrf.mxu0
  %256 = vdwg.mxu0
  %v257 = vadd.f32 %v209, %v252
  %v258 = vtanh.pop %v257
  %v259 = vmul.f32 %v258, %v47
  %v260 = vadd.f32 %v259, %v48
  %v261 = vmul.f32 %v260, %v196
  %263 = vrot.lane.b32.xlu0 %v260, 64
  %v264 = vpop.permute.xlu0 %263
  %v266 = vmul.f32 %v260, %v264
  %268 = vrot.lane.b32.xlu0 %v266, 32
  %v269 = vpop.permute.xlu0 %268
  %v271 = vadd.f32 %v261, %v269
  %v272 = vtanh.pop %v271
  %274 = vrot.lane.b32.xlu0 %v272, 64
  %v275 = vpop.permute.xlu0 %274
  %v277 = vmul.f32 %v260, %v275
  %279 = vrot.lane.b32.xlu0 %v277, 32
  %v280 = vpop.permute.xlu0 %279
  %282 = vst.msk [vmem:[#allocation2 + $0x4] sm:$0x3] %vm131, %v280
  %s283 = scalar_lea.vmem %s0, 6
  %v284 = vld [vmem:[%s283] sm:$0x3]
  %v285 = vpack.c.bf16 %v277, %v277
  %287 = vrot.lane.b32.xlu0 %v285, 32
  %v288 = vpop.permute.xlu0 %287
  %v290 = vsel %vm62, %v288, 0
  %292 = vmatprep.subr.bf16.mxu0 0
  %293 = vmatpush1.bf16.msra.mxu0 0
  %294 = vmatprep.subr.bf16.mxu0 0
  %295 = vmatpush1.bf16.msra.mxu0 0
  %296 = vmatprep.subr.bf16.mxu0 0
  %297 = vmatpush1.bf16.msra.mxu0 0
  %298 = vmatprep.subr.bf16.mxu0 0
  %299 = vmatpush1.bf16.msra.mxu0 0
  %300 = vmatprep.subr.bf16.mxu0 0
  %301 = vmatpush1.bf16.msra.mxu0 0
  %302 = vmatprep.subr.bf16.mxu0 0
  %303 = vmatpush1.bf16.msra.mxu0 0
  %304 = vmatprep.subr.bf16.mxu0 0
  %305 = vmatpush1.bf16.msra.mxu0 %v59
  %306 = vmatprep.subr.bf16.mxu0 0
  %307 = vmatpush1.bf16.msra.mxu0 %v58
  %308 = vmatprep.subr.bf16.mxu0 0
  %309 = vmatpush2.bf16.msra.mxu0 0
  %310 = vmatprep.subr.bf16.mxu0 0
  %311 = vmatpush2.bf16.msra.mxu0 0
  %312 = vmatprep.subr.bf16.mxu0 0
  %313 = vmatpush2.bf16.msra.mxu0 0
  %314 = vmatprep.subr.bf16.mxu0 0
  %315 = vmatpush2.bf16.msra.mxu0 0
  %316 = vmatprep.subr.bf16.mxu0 0
  %317 = vmatpush2.bf16.msra.mxu0 0
  %318 = vmatprep.subr.bf16.mxu0 0
  %319 = vmatpush2.bf16.msra.mxu0 0
  %320 = vmatprep.subr.bf16.mxu0 0
  %321 = vmatpush2.bf16.msra.mxu0 0
  %322 = vmatprep.subr.bf16.mxu0 0
  %323 = vmatpush2.bf16.msra.mxu0 0
  %324 = vmatprep.mubr.bf16.mxu0 0
  %325 = vmatmul.mubr.bf16.gmra.mxu0 %v290
  %v326 = vpop.f32.mrf.mxu0
  %v327 = vadd.f32 0.0, %v326
  %v328 = vpop.f32.mrf.mxu0
  %v329 = vpop.f32.mrf.mxu0
  %v330 = vpop.f32.mrf.mxu0
  %331 = vdwg.mxu0
  %v332 = vadd.f32 %v284, %v327
  %v333 = vtanh.pop %v332
  %v334 = vmul.f32 %v333, %v47
  %v335 = vadd.f32 %v334, %v48
  %v336 = vmul.f32 %v335, %v271
  %338 = vrot.lane.b32.xlu0 %v335, 64
  %v339 = vpop.permute.xlu0 %338
  %v341 = vmul.f32 %v335, %v339
  %343 = vrot.lane.b32.xlu0 %v341, 32
  %v344 = vpop.permute.xlu0 %343
  %v346 = vadd.f32 %v336, %v344
  %v347 = vtanh.pop %v346
  %349 = vrot.lane.b32.xlu0 %v347, 64
  %v350 = vpop.permute.xlu0 %349
  %v352 = vmul.f32 %v335, %v350
  %354 = vrot.lane.b32.xlu0 %v352, 32
  %v355 = vpop.permute.xlu0 %354
  %357 = vst.msk [vmem:[#allocation2 + $0x6] sm:$0x3] %vm131, %v355
  %s358 = scalar_lea.vmem %s0, 8
  %v359 = vld [vmem:[%s358] sm:$0x3]
  %v360 = vpack.c.bf16 %v352, %v352
  %362 = vrot.lane.b32.xlu0 %v360, 32
  %v363 = vpop.permute.xlu0 %362
  %v365 = vsel %vm62, %v363, 0
  %367 = vmatprep.subr.bf16.mxu0 0
  %368 = vmatpush1.bf16.msra.mxu0 0
  %369 = vmatprep.subr.bf16.mxu0 0
  %370 = vmatpush1.bf16.msra.mxu0 0
  %371 = vmatprep.subr.bf16.mxu0 0
  %372 = vmatpush1.bf16.msra.mxu0 0
  %373 = vmatprep.subr.bf16.mxu0 0
  %374 = vmatpush1.bf16.msra.mxu0 0
  %375 = vmatprep.subr.bf16.mxu0 0
  %376 = vmatpush1.bf16.msra.mxu0 0
  %377 = vmatprep.subr.bf16.mxu0 0
  %378 = vmatpush1.bf16.msra.mxu0 0
  %379 = vmatprep.subr.bf16.mxu0 0
  %380 = vmatpush1.bf16.msra.mxu0 %v59
  %381 = vmatprep.subr.bf16.mxu0 0
  %382 = vmatpush1.bf16.msra.mxu0 %v58
  %383 = vmatprep.subr.bf16.mxu0 0
  %384 = vmatpush2.bf16.msra.mxu0 0
  %385 = vmatprep.subr.bf16.mxu0 0
  %386 = vmatpush2.bf16.msra.mxu0 0
  %387 = vmatprep.subr.bf16.mxu0 0
  %388 = vmatpush2.bf16.msra.mxu0 0
  %389 = vmatprep.subr.bf16.mxu0 0
  %390 = vmatpush2.bf16.msra.mxu0 0
  %391 = vmatprep.subr.bf16.mxu0 0
  %392 = vmatpush2.bf16.msra.mxu0 0
  %393 = vmatprep.subr.bf16.mxu0 0
  %394 = vmatpush2.bf16.msra.mxu0 0
  %395 = vmatprep.subr.bf16.mxu0 0
  %396 = vmatpush2.bf16.msra.mxu0 0
  %397 = vmatprep.subr.bf16.mxu0 0
  %398 = vmatpush2.bf16.msra.mxu0 0
  %399 = vmatprep.mubr.bf16.mxu0 0
  %400 = vmatmul.mubr.bf16.gmra.mxu0 %v365
  %v401 = vpop.f32.mrf.mxu0
  %v402 = vadd.f32 0.0, %v401
  %v403 = vpop.f32.mrf.mxu0
  %v404 = vpop.f32.mrf.mxu0
  %v405 = vpop.f32.mrf.mxu0
  %406 = vdwg.mxu0
  %v407 = vadd.f32 %v359, %v402
  %v408 = vtanh.pop %v407
  %v409 = vmul.f32 %v408, %v47
  %v410 = vadd.f32 %v409, %v48
  %v411 = vmul.f32 %v410, %v346
  %413 = vrot.lane.b32.xlu0 %v410, 64
  %v414 = vpop.permute.xlu0 %413
  %v416 = vmul.f32 %v410, %v414
  %418 = vrot.lane.b32.xlu0 %v416, 32
  %v419 = vpop.permute.xlu0 %418
  %v421 = vadd.f32 %v411, %v419
  %v422 = vtanh.pop %v421
  %424 = vrot.lane.b32.xlu0 %v422, 64
  %v425 = vpop.permute.xlu0 %424
  %v427 = vmul.f32 %v410, %v425
  %429 = vrot.lane.b32.xlu0 %v427, 32
  %v430 = vpop.permute.xlu0 %429
  %432 = vst.msk [vmem:[#allocation2 + $0x8] sm:$0x3] %vm131, %v430
  %s433 = scalar_lea.vmem %s0, 10
  %v434 = vld [vmem:[%s433] sm:$0x3]
  %v435 = vpack.c.bf16 %v427, %v427
  %437 = vrot.lane.b32.xlu0 %v435, 32
  %v438 = vpop.permute.xlu0 %437
  %v440 = vsel %vm62, %v438, 0
  %442 = vmatprep.subr.bf16.mxu0 0
  %443 = vmatpush1.bf16.msra.mxu0 0
  %444 = vmatprep.subr.bf16.mxu0 0
  %445 = vmatpush1.bf16.msra.mxu0 0
  %446 = vmatprep.subr.bf16.mxu0 0
  %447 = vmatpush1.bf16.msra.mxu0 0
  %448 = vmatprep.subr.bf16.mxu0 0
  %449 = vmatpush1.bf16.msra.mxu0 0
  %450 = vmatprep.subr.bf16.mxu0 0
  %451 = vmatpush1.bf16.msra.mxu0 0
  %452 = vmatprep.subr.bf16.mxu0 0
  %453 = vmatpush1.bf16.msra.mxu0 0
  %454 = vmatprep.subr.bf16.mxu0 0
  %455 = vmatpush1.bf16.msra.mxu0 %v59
  %456 = vmatprep.subr.bf16.mxu0 0
  %457 = vmatpush1.bf16.msra.mxu0 %v58
  %458 = vmatprep.subr.bf16.mxu0 0
  %459 = vmatpush2.bf16.msra.mxu0 0
  %460 = vmatprep.subr.bf16.mxu0 0
  %461 = vmatpush2.bf16.msra.mxu0 0
  %462 = vmatprep.subr.bf16.mxu0 0
  %463 = vmatpush2.bf16.msra.mxu0 0
  %464 = vmatprep.subr.bf16.mxu0 0
  %465 = vmatpush2.bf16.msra.mxu0 0
  %466 = vmatprep.subr.bf16.mxu0 0
  %467 = vmatpush2.bf16.msra.mxu0 0
  %468 = vmatprep.subr.bf16.mxu0 0
  %469 = vmatpush2.bf16.msra.mxu0 0
  %470 = vmatprep.subr.bf16.mxu0 0
  %471 = vmatpush2.bf16.msra.mxu0 0
  %472 = vmatprep.subr.bf16.mxu0 0
  %473 = vmatpush2.bf16.msra.mxu0 0
  %474 = vmatprep.mubr.bf16.mxu0 0
  %475 = vmatmul.mubr.bf16.gmra.mxu0 %v440
  %v476 = vpop.f32.mrf.mxu0
  %v477 = vadd.f32 0.0, %v476
  %v478 = vpop.f32.mrf.mxu0
  %v479 = vpop.f32.mrf.mxu0
  %v480 = vpop.f32.mrf.mxu0
  %481 = vdwg.mxu0
  %v482 = vadd.f32 %v434, %v477
  %v483 = vtanh.pop %v482
  %v484 = vmul.f32 %v483, %v47
  %v485 = vadd.f32 %v484, %v48
  %v486 = vmul.f32 %v485, %v421
  %488 = vrot.lane.b32.xlu0 %v485, 64
  %v489 = vpop.permute.xlu0 %488
  %v491 = vmul.f32 %v485, %v489
  %493 = vrot.lane.b32.xlu0 %v491, 32
  %v494 = vpop.permute.xlu0 %493
  %v496 = vadd.f32 %v486, %v494
  %v497 = vtanh.pop %v496
  %499 = vrot.lane.b32.xlu0 %v497, 64
  %v500 = vpop.permute.xlu0 %499
  %v502 = vmul.f32 %v485, %v500
  %504 = vrot.lane.b32.xlu0 %v502, 32
  %v505 = vpop.permute.xlu0 %504
  %507 = vst.msk [vmem:[#allocation2 + $0xa] sm:$0x3] %vm131, %v505
  %s508 = scalar_lea.vmem %s0, 12
  %v509 = vld [vmem:[%s508] sm:$0x3]
  %v510 = vpack.c.bf16 %v502, %v502
  %512 = vrot.lane.b32.xlu0 %v510, 32
  %v513 = vpop.permute.xlu0 %512
  %v515 = vsel %vm62, %v513, 0
  %517 = vmatprep.subr.bf16.mxu0 0
  %518 = vmatpush1.bf16.msra.mxu0 0
  %519 = vmatprep.subr.bf16.mxu0 0
  %520 = vmatpush1.bf16.msra.mxu0 0
  %521 = vmatprep.subr.bf16.mxu0 0
  %522 = vmatpush1.bf16.msra.mxu0 0
  %523 = vmatprep.subr.bf16.mxu0 0
  %524 = vmatpush1.bf16.msra.mxu0 0
  %525 = vmatprep.subr.bf16.mxu0 0
  %526 = vmatpush1.bf16.msra.mxu0 0
  %527 = vmatprep.subr.bf16.mxu0 0
  %528 = vmatpush1.bf16.msra.mxu0 0
  %529 = vmatprep.subr.bf16.mxu0 0
  %530 = vmatpush1.bf16.msra.mxu0 %v59
  %531 = vmatprep.subr.bf16.mxu0 0
  %532 = vmatpush1.bf16.msra.mxu0 %v58
  %533 = vmatprep.subr.bf16.mxu0 0
  %534 = vmatpush2.bf16.msra.mxu0 0
  %535 = vmatprep.subr.bf16.mxu0 0
  %536 = vmatpush2.bf16.msra.mxu0 0
  %537 = vmatprep.subr.bf16.mxu0 0
  %538 = vmatpush2.bf16.msra.mxu0 0
  %539 = vmatprep.subr.bf16.mxu0 0
  %540 = vmatpush2.bf16.msra.mxu0 0
  %541 = vmatprep.subr.bf16.mxu0 0
  %542 = vmatpush2.bf16.msra.mxu0 0
  %543 = vmatprep.subr.bf16.mxu0 0
  %544 = vmatpush2.bf16.msra.mxu0 0
  %545 = vmatprep.subr.bf16.mxu0 0
  %546 = vmatpush2.bf16.msra.mxu0 0
  %547 = vmatprep.subr.bf16.mxu0 0
  %548 = vmatpush2.bf16.msra.mxu0 0
  %549 = vmatprep.mubr.bf16.mxu0 0
  %550 = vmatmul.mubr.bf16.gmra.mxu0 %v515
  %v551 = vpop.f32.mrf.mxu0
  %v552 = vadd.f32 0.0, %v551
  %v553 = vpop.f32.mrf.mxu0
  %v554 = vpop.f32.mrf.mxu0
  %v555 = vpop.f32.mrf.mxu0
  %556 = vdwg.mxu0
  %v557 = vadd.f32 %v509, %v552
  %v558 = vtanh.pop %v557
  %v559 = vmul.f32 %v558, %v47
  %v560 = vadd.f32 %v559, %v48
  %v561 = vmul.f32 %v560, %v496
  %563 = vrot.lane.b32.xlu0 %v560, 64
  %v564 = vpop.permute.xlu0 %563
  %v566 = vmul.f32 %v560, %v564
  %568 = vrot.lane.b32.xlu0 %v566, 32
  %v569 = vpop.permute.xlu0 %568
  %v571 = vadd.f32 %v561, %v569
  %v572 = vtanh.pop %v571
  %574 = vrot.lane.b32.xlu0 %v572, 64
  %v575 = vpop.permute.xlu0 %574
  %v577 = vmul.f32 %v560, %v575
  %579 = vrot.lane.b32.xlu0 %v577, 32
  %v580 = vpop.permute.xlu0 %579
  %582 = vst.msk [vmem:[#allocation2 + $0xc] sm:$0x3] %vm131, %v580
  %s583 = scalar_lea.vmem %s0, 14
  %v584 = vld [vmem:[%s583] sm:$0x3]
  %v585 = vpack.c.bf16 %v577, %v577
  %587 = vrot.lane.b32.xlu0 %v585, 32
  %v588 = vpop.permute.xlu0 %587
  %v590 = vsel %vm62, %v588, 0
  %592 = vmatprep.subr.bf16.mxu0 0
  %593 = vmatpush1.bf16.msra.mxu0 0
  %594 = vmatprep.subr.bf16.mxu0 0
  %595 = vmatpush1.bf16.msra.mxu0 0
  %596 = vmatprep.subr.bf16.mxu0 0
  %597 = vmatpush1.bf16.msra.mxu0 0
  %598 = vmatprep.subr.bf16.mxu0 0
  %599 = vmatpush1.bf16.msra.mxu0 0
  %600 = vmatprep.subr.bf16.mxu0 0
  %601 = vmatpush1.bf16.msra.mxu0 0
  %602 = vmatprep.subr.bf16.mxu0 0
  %603 = vmatpush1.bf16.msra.mxu0 0
  %604 = vmatprep.subr.bf16.mxu0 0
  %605 = vmatpush1.bf16.msra.mxu0 %v59
  %606 = vmatprep.subr.bf16.mxu0 0
  %607 = vmatpush1.bf16.msra.mxu0 %v58
  %608 = vmatprep.subr.bf16.mxu0 0
  %609 = vmatpush2.bf16.msra.mxu0 0
  %610 = vmatprep.subr.bf16.mxu0 0
  %611 = vmatpush2.bf16.msra.mxu0 0
  %612 = vmatprep.subr.bf16.mxu0 0
  %613 = vmatpush2.bf16.msra.mxu0 0
  %614 = vmatprep.subr.bf16.mxu0 0
  %615 = vmatpush2.bf16.msra.mxu0 0
  %616 = vmatprep.subr.bf16.mxu0 0
  %617 = vmatpush2.bf16.msra.mxu0 0
  %618 = vmatprep.subr.bf16.mxu0 0
  %619 = vmatpush2.bf16.msra.mxu0 0
  %620 = vmatprep.subr.bf16.mxu0 0
  %621 = vmatpush2.bf16.msra.mxu0 0
  %622 = vmatprep.subr.bf16.mxu0 0
  %623 = vmatpush2.bf16.msra.mxu0 0
  %624 = vmatprep.mubr.bf16.mxu0 0
  %625 = vmatmul.mubr.bf16.gmra.mxu0 %v590
  %v626 = vpop.f32.mrf.mxu0
  %v627 = vadd.f32 0.0, %v626
  %v628 = vpop.f32.mrf.mxu0
  %v629 = vpop.f32.mrf.mxu0
  %v630 = vpop.f32.mrf.mxu0
  %631 = vdwg.mxu0
  %v632 = vadd.f32 %v584, %v627
  %v633 = vtanh.pop %v632
  %v634 = vmul.f32 %v633, %v47
  %v635 = vadd.f32 %v634, %v48
  %v636 = vmul.f32 %v635, %v571
  %638 = vrot.lane.b32.xlu0 %v635, 64
  %v639 = vpop.permute.xlu0 %638
  %v641 = vmul.f32 %v635, %v639
  %643 = vrot.lane.b32.xlu0 %v641, 32
  %v644 = vpop.permute.xlu0 %643
  %v646 = vadd.f32 %v636, %v644
  %v647 = vtanh.pop %v646
  %649 = vrot.lane.b32.xlu0 %v647, 64
  %v650 = vpop.permute.xlu0 %649
  %v652 = vmul.f32 %v635, %v650
  %654 = vrot.lane.b32.xlu0 %v652, 32
  %v655 = vpop.permute.xlu0 %654
  %657 = vst.msk [vmem:[#allocation2 + $0xe] sm:$0x3] %vm131, %v655
  %s658 = scalar_lea.vmem %s0, 16
  %v659 = vld [vmem:[%s658] sm:$0x3]
  %v660 = vpack.c.bf16 %v652, %v652
  %662 = vrot.lane.b32.xlu0 %v660, 32
  %v663 = vpop.permute.xlu0 %662
  %v665 = vsel %vm62, %v663, 0
  %667 = vmatprep.subr.bf16.mxu0 0
  %668 = vmatpush1.bf16.msra.mxu0 0
  %669 = vmatprep.subr.bf16.mxu0 0
  %670 = vmatpush1.bf16.msra.mxu0 0
  %671 = vmatprep.subr.bf16.mxu0 0
  %672 = vmatpush1.bf16.msra.mxu0 0
  %673 = vmatprep.subr.bf16.mxu0 0
  %674 = vmatpush1.bf16.msra.mxu0 0
  %675 = vmatprep.subr.bf16.mxu0 0
  %676 = vmatpush1.bf16.msra.mxu0 0
  %677 = vmatprep.subr.bf16.mxu0 0
  %678 = vmatpush1.bf16.msra.mxu0 0
  %679 = vmatprep.subr.bf16.mxu0 0
  %680 = vmatpush1.bf16.msra.mxu0 %v59
  %681 = vmatprep.subr.bf16.mxu0 0
  %682 = vmatpush1.bf16.msra.mxu0 %v58
  %683 = vmatprep.subr.bf16.mxu0 0
  %684 = vmatpush2.bf16.msra.mxu0 0
  %685 = vmatprep.subr.bf16.mxu0 0
  %686 = vmatpush2.bf16.msra.mxu0 0
  %687 = vmatprep.subr.bf16.mxu0 0
  %688 = vmatpush2.bf16.msra.mxu0 0
  %689 = vmatprep.subr.bf16.mxu0 0
  %690 = vmatpush2.bf16.msra.mxu0 0
  %691 = vmatprep.subr.bf16.mxu0 0
  %692 = vmatpush2.bf16.msra.mxu0 0
  %693 = vmatprep.subr.bf16.mxu0 0
  %694 = vmatpush2.bf16.msra.mxu0 0
  %695 = vmatprep.subr.bf16.mxu0 0
  %696 = vmatpush2.bf16.msra.mxu0 0
  %697 = vmatprep.subr.bf16.mxu0 0
  %698 = vmatpush2.bf16.msra.mxu0 0
  %699 = vmatprep.mubr.bf16.mxu0 0
  %700 = vmatmul.mubr.bf16.gmra.mxu0 %v665
  %v701 = vpop.f32.mrf.mxu0
  %v702 = vadd.f32 0.0, %v701
  %v703 = vpop.f32.mrf.mxu0
  %v704 = vpop.f32.mrf.mxu0
  %v705 = vpop.f32.mrf.mxu0
  %706 = vdwg.mxu0
  %v707 = vadd.f32 %v659, %v702
  %v708 = vtanh.pop %v707
  %v709 = vmul.f32 %v708, %v47
  %v710 = vadd.f32 %v709, %v48
  %v711 = vmul.f32 %v710, %v646
  %713 = vrot.lane.b32.xlu0 %v710, 64
  %v714 = vpop.permute.xlu0 %713
  %v716 = vmul.f32 %v710, %v714
  %718 = vrot.lane.b32.xlu0 %v716, 32
  %v719 = vpop.permute.xlu0 %718
  %v721 = vadd.f32 %v711, %v719
  %v722 = vtanh.pop %v721
  %724 = vrot.lane.b32.xlu0 %v722, 64
  %v725 = vpop.permute.xlu0 %724
  %v727 = vmul.f32 %v710, %v725
  %729 = vrot.lane.b32.xlu0 %v727, 32
  %v730 = vpop.permute.xlu0 %729
  %732 = vst.msk [vmem:[#allocation2 + $0x10] sm:$0x3] %vm131, %v730
  %s733 = scalar_lea.vmem %s0, 18
  %v734 = vld [vmem:[%s733] sm:$0x3]
  %v735 = vpack.c.bf16 %v727, %v727
  %737 = vrot.lane.b32.xlu0 %v735, 32
  %v738 = vpop.permute.xlu0 %737
  %v740 = vsel %vm62, %v738, 0
  %742 = vmatprep.subr.bf16.mxu0 0
  %743 = vmatpush1.bf16.msra.mxu0 0
  %744 = vmatprep.subr.bf16.mxu0 0
  %745 = vmatpush1.bf16.msra.mxu0 0
  %746 = vmatprep.subr.bf16.mxu0 0
  %747 = vmatpush1.bf16.msra.mxu0 0
  %748 = vmatprep.subr.bf16.mxu0 0
  %749 = vmatpush1.bf16.msra.mxu0 0
  %750 = vmatprep.subr.bf16.mxu0 0
  %751 = vmatpush1.bf16.msra.mxu0 0
  %752 = vmatprep.subr.bf16.mxu0 0
  %753 = vmatpush1.bf16.msra.mxu0 0
  %754 = vmatprep.subr.bf16.mxu0 0
  %755 = vmatpush1.bf16.msra.mxu0 %v59
  %756 = vmatprep.subr.bf16.mxu0 0
  %757 = vmatpush1.bf16.msra.mxu0 %v58
  %758 = vmatprep.subr.bf16.mxu0 0
  %759 = vmatpush2.bf16.msra.mxu0 0
  %760 = vmatprep.subr.bf16.mxu0 0
  %761 = vmatpush2.bf16.msra.mxu0 0
  %762 = vmatprep.subr.bf16.mxu0 0
  %763 = vmatpush2.bf16.msra.mxu0 0
  %764 = vmatprep.subr.bf16.mxu0 0
  %765 = vmatpush2.bf16.msra.mxu0 0
  %766 = vmatprep.subr.bf16.mxu0 0
  %767 = vmatpush2.bf16.msra.mxu0 0
  %768 = vmatprep.subr.bf16.mxu0 0
  %769 = vmatpush2.bf16.msra.mxu0 0
  %770 = vmatprep.subr.bf16.mxu0 0
  %771 = vmatpush2.bf16.msra.mxu0 0
  %772 = vmatprep.subr.bf16.mxu0 0
  %773 = vmatpush2.bf16.msra.mxu0 0
  %774 = vmatprep.mubr.bf16.mxu0 0
  %775 = vmatmul.mubr.bf16.gmra.mxu0 %v740
  %v776 = vpop.f32.mrf.mxu0
  %v777 = vadd.f32 0.0, %v776
  %v778 = vpop.f32.mrf.mxu0
  %v779 = vpop.f32.mrf.mxu0
  %v780 = vpop.f32.mrf.mxu0
  %781 = vdwg.mxu0
  %v782 = vadd.f32 %v734, %v777
  %v783 = vtanh.pop %v782
  %v784 = vmul.f32 %v783, %v47
  %v785 = vadd.f32 %v784, %v48
  %v786 = vmul.f32 %v785, %v721
  %788 = vrot.lane.b32.xlu0 %v785, 64
  %v789 = vpop.permute.xlu0 %788
  %v791 = vmul.f32 %v785, %v789
  %793 = vrot.lane.b32.xlu0 %v791, 32
  %v794 = vpop.permute.xlu0 %793
  %v796 = vadd.f32 %v786, %v794
  %v797 = vtanh.pop %v796
  %799 = vrot.lane.b32.xlu0 %v797, 64
  %v800 = vpop.permute.xlu0 %799
  %v802 = vmul.f32 %v785, %v800
  %804 = vrot.lane.b32.xlu0 %v802, 32
  %v805 = vpop.permute.xlu0 %804
  %807 = vst.msk [vmem:[#allocation2 + $0x12] sm:$0x3] %vm131, %v805
  %s808 = scalar_lea.vmem %s0, 20
  %v809 = vld [vmem:[%s808] sm:$0x3]
  %v810 = vpack.c.bf16 %v802, %v802
  %812 = vrot.lane.b32.xlu0 %v810, 32
  %v813 = vpop.permute.xlu0 %812
  %v815 = vsel %vm62, %v813, 0
  %817 = vmatprep.subr.bf16.mxu0 0
  %818 = vmatpush1.bf16.msra.mxu0 0
  %819 = vmatprep.subr.bf16.mxu0 0
  %820 = vmatpush1.bf16.msra.mxu0 0
  %821 = vmatprep.subr.bf16.mxu0 0
  %822 = vmatpush1.bf16.msra.mxu0 0
  %823 = vmatprep.subr.bf16.mxu0 0
  %824 = vmatpush1.bf16.msra.mxu0 0
  %825 = vmatprep.subr.bf16.mxu0 0
  %826 = vmatpush1.bf16.msra.mxu0 0
  %827 = vmatprep.subr.bf16.mxu0 0
  %828 = vmatpush1.bf16.msra.mxu0 0
  %829 = vmatprep.subr.bf16.mxu0 0
  %830 = vmatpush1.bf16.msra.mxu0 %v59
  %831 = vmatprep.subr.bf16.mxu0 0
  %832 = vmatpush1.bf16.msra.mxu0 %v58
  %833 = vmatprep.subr.bf16.mxu0 0
  %834 = vmatpush2.bf16.msra.mxu0 0
  %835 = vmatprep.subr.bf16.mxu0 0
  %836 = vmatpush2.bf16.msra.mxu0 0
  %837 = vmatprep.subr.bf16.mxu0 0
  %838 = vmatpush2.bf16.msra.mxu0 0
  %839 = vmatprep.subr.bf16.mxu0 0
  %840 = vmatpush2.bf16.msra.mxu0 0
  %841 = vmatprep.subr.bf16.mxu0 0
  %842 = vmatpush2.bf16.msra.mxu0 0
  %843 = vmatprep.subr.bf16.mxu0 0
  %844 = vmatpush2.bf16.msra.mxu0 0
  %845 = vmatprep.subr.bf16.mxu0 0
  %846 = vmatpush2.bf16.msra.mxu0 0
  %847 = vmatprep.subr.bf16.mxu0 0
  %848 = vmatpush2.bf16.msra.mxu0 0
  %849 = vmatprep.mubr.bf16.mxu0 0
  %850 = vmatmul.mubr.bf16.gmra.mxu0 %v815
  %v851 = vpop.f32.mrf.mxu0
  %v852 = vadd.f32 0.0, %v851
  %v853 = vpop.f32.mrf.mxu0
  %v854 = vpop.f32.mrf.mxu0
  %v855 = vpop.f32.mrf.mxu0
  %856 = vdwg.mxu0
  %v857 = vadd.f32 %v809, %v852
  %v858 = vtanh.pop %v857
  %v859 = vmul.f32 %v858, %v47
  %v860 = vadd.f32 %v859, %v48
  %v861 = vmul.f32 %v860, %v796
  %863 = vrot.lane.b32.xlu0 %v860, 64
  %v864 = vpop.permute.xlu0 %863
  %v866 = vmul.f32 %v860, %v864
  %868 = vrot.lane.b32.xlu0 %v866, 32
  %v869 = vpop.permute.xlu0 %868
  %v871 = vadd.f32 %v861, %v869
  %v872 = vtanh.pop %v871
  %874 = vrot.lane.b32.xlu0 %v872, 64
  %v875 = vpop.permute.xlu0 %874
  %v877 = vmul.f32 %v860, %v875
  %879 = vrot.lane.b32.xlu0 %v877, 32
  %v880 = vpop.permute.xlu0 %879
  %882 = vst.msk [vmem:[#allocation2 + $0x14] sm:$0x3] %vm131, %v880
  %s883 = scalar_lea.vmem %s0, 22
  %v884 = vld [vmem:[%s883] sm:$0x3]
  %v885 = vpack.c.bf16 %v877, %v877
  %887 = vrot.lane.b32.xlu0 %v885, 32
  %v888 = vpop.permute.xlu0 %887
  %v890 = vsel %vm62, %v888, 0
  %892 = vmatprep.subr.bf16.mxu0 0
  %893 = vmatpush1.bf16.msra.mxu0 0
  %894 = vmatprep.subr.bf16.mxu0 0
  %895 = vmatpush1.bf16.msra.mxu0 0
  %896 = vmatprep.subr.bf16.mxu0 0
  %897 = vmatpush1.bf16.msra.mxu0 0
  %898 = vmatprep.subr.bf16.mxu0 0
  %899 = vmatpush1.bf16.msra.mxu0 0
  %900 = vmatprep.subr.bf16.mxu0 0
  %901 = vmatpush1.bf16.msra.mxu0 0
  %902 = vmatprep.subr.bf16.mxu0 0
  %903 = vmatpush1.bf16.msra.mxu0 0
  %904 = vmatprep.subr.bf16.mxu0 0
  %905 = vmatpush1.bf16.msra.mxu0 %v59
  %906 = vmatprep.subr.bf16.mxu0 0
  %907 = vmatpush1.bf16.msra.mxu0 %v58
  %908 = vmatprep.subr.bf16.mxu0 0
  %909 = vmatpush2.bf16.msra.mxu0 0
  %910 = vmatprep.subr.bf16.mxu0 0
  %911 = vmatpush2.bf16.msra.mxu0 0
  %912 = vmatprep.subr.bf16.mxu0 0
  %913 = vmatpush2.bf16.msra.mxu0 0
  %914 = vmatprep.subr.bf16.mxu0 0
  %915 = vmatpush2.bf16.msra.mxu0 0
  %916 = vmatprep.subr.bf16.mxu0 0
  %917 = vmatpush2.bf16.msra.mxu0 0
  %918 = vmatprep.subr.bf16.mxu0 0
  %919 = vmatpush2.bf16.msra.mxu0 0
  %920 = vmatprep.subr.bf16.mxu0 0
  %921 = vmatpush2.bf16.msra.mxu0 0
  %922 = vmatprep.subr.bf16.mxu0 0
  %923 = vmatpush2.bf16.msra.mxu0 0
  %924 = vmatprep.mubr.bf16.mxu0 0
  %925 = vmatmul.mubr.bf16.gmra.mxu0 %v890
  %v926 = vpop.f32.mrf.mxu0
  %v927 = vadd.f32 0.0, %v926
  %v928 = vpop.f32.mrf.mxu0
  %v929 = vpop.f32.mrf.mxu0
  %v930 = vpop.f32.mrf.mxu0
  %931 = vdwg.mxu0
  %v932 = vadd.f32 %v884, %v927
  %v933 = vtanh.pop %v932
  %v934 = vmul.f32 %v933, %v47
  %v935 = vadd.f32 %v934, %v48
  %v936 = vmul.f32 %v935, %v871
  %938 = vrot.lane.b32.xlu0 %v935, 64
  %v939 = vpop.permute.xlu0 %938
  %v941 = vmul.f32 %v935, %v939
  %943 = vrot.lane.b32.xlu0 %v941, 32
  %v944 = vpop.permute.xlu0 %943
  %v946 = vadd.f32 %v936, %v944
  %v947 = vtanh.pop %v946
  %949 = vrot.lane.b32.xlu0 %v947, 64
  %v950 = vpop.permute.xlu0 %949
  %v952 = vmul.f32 %v935, %v950
  %954 = vrot.lane.b32.xlu0 %v952, 32
  %v955 = vpop.permute.xlu0 %954
  %957 = vst.msk [vmem:[#allocation2 + $0x16] sm:$0x3] %vm131, %v955
  %s958 = scalar_lea.vmem %s0, 24
  %v959 = vld [vmem:[%s958] sm:$0x3]
  %v960 = vpack.c.bf16 %v952, %v952
  %962 = vrot.lane.b32.xlu0 %v960, 32
  %v963 = vpop.permute.xlu0 %962
  %v965 = vsel %vm62, %v963, 0
  %967 = vmatprep.subr.bf16.mxu0 0
  %968 = vmatpush1.bf16.msra.mxu0 0
  %969 = vmatprep.subr.bf16.mxu0 0
  %970 = vmatpush1.bf16.msra.mxu0 0
  %971 = vmatprep.subr.bf16.mxu0 0
  %972 = vmatpush1.bf16.msra.mxu0 0
  %973 = vmatprep.subr.bf16.mxu0 0
  %974 = vmatpush1.bf16.msra.mxu0 0
  %975 = vmatprep.subr.bf16.mxu0 0
  %976 = vmatpush1.bf16.msra.mxu0 0
  %977 = vmatprep.subr.bf16.mxu0 0
  %978 = vmatpush1.bf16.msra.mxu0 0
  %979 = vmatprep.subr.bf16.mxu0 0
  %980 = vmatpush1.bf16.msra.mxu0 %v59
  %981 = vmatprep.subr.bf16.mxu0 0
  %982 = vmatpush1.bf16.msra.mxu0 %v58
  %983 = vmatprep.subr.bf16.mxu0 0
  %984 = vmatpush2.bf16.msra.mxu0 0
  %985 = vmatprep.subr.bf16.mxu0 0
  %986 = vmatpush2.bf16.msra.mxu0 0
  %987 = vmatprep.subr.bf16.mxu0 0
  %988 = vmatpush2.bf16.msra.mxu0 0
  %989 = vmatprep.subr.bf16.mxu0 0
  %990 = vmatpush2.bf16.msra.mxu0 0
  %991 = vmatprep.subr.bf16.mxu0 0
  %992 = vmatpush2.bf16.msra.mxu0 0
  %993 = vmatprep.subr.bf16.mxu0 0
  %994 = vmatpush2.bf16.msra.mxu0 0
  %995 = vmatprep.subr.bf16.mxu0 0
  %996 = vmatpush2.bf16.msra.mxu0 0
  %997 = vmatprep.subr.bf16.mxu0 0
  %998 = vmatpush2.bf16.msra.mxu0 0
  %999 = vmatprep.mubr.bf16.mxu0 0
  %1000 = vmatmul.mubr.bf16.gmra.mxu0 %v965
  %v1001 = vpop.f32.mrf.mxu0
  %v1002 = vadd.f32 0.0, %v1001
  %v1003 = vpop.f32.mrf.mxu0
  %v1004 = vpop.f32.mrf.mxu0
  %v1005 = vpop.f32.mrf.mxu0
  %1006 = vdwg.mxu0
  %v1007 = vadd.f32 %v959, %v1002
  %v1008 = vtanh.pop %v1007
  %v1009 = vmul.f32 %v1008, %v47
  %v1010 = vadd.f32 %v1009, %v48
  %v1011 = vmul.f32 %v1010, %v946
  %1013 = vrot.lane.b32.xlu0 %v1010, 64
  %v1014 = vpop.permute.xlu0 %1013
  %v1016 = vmul.f32 %v1010, %v1014
  %1018 = vrot.lane.b32.xlu0 %v1016, 32
  %v1019 = vpop.permute.xlu0 %1018
  %v1021 = vadd.f32 %v1011, %v1019
  %v1022 = vtanh.pop %v1021
  %1024 = vrot.lane.b32.xlu0 %v1022, 64
  %v1025 = vpop.permute.xlu0 %1024
  %v1027 = vmul.f32 %v1010, %v1025
  %1029 = vrot.lane.b32.xlu0 %v1027, 32
  %v1030 = vpop.permute.xlu0 %1029
  %1032 = vst.msk [vmem:[#allocation2 + $0x18] sm:$0x3] %vm131, %v1030
  %s1033 = scalar_lea.vmem %s0, 26
  %v1034 = vld [vmem:[%s1033] sm:$0x3]
  %v1035 = vpack.c.bf16 %v1027, %v1027
  %1037 = vrot.lane.b32.xlu0 %v1035, 32
  %v1038 = vpop.permute.xlu0 %1037
  %v1040 = vsel %vm62, %v1038, 0
  %1042 = vmatprep.subr.bf16.mxu0 0
  %1043 = vmatpush1.bf16.msra.mxu0 0
  %1044 = vmatprep.subr.bf16.mxu0 0
  %1045 = vmatpush1.bf16.msra.mxu0 0
  %1046 = vmatprep.subr.bf16.mxu0 0
  %1047 = vmatpush1.bf16.msra.mxu0 0
  %1048 = vmatprep.subr.bf16.mxu0 0
  %1049 = vmatpush1.bf16.msra.mxu0 0
  %1050 = vmatprep.subr.bf16.mxu0 0
  %1051 = vmatpush1.bf16.msra.mxu0 0
  %1052 = vmatprep.subr.bf16.mxu0 0
  %1053 = vmatpush1.bf16.msra.mxu0 0
  %1054 = vmatprep.subr.bf16.mxu0 0
  %1055 = vmatpush1.bf16.msra.mxu0 %v59
  %1056 = vmatprep.subr.bf16.mxu0 0
  %1057 = vmatpush1.bf16.msra.mxu0 %v58
  %1058 = vmatprep.subr.bf16.mxu0 0
  %1059 = vmatpush2.bf16.msra.mxu0 0
  %1060 = vmatprep.subr.bf16.mxu0 0
  %1061 = vmatpush2.bf16.msra.mxu0 0
  %1062 = vmatprep.subr.bf16.mxu0 0
  %1063 = vmatpush2.bf16.msra.mxu0 0
  %1064 = vmatprep.subr.bf16.mxu0 0
  %1065 = vmatpush2.bf16.msra.mxu0 0
  %1066 = vmatprep.subr.bf16.mxu0 0
  %1067 = vmatpush2.bf16.msra.mxu0 0
  %1068 = vmatprep.subr.bf16.mxu0 0
  %1069 = vmatpush2.bf16.msra.mxu0 0
  %1070 = vmatprep.subr.bf16.mxu0 0
  %1071 = vmatpush2.bf16.msra.mxu0 0
  %1072 = vmatprep.subr.bf16.mxu0 0
  %1073 = vmatpush2.bf16.msra.mxu0 0
  %1074 = vmatprep.mubr.bf16.mxu0 0
  %1075 = vmatmul.mubr.bf16.gmra.mxu0 %v1040
  %v1076 = vpop.f32.mrf.mxu0
  %v1077 = vadd.f32 0.0, %v1076
  %v1078 = vpop.f32.mrf.mxu0
  %v1079 = vpop.f32.mrf.mxu0
  %v1080 = vpop.f32.mrf.mxu0
  %1081 = vdwg.mxu0
  %v1082 = vadd.f32 %v1034, %v1077
  %v1083 = vtanh.pop %v1082
  %v1084 = vmul.f32 %v1083, %v47
  %v1085 = vadd.f32 %v1084, %v48
  %v1086 = vmul.f32 %v1085, %v1021
  %1088 = vrot.lane.b32.xlu0 %v1085, 64
  %v1089 = vpop.permute.xlu0 %1088
  %v1091 = vmul.f32 %v1085, %v1089
  %1093 = vrot.lane.b32.xlu0 %v1091, 32
  %v1094 = vpop.permute.xlu0 %1093
  %v1096 = vadd.f32 %v1086, %v1094
  %v1097 = vtanh.pop %v1096
  %1099 = vrot.lane.b32.xlu0 %v1097, 64
  %v1100 = vpop.permute.xlu0 %1099
  %v1102 = vmul.f32 %v1085, %v1100
  %1104 = vrot.lane.b32.xlu0 %v1102, 32
  %v1105 = vpop.permute.xlu0 %1104
  %1107 = vst.msk [vmem:[#allocation2 + $0x1a] sm:$0x3] %vm131, %v1105
  %s1108 = scalar_lea.vmem %s0, 28
  %v1109 = vld [vmem:[%s1108] sm:$0x3]
  %v1110 = vpack.c.bf16 %v1102, %v1102
  %1112 = vrot.lane.b32.xlu0 %v1110, 32
  %v1113 = vpop.permute.xlu0 %1112
  %v1115 = vsel %vm62, %v1113, 0
  %1117 = vmatprep.subr.bf16.mxu0 0
  %1118 = vmatpush1.bf16.msra.mxu0 0
  %1119 = vmatprep.subr.bf16.mxu0 0
  %1120 = vmatpush1.bf16.msra.mxu0 0
  %1121 = vmatprep.subr.bf16.mxu0 0
  %1122 = vmatpush1.bf16.msra.mxu0 0
  %1123 = vmatprep.subr.bf16.mxu0 0
  %1124 = vmatpush1.bf16.msra.mxu0 0
  %1125 = vmatprep.subr.bf16.mxu0 0
  %1126 = vmatpush1.bf16.msra.mxu0 0
  %1127 = vmatprep.subr.bf16.mxu0 0
  %1128 = vmatpush1.bf16.msra.mxu0 0
  %1129 = vmatprep.subr.bf16.mxu0 0
  %1130 = vmatpush1.bf16.msra.mxu0 %v59
  %1131 = vmatprep.subr.bf16.mxu0 0
  %1132 = vmatpush1.bf16.msra.mxu0 %v58
  %1133 = vmatprep.subr.bf16.mxu0 0
  %1134 = vmatpush2.bf16.msra.mxu0 0
  %1135 = vmatprep.subr.bf16.mxu0 0
  %1136 = vmatpush2.bf16.msra.mxu0 0
  %1137 = vmatprep.subr.bf16.mxu0 0
  %1138 = vmatpush2.bf16.msra.mxu0 0
  %1139 = vmatprep.subr.bf16.mxu0 0
  %1140 = vmatpush2.bf16.msra.mxu0 0
  %1141 = vmatprep.subr.bf16.mxu0 0
  %1142 = vmatpush2.bf16.msra.mxu0 0
  %1143 = vmatprep.subr.bf16.mxu0 0
  %1144 = vmatpush2.bf16.msra.mxu0 0
  %1145 = vmatprep.subr.bf16.mxu0 0
  %1146 = vmatpush2.bf16.msra.mxu0 0
  %1147 = vmatprep.subr.bf16.mxu0 0
  %1148 = vmatpush2.bf16.msra.mxu0 0
  %1149 = vmatprep.mubr.bf16.mxu0 0
  %1150 = vmatmul.mubr.bf16.gmra.mxu0 %v1115
  %v1151 = vpop.f32.mrf.mxu0
  %v1152 = vadd.f32 0.0, %v1151
  %v1153 = vpop.f32.mrf.mxu0
  %v1154 = vpop.f32.mrf.mxu0
  %v1155 = vpop.f32.mrf.mxu0
  %1156 = vdwg.mxu0
  %v1157 = vadd.f32 %v1109, %v1152
  %v1158 = vtanh.pop %v1157
  %v1159 = vmul.f32 %v1158, %v47
  %v1160 = vadd.f32 %v1159, %v48
  %v1161 = vmul.f32 %v1160, %v1096
  %1163 = vrot.lane.b32.xlu0 %v1160, 64
  %v1164 = vpop.permute.xlu0 %1163
  %v1166 = vmul.f32 %v1160, %v1164
  %1168 = vrot.lane.b32.xlu0 %v1166, 32
  %v1169 = vpop.permute.xlu0 %1168
  %v1171 = vadd.f32 %v1161, %v1169
  %v1172 = vtanh.pop %v1171
  %1174 = vrot.lane.b32.xlu0 %v1172, 64
  %v1175 = vpop.permute.xlu0 %1174
  %v1177 = vmul.f32 %v1160, %v1175
  %1179 = vrot.lane.b32.xlu0 %v1177, 32
  %v1180 = vpop.permute.xlu0 %1179
  %1182 = vst.msk [vmem:[#allocation2 + $0x1c] sm:$0x3] %vm131, %v1180
  %s1183 = scalar_lea.vmem %s0, 30
  %v1184 = vld [vmem:[%s1183] sm:$0x3]
  %v1185 = vpack.c.bf16 %v1177, %v1177
  %1187 = vrot.lane.b32.xlu0 %v1185, 32
  %v1188 = vpop.permute.xlu0 %1187
  %v1190 = vsel %vm62, %v1188, 0
  %1192 = vmatprep.subr.bf16.mxu0 0
  %1193 = vmatpush1.bf16.msra.mxu0 0
  %1194 = vmatprep.subr.bf16.mxu0 0
  %1195 = vmatpush1.bf16.msra.mxu0 0
  %1196 = vmatprep.subr.bf16.mxu0 0
  %1197 = vmatpush1.bf16.msra.mxu0 0
  %1198 = vmatprep.subr.bf16.mxu0 0
  %1199 = vmatpush1.bf16.msra.mxu0 0
  %1200 = vmatprep.subr.bf16.mxu0 0
  %1201 = vmatpush1.bf16.msra.mxu0 0
  %1202 = vmatprep.subr.bf16.mxu0 0
  %1203 = vmatpush1.bf16.msra.mxu0 0
  %1204 = vmatprep.subr.bf16.mxu0 0
  %1205 = vmatpush1.bf16.msra.mxu0 %v59
  %1206 = vmatprep.subr.bf16.mxu0 0
  %1207 = vmatpush1.bf16.msra.mxu0 %v58
  %1208 = vmatprep.subr.bf16.mxu0 0
  %1209 = vmatpush2.bf16.msra.mxu0 0
  %1210 = vmatprep.subr.bf16.mxu0 0
  %1211 = vmatpush2.bf16.msra.mxu0 0
  %1212 = vmatprep.subr.bf16.mxu0 0
  %1213 = vmatpush2.bf16.msra.mxu0 0
  %1214 = vmatprep.subr.bf16.mxu0 0
  %1215 = vmatpush2.bf16.msra.mxu0 0
  %1216 = vmatprep.subr.bf16.mxu0 0
  %1217 = vmatpush2.bf16.msra.mxu0 0
  %1218 = vmatprep.subr.bf16.mxu0 0
  %1219 = vmatpush2.bf16.msra.mxu0 0
  %1220 = vmatprep.subr.bf16.mxu0 0
  %1221 = vmatpush2.bf16.msra.mxu0 0
  %1222 = vmatprep.subr.bf16.mxu0 0
  %1223 = vmatpush2.bf16.msra.mxu0 0
  %1224 = vmatprep.mubr.bf16.mxu0 0
  %1225 = vmatmul.mubr.bf16.gmra.mxu0 %v1190
  %v1226 = vpop.f32.mrf.mxu0
  %v1227 = vadd.f32 0.0, %v1226
  %v1228 = vpop.f32.mrf.mxu0
  %v1229 = vpop.f32.mrf.mxu0
  %v1230 = vpop.f32.mrf.mxu0
  %1231 = vdwg.mxu0
  %v1232 = vadd.f32 %v1184, %v1227
  %v1233 = vtanh.pop %v1232
  %v1234 = vmul.f32 %v1233, %v47
  %v1235 = vadd.f32 %v1234, %v48
  %v1236 = vmul.f32 %v1235, %v1171
  %1238 = vrot.lane.b32.xlu0 %v1235, 64
  %v1239 = vpop.permute.xlu0 %1238
  %v1241 = vmul.f32 %v1235, %v1239
  %1243 = vrot.lane.b32.xlu0 %v1241, 32
  %v1244 = vpop.permute.xlu0 %1243
  %v1246 = vadd.f32 %v1236, %v1244
  %v1247 = vtanh.pop %v1246
  %1249 = vrot.lane.b32.xlu0 %v1247, 64
  %v1250 = vpop.permute.xlu0 %1249
  %v1252 = vmul.f32 %v1235, %v1250
  %1254 = vrot.lane.b32.xlu0 %v1252, 32
  %v1255 = vpop.permute.xlu0 %1254
  %1257 = vst.msk [vmem:[#allocation2 + $0x1e] sm:$0x3] %vm131, %v1255
  %v1258 = vld [vmem:[#allocation2] sm:$0xff]
  %v1259 = vld [vmem:[#allocation2 + $0x8] sm:$0xff]
  %v1260 = vld [vmem:[#allocation2 + $0x10] sm:$0xff]
  %v1261 = vld [vmem:[#allocation2 + $0x18] sm:$0xff]
  %v1262 = vpack.c.bf16 %v1259, %v1258
  %v1263 = vpack.c.bf16 %v1261, %v1260
  %v1265 = vlaneseq
  %v1266 = vshrl.u32 %v1265, 7
  %v1267 = vsub.s32 0, %v1266
  %v1268 = vrot.slane %v41, %v1267
  %v1274 = vunpack.c.l.b16 %v33
  %v1275 = vunpack.c.l.b16 %v34
  %v1276 = vunpack.c.l.b16 %v35
  %v1277 = vunpack.c.l.b16 %v36
  %v1278 = vpack.c.b16 %v1275, %v1274
  %v1279 = vpack.c.b16 %v1277, %v1276
  %v1283 = vsel %vm62, %v1262, 0
  %v1286 = vsel %vm62, %v1263, 0
  %1288 = vmatprep.subr.bf16.mxu0 0
  %1289 = vmatpush1.bf16.msra.mxu0 0
  %1290 = vmatprep.subr.bf16.mxu0 0
  %1291 = vmatpush1.bf16.msra.mxu0 0
  %1292 = vmatprep.subr.bf16.mxu0 0
  %1293 = vmatpush1.bf16.msra.mxu0 0
  %1294 = vmatprep.subr.bf16.mxu0 0
  %1295 = vmatpush1.bf16.msra.mxu0 0
  %1296 = vmatprep.subr.bf16.mxu0 0
  %1297 = vmatpush1.bf16.msra.mxu0 0
  %1298 = vmatprep.subr.bf16.mxu0 0
  %1299 = vmatpush1.bf16.msra.mxu0 0
  %1300 = vmatprep.subr.bf16.mxu0 0
  %1301 = vmatpush1.bf16.msra.mxu0 %v1279
  %1302 = vmatprep.subr.bf16.mxu0 0
  %1303 = vmatpush1.bf16.msra.mxu0 %v1278
  %1304 = vmatprep.subr.bf16.mxu0 0
  %1305 = vmatpush2.bf16.msra.mxu0 0
  %1306 = vmatprep.subr.bf16.mxu0 0
  %1307 = vmatpush2.bf16.msra.mxu0 0
  %1308 = vmatprep.subr.bf16.mxu0 0
  %1309 = vmatpush2.bf16.msra.mxu0 0
  %1310 = vmatprep.subr.bf16.mxu0 0
  %1311 = vmatpush2.bf16.msra.mxu0 0
  %1312 = vmatprep.subr.bf16.mxu0 0
  %1313 = vmatpush2.bf16.msra.mxu0 0
  %1314 = vmatprep.subr.bf16.mxu0 0
  %1315 = vmatpush2.bf16.msra.mxu0 0
  %1316 = vmatprep.subr.bf16.mxu0 0
  %1317 = vmatpush2.bf16.msra.mxu0 0
  %1318 = vmatprep.subr.bf16.mxu0 0
  %1319 = vmatpush2.bf16.msra.mxu0 0
  %1320 = vmatprep.mubr.bf16.mxu0 0
  %1321 = vmatmul.mubr.bf16.gmra.mxu0 %v1283
  %v1322 = vpop.f32.mrf.mxu0
  %v1323 = vadd.f32 %v1268, %v1322
  %v1324 = vpop.f32.mrf.mxu0
  %v1325 = vpop.f32.mrf.mxu0
  %v1326 = vadd.f32 %v1268, %v1325
  %v1327 = vpop.f32.mrf.mxu0
  %1328 = vmatprep.mubr.bf16.mxu0 0
  %1329 = vmatmul.mubr.bf16.gmra.mxu0 %v1286
  %v1330 = vpop.f32.mrf.mxu0
  %v1331 = vadd.f32 %v1268, %v1330
  %v1332 = vpop.f32.mrf.mxu0
  %v1333 = vpop.f32.mrf.mxu0
  %v1334 = vadd.f32 %v1268, %v1333
  %v1335 = vpop.f32.mrf.mxu0
  %1336 = vdwg.mxu0
  %v1341 = vunpack.c.l.b16 %v37
  %v1342 = vunpack.c.l.b16 %v38
  %v1343 = vunpack.c.l.b16 %v39
  %v1344 = vunpack.c.l.b16 %v40
  %v1345 = vpack.c.b16 %v1342, %v1341
  %v1346 = vpack.c.b16 %v1344, %v1343
  %1349 = vmatprep.subr.bf16.mxu0 0
  %1350 = vmatpush1.bf16.msra.mxu0 0
  %1351 = vmatprep.subr.bf16.mxu0 0
  %1352 = vmatpush1.bf16.msra.mxu0 0
  %1353 = vmatprep.subr.bf16.mxu0 0
  %1354 = vmatpush1.bf16.msra.mxu0 0
  %1355 = vmatprep.subr.bf16.mxu0 0
  %1356 = vmatpush1.bf16.msra.mxu0 0
  %1357 = vmatprep.subr.bf16.mxu0 0
  %1358 = vmatpush1.bf16.msra.mxu0 0
  %1359 = vmatprep.subr.bf16.mxu0 0
  %1360 = vmatpush1.bf16.msra.mxu0 0
  %1361 = vmatprep.subr.bf16.mxu0 0
  %1362 = vmatpush1.bf16.msra.mxu0 %v1346
  %1363 = vmatprep.subr.bf16.mxu0 0
  %1364 = vmatpush1.bf16.msra.mxu0 %v1345
  %1365 = vmatprep.subr.bf16.mxu0 0
  %1366 = vmatpush2.bf16.msra.mxu0 0
  %1367 = vmatprep.subr.bf16.mxu0 0
  %1368 = vmatpush2.bf16.msra.mxu0 0
  %1369 = vmatprep.subr.bf16.mxu0 0
  %1370 = vmatpush2.bf16.msra.mxu0 0
  %1371 = vmatprep.subr.bf16.mxu0 0
  %1372 = vmatpush2.bf16.msra.mxu0 0
  %1373 = vmatprep.subr.bf16.mxu0 0
  %1374 = vmatpush2.bf16.msra.mxu0 0
  %1375 = vmatprep.subr.bf16.mxu0 0
  %1376 = vmatpush2.bf16.msra.mxu0 0
  %1377 = vmatprep.subr.bf16.mxu0 0
  %1378 = vmatpush2.bf16.msra.mxu0 0
  %1379 = vmatprep.subr.bf16.mxu0 0
  %1380 = vmatpush2.bf16.msra.mxu0 0
  %1381 = vmatprep.mubr.bf16.mxu0 0
  %1382 = vmatmul.mubr.bf16.gmra.mxu0 %v64
  %v1383 = vpop.f32.mrf.mxu0
  %v1384 = vadd.f32 0.0, %v1383
  %v1385 = vpop.f32.mrf.mxu0
  %v1386 = vpop.f32.mrf.mxu0
  %v1387 = vpop.f32.mrf.mxu0
  %1388 = vdwg.mxu0
  %v1389 = vadd.f32 %v1323, %v1384
  %v1390 = vtanh.pop %v1389
  %v1391 = vmul.f32 %v1390, %v47
  %v1392 = vadd.f32 %v1391, %v48
  %v1393 = vmul.f32 %v1392, 0.0
  %1395 = vrot.lane.b32.xlu0 %v1392, 64
  %v1396 = vpop.permute.xlu0 %1395
  %v1398 = vmul.f32 %v1392, %v1396
  %1400 = vrot.lane.b32.xlu0 %v1398, 32
  %v1401 = vpop.permute.xlu0 %1400
  %v1403 = vadd.f32 %v1393, %v1401
  %v1404 = vtanh.pop %v1403
  %1406 = vrot.lane.b32.xlu0 %v1404, 64
  %v1407 = vpop.permute.xlu0 %1406
  %v1409 = vmul.f32 %v1392, %v1407
  %v1410 = vpack.c.bf16 %v1409, %v1409
  %1412 = vrot.lane.b32.xlu0 %v1410, 32
  %v1413 = vpop.permute.xlu0 %1412
  %v1415 = vsel %vm62, %v1413, 0
  %1417 = vmatprep.subr.bf16.mxu0 0
  %1418 = vmatpush1.bf16.msra.mxu0 0
  %1419 = vmatprep.subr.bf16.mxu0 0
  %1420 = vmatpush1.bf16.msra.mxu0 0
  %1421 = vmatprep.subr.bf16.mxu0 0
  %1422 = vmatpush1.bf16.msra.mxu0 0
  %1423 = vmatprep.subr.bf16.mxu0 0
  %1424 = vmatpush1.bf16.msra.mxu0 0
  %1425 = vmatprep.subr.bf16.mxu0 0
  %1426 = vmatpush1.bf16.msra.mxu0 0
  %1427 = vmatprep.subr.bf16.mxu0 0
  %1428 = vmatpush1.bf16.msra.mxu0 0
  %1429 = vmatprep.subr.bf16.mxu0 0
  %1430 = vmatpush1.bf16.msra.mxu0 %v1346
  %1431 = vmatprep.subr.bf16.mxu0 0
  %1432 = vmatpush1.bf16.msra.mxu0 %v1345
  %1433 = vmatprep.subr.bf16.mxu0 0
  %1434 = vmatpush2.bf16.msra.mxu0 0
  %1435 = vmatprep.subr.bf16.mxu0 0
  %1436 = vmatpush2.bf16.msra.mxu0 0
  %1437 = vmatprep.subr.bf16.mxu0 0
  %1438 = vmatpush2.bf16.msra.mxu0 0
  %1439 = vmatprep.subr.bf16.mxu0 0
  %1440 = vmatpush2.bf16.msra.mxu0 0
  %1441 = vmatprep.subr.bf16.mxu0 0
  %1442 = vmatpush2.bf16.msra.mxu0 0
  %1443 = vmatprep.subr.bf16.mxu0 0
  %1444 = vmatpush2.bf16.msra.mxu0 0
  %1445 = vmatprep.subr.bf16.mxu0 0
  %1446 = vmatpush2.bf16.msra.mxu0 0
  %1447 = vmatprep.subr.bf16.mxu0 0
  %1448 = vmatpush2.bf16.msra.mxu0 0
  %1449 = vmatprep.mubr.bf16.mxu0 0
  %1450 = vmatmul.mubr.bf16.gmra.mxu0 %v1415
  %v1451 = vpop.f32.mrf.mxu0
  %v1452 = vadd.f32 0.0, %v1451
  %v1453 = vpop.f32.mrf.mxu0
  %v1454 = vpop.f32.mrf.mxu0
  %v1455 = vpop.f32.mrf.mxu0
  %1456 = vdwg.mxu0
  %v1458 = vrot.slane %v1452, 6
  %v1460 = vadd.f32 %v1323, %v1458
  %v1461 = vtanh.pop %v1460
  %v1462 = vmul.f32 %v1461, %v47
  %v1463 = vadd.f32 %v1462, %v48
  %v1465 = vrot.slane %v1403, 6
  %v1467 = vmul.f32 %v1463, %v1465
  %1469 = vrot.lane.b32.xlu0 %v1463, 64
  %v1470 = vpop.permute.xlu0 %1469
  %v1472 = vmul.f32 %v1463, %v1470
  %1474 = vrot.lane.b32.xlu0 %v1472, 32
  %v1475 = vpop.permute.xlu0 %1474
  %v1477 = vadd.f32 %v1467, %v1475
  %v1478 = vtanh.pop %v1477
  %1480 = vrot.lane.b32.xlu0 %v1478, 64
  %v1481 = vpop.permute.xlu0 %1480
  %v1483 = vmul.f32 %v1463, %v1481
  %v1484 = vpack.c.bf16 %v1483, %v1483
  %v1486 = vrot.slane %v1484, 1
  %1487 = vrot.lane.b32.xlu0 %v1486, 32
  %v1488 = vpop.permute.xlu0 %1487
  %v1490 = vsel %vm62, %v1488, 0
  %1492 = vmatprep.subr.bf16.mxu0 0
  %1493 = vmatpush1.bf16.msra.mxu0 0
  %1494 = vmatprep.subr.bf16.mxu0 0
  %1495 = vmatpush1.bf16.msra.mxu0 0
  %1496 = vmatprep.subr.bf16.mxu0 0
  %1497 = vmatpush1.bf16.msra.mxu0 0
  %1498 = vmatprep.subr.bf16.mxu0 0
  %1499 = vmatpush1.bf16.msra.mxu0 0
  %1500 = vmatprep.subr.bf16.mxu0 0
  %1501 = vmatpush1.bf16.msra.mxu0 0
  %1502 = vmatprep.subr.bf16.mxu0 0
  %1503 = vmatpush1.bf16.msra.mxu0 0
  %1504 = vmatprep.subr.bf16.mxu0 0
  %1505 = vmatpush1.bf16.msra.mxu0 %v1346
  %1506 = vmatprep.subr.bf16.mxu0 0
  %1507 = vmatpush1.bf16.msra.mxu0 %v1345
  %1508 = vmatprep.subr.bf16.mxu0 0
  %1509 = vmatpush2.bf16.msra.mxu0 0
  %1510 = vmatprep.subr.bf16.mxu0 0
  %1511 = vmatpush2.bf16.msra.mxu0 0
  %1512 = vmatprep.subr.bf16.mxu0 0
  %1513 = vmatpush2.bf16.msra.mxu0 0
  %1514 = vmatprep.subr.bf16.mxu0 0
  %1515 = vmatpush2.bf16.msra.mxu0 0
  %1516 = vmatprep.subr.bf16.mxu0 0
  %1517 = vmatpush2.bf16.msra.mxu0 0
  %1518 = vmatprep.subr.bf16.mxu0 0
  %1519 = vmatpush2.bf16.msra.mxu0 0
  %1520 = vmatprep.subr.bf16.mxu0 0
  %1521 = vmatpush2.bf16.msra.mxu0 0
  %1522 = vmatprep.subr.bf16.mxu0 0
  %1523 = vmatpush2.bf16.msra.mxu0 0
  %1524 = vmatprep.mubr.bf16.mxu0 0
  %1525 = vmatmul.mubr.bf16.gmra.mxu0 %v1490
  %v1526 = vpop.f32.mrf.mxu0
  %v1527 = vadd.f32 0.0, %v1526
  %v1528 = vpop.f32.mrf.mxu0
  %v1529 = vpop.f32.mrf.mxu0
  %v1530 = vpop.f32.mrf.mxu0
  %1531 = vdwg.mxu0
  %v1533 = vrot.slane %v1527, 4
  %v1535 = vadd.f32 %v1323, %v1533
  %v1536 = vtanh.pop %v1535
  %v1537 = vmul.f32 %v1536, %v47
  %v1538 = vadd.f32 %v1537, %v48
  %v1540 = vrot.slane %v1477, 6
  %v1542 = vmul.f32 %v1538, %v1540
  %1544 = vrot.lane.b32.xlu0 %v1538, 64
  %v1545 = vpop.permute.xlu0 %1544
  %v1547 = vmul.f32 %v1538, %v1545
  %1549 = vrot.lane.b32.xlu0 %v1547, 32
  %v1550 = vpop.permute.xlu0 %1549
  %v1552 = vadd.f32 %v1542, %v1550
  %v1553 = vtanh.pop %v1552
  %1555 = vrot.lane.b32.xlu0 %v1553, 64
  %v1556 = vpop.permute.xlu0 %1555
  %v1558 = vmul.f32 %v1538, %v1556
  %v1559 = vpack.c.bf16 %v1558, %v1558
  %v1561 = vrot.slane %v1559, 2
  %1562 = vrot.lane.b32.xlu0 %v1561, 32
  %v1563 = vpop.permute.xlu0 %1562
  %v1565 = vsel %vm62, %v1563, 0
  %1567 = vmatprep.subr.bf16.mxu0 0
  %1568 = vmatpush1.bf16.msra.mxu0 0
  %1569 = vmatprep.subr.bf16.mxu0 0
  %1570 = vmatpush1.bf16.msra.mxu0 0
  %1571 = vmatprep.subr.bf16.mxu0 0
  %1572 = vmatpush1.bf16.msra.mxu0 0
  %1573 = vmatprep.subr.bf16.mxu0 0
  %1574 = vmatpush1.bf16.msra.mxu0 0
  %1575 = vmatprep.subr.bf16.mxu0 0
  %1576 = vmatpush1.bf16.msra.mxu0 0
  %1577 = vmatprep.subr.bf16.mxu0 0
  %1578 = vmatpush1.bf16.msra.mxu0 0
  %1579 = vmatprep.subr.bf16.mxu0 0
  %1580 = vmatpush1.bf16.msra.mxu0 %v1346
  %1581 = vmatprep.subr.bf16.mxu0 0
  %1582 = vmatpush1.bf16.msra.mxu0 %v1345
  %1583 = vmatprep.subr.bf16.mxu0 0
  %1584 = vmatpush2.bf16.msra.mxu0 0
  %1585 = vmatprep.subr.bf16.mxu0 0
  %1586 = vmatpush2.bf16.msra.mxu0 0
  %1587 = vmatprep.subr.bf16.mxu0 0
  %1588 = vmatpush2.bf16.msra.mxu0 0
  %1589 = vmatprep.subr.bf16.mxu0 0
  %1590 = vmatpush2.bf16.msra.mxu0 0
  %1591 = vmatprep.subr.bf16.mxu0 0
  %1592 = vmatpush2.bf16.msra.mxu0 0
  %1593 = vmatprep.subr.bf16.mxu0 0
  %1594 = vmatpush2.bf16.msra.mxu0 0
  %1595 = vmatprep.subr.bf16.mxu0 0
  %1596 = vmatpush2.bf16.msra.mxu0 0
  %1597 = vmatprep.subr.bf16.mxu0 0
  %1598 = vmatpush2.bf16.msra.mxu0 0
  %1599 = vmatprep.mubr.bf16.mxu0 0
  %1600 = vmatmul.mubr.bf16.gmra.mxu0 %v1565
  %v1601 = vpop.f32.mrf.mxu0
  %v1602 = vadd.f32 0.0, %v1601
  %v1603 = vpop.f32.mrf.mxu0
  %v1604 = vpop.f32.mrf.mxu0
  %v1605 = vpop.f32.mrf.mxu0
  %1606 = vdwg.mxu0
  %v1608 = vrot.slane %v1602, 2
  %v1610 = vadd.f32 %v1323, %v1608
  %v1611 = vtanh.pop %v1610
  %v1612 = vmul.f32 %v1611, %v47
  %v1613 = vadd.f32 %v1612, %v48
  %v1615 = vrot.slane %v1552, 6
  %v1617 = vmul.f32 %v1613, %v1615
  %1619 = vrot.lane.b32.xlu0 %v1613, 64
  %v1620 = vpop.permute.xlu0 %1619
  %v1622 = vmul.f32 %v1613, %v1620
  %1624 = vrot.lane.b32.xlu0 %v1622, 32
  %v1625 = vpop.permute.xlu0 %1624
  %v1627 = vadd.f32 %v1617, %v1625
  %v1628 = vtanh.pop %v1627
  %1630 = vrot.lane.b32.xlu0 %v1628, 64
  %v1631 = vpop.permute.xlu0 %1630
  %v1633 = vmul.f32 %v1613, %v1631
  %v1634 = vpack.c.bf16 %v1633, %v1633
  %v1636 = vrot.slane %v1634, 3
  %1637 = vrot.lane.b32.xlu0 %v1636, 32
  %v1638 = vpop.permute.xlu0 %1637
  %v1640 = vsel %vm62, %v1638, 0
  %1642 = vmatprep.subr.bf16.mxu0 0
  %1643 = vmatpush1.bf16.msra.mxu0 0
  %1644 = vmatprep.subr.bf16.mxu0 0
  %1645 = vmatpush1.bf16.msra.mxu0 0
  %1646 = vmatprep.subr.bf16.mxu0 0
  %1647 = vmatpush1.bf16.msra.mxu0 0
  %1648 = vmatprep.subr.bf16.mxu0 0
  %1649 = vmatpush1.bf16.msra.mxu0 0
  %1650 = vmatprep.subr.bf16.mxu0 0
  %1651 = vmatpush1.bf16.msra.mxu0 0
  %1652 = vmatprep.subr.bf16.mxu0 0
  %1653 = vmatpush1.bf16.msra.mxu0 0
  %1654 = vmatprep.subr.bf16.mxu0 0
  %1655 = vmatpush1.bf16.msra.mxu0 %v1346
  %1656 = vmatprep.subr.bf16.mxu0 0
  %1657 = vmatpush1.bf16.msra.mxu0 %v1345
  %1658 = vmatprep.subr.bf16.mxu0 0
  %1659 = vmatpush2.bf16.msra.mxu0 0
  %1660 = vmatprep.subr.bf16.mxu0 0
  %1661 = vmatpush2.bf16.msra.mxu0 0
  %1662 = vmatprep.subr.bf16.mxu0 0
  %1663 = vmatpush2.bf16.msra.mxu0 0
  %1664 = vmatprep.subr.bf16.mxu0 0
  %1665 = vmatpush2.bf16.msra.mxu0 0
  %1666 = vmatprep.subr.bf16.mxu0 0
  %1667 = vmatpush2.bf16.msra.mxu0 0
  %1668 = vmatprep.subr.bf16.mxu0 0
  %1669 = vmatpush2.bf16.msra.mxu0 0
  %1670 = vmatprep.subr.bf16.mxu0 0
  %1671 = vmatpush2.bf16.msra.mxu0 0
  %1672 = vmatprep.subr.bf16.mxu0 0
  %1673 = vmatpush2.bf16.msra.mxu0 0
  %1674 = vmatprep.mubr.bf16.mxu0 0
  %1675 = vmatmul.mubr.bf16.gmra.mxu0 %v1640
  %v1676 = vpop.f32.mrf.mxu0
  %v1677 = vadd.f32 0.0, %v1676
  %v1678 = vpop.f32.mrf.mxu0
  %v1679 = vpop.f32.mrf.mxu0
  %v1680 = vpop.f32.mrf.mxu0
  %1681 = vdwg.mxu0
  %v1682 = vadd.f32 %v1326, %v1677
  %v1683 = vtanh.pop %v1682
  %v1684 = vmul.f32 %v1683, %v47
  %v1685 = vadd.f32 %v1684, %v48
  %v1687 = vrot.slane %v1627, 6
  %v1689 = vmul.f32 %v1685, %v1687
  %1691 = vrot.lane.b32.xlu0 %v1685, 64
  %v1692 = vpop.permute.xlu0 %1691
  %v1694 = vmul.f32 %v1685, %v1692
  %1696 = vrot.lane.b32.xlu0 %v1694, 32
  %v1697 = vpop.permute.xlu0 %1696
  %v1699 = vadd.f32 %v1689, %v1697
  %v1700 = vtanh.pop %v1699
  %1702 = vrot.lane.b32.xlu0 %v1700, 64
  %v1703 = vpop.permute.xlu0 %1702
  %v1705 = vmul.f32 %v1685, %v1703
  %v1706 = vpack.c.bf16 %v1705, %v1705
  %1708 = vrot.lane.b32.xlu0 %v1706, 32
  %v1709 = vpop.permute.xlu0 %1708
  %v1711 = vsel %vm62, %v1709, 0
  %1713 = vmatprep.subr.bf16.mxu0 0
  %1714 = vmatpush1.bf16.msra.mxu0 0
  %1715 = vmatprep.subr.bf16.mxu0 0
  %1716 = vmatpush1.bf16.msra.mxu0 0
  %1717 = vmatprep.subr.bf16.mxu0 0
  %1718 = vmatpush1.bf16.msra.mxu0 0
  %1719 = vmatprep.subr.bf16.mxu0 0
  %1720 = vmatpush1.bf16.msra.mxu0 0
  %1721 = vmatprep.subr.bf16.mxu0 0
  %1722 = vmatpush1.bf16.msra.mxu0 0
  %1723 = vmatprep.subr.bf16.mxu0 0
  %1724 = vmatpush1.bf16.msra.mxu0 0
  %1725 = vmatprep.subr.bf16.mxu0 0
  %1726 = vmatpush1.bf16.msra.mxu0 %v1346
  %1727 = vmatprep.subr.bf16.mxu0 0
  %1728 = vmatpush1.bf16.msra.mxu0 %v1345
  %1729 = vmatprep.subr.bf16.mxu0 0
  %1730 = vmatpush2.bf16.msra.mxu0 0
  %1731 = vmatprep.subr.bf16.mxu0 0
  %1732 = vmatpush2.bf16.msra.mxu0 0
  %1733 = vmatprep.subr.bf16.mxu0 0
  %1734 = vmatpush2.bf16.msra.mxu0 0
  %1735 = vmatprep.subr.bf16.mxu0 0
  %1736 = vmatpush2.bf16.msra.mxu0 0
  %1737 = vmatprep.subr.bf16.mxu0 0
  %1738 = vmatpush2.bf16.msra.mxu0 0
  %1739 = vmatprep.subr.bf16.mxu0 0
  %1740 = vmatpush2.bf16.msra.mxu0 0
  %1741 = vmatprep.subr.bf16.mxu0 0
  %1742 = vmatpush2.bf16.msra.mxu0 0
  %1743 = vmatprep.subr.bf16.mxu0 0
  %1744 = vmatpush2.bf16.msra.mxu0 0
  %1745 = vmatprep.mubr.bf16.mxu0 0
  %1746 = vmatmul.mubr.bf16.gmra.mxu0 %v1711
  %v1747 = vpop.f32.mrf.mxu0
  %v1748 = vadd.f32 0.0, %v1747
  %v1749 = vpop.f32.mrf.mxu0
  %v1750 = vpop.f32.mrf.mxu0
  %v1751 = vpop.f32.mrf.mxu0
  %1752 = vdwg.mxu0
  %v1754 = vrot.slane %v1748, 6
  %v1756 = vadd.f32 %v1326, %v1754
  %v1757 = vtanh.pop %v1756
  %v1758 = vmul.f32 %v1757, %v47
  %v1759 = vadd.f32 %v1758, %v48
  %v1761 = vrot.slane %v1699, 6
  %v1763 = vmul.f32 %v1759, %v1761
  %1765 = vrot.lane.b32.xlu0 %v1759, 64
  %v1766 = vpop.permute.xlu0 %1765
  %v1768 = vmul.f32 %v1759, %v1766
  %1770 = vrot.lane.b32.xlu0 %v1768, 32
  %v1771 = vpop.permute.xlu0 %1770
  %v1773 = vadd.f32 %v1763, %v1771
  %v1774 = vtanh.pop %v1773
  %1776 = vrot.lane.b32.xlu0 %v1774, 64
  %v1777 = vpop.permute.xlu0 %1776
  %v1779 = vmul.f32 %v1759, %v1777
  %v1780 = vpack.c.bf16 %v1779, %v1779
  %v1782 = vrot.slane %v1780, 1
  %1783 = vrot.lane.b32.xlu0 %v1782, 32
  %v1784 = vpop.permute.xlu0 %1783
  %v1786 = vsel %vm62, %v1784, 0
  %1788 = vmatprep.subr.bf16.mxu0 0
  %1789 = vmatpush1.bf16.msra.mxu0 0
  %1790 = vmatprep.subr.bf16.mxu0 0
  %1791 = vmatpush1.bf16.msra.mxu0 0
  %1792 = vmatprep.subr.bf16.mxu0 0
  %1793 = vmatpush1.bf16.msra.mxu0 0
  %1794 = vmatprep.subr.bf16.mxu0 0
  %1795 = vmatpush1.bf16.msra.mxu0 0
  %1796 = vmatprep.subr.bf16.mxu0 0
  %1797 = vmatpush1.bf16.msra.mxu0 0
  %1798 = vmatprep.subr.bf16.mxu0 0
  %1799 = vmatpush1.bf16.msra.mxu0 0
  %1800 = vmatprep.subr.bf16.mxu0 0
  %1801 = vmatpush1.bf16.msra.mxu0 %v1346
  %1802 = vmatprep.subr.bf16.mxu0 0
  %1803 = vmatpush1.bf16.msra.mxu0 %v1345
  %1804 = vmatprep.subr.bf16.mxu0 0
  %1805 = vmatpush2.bf16.msra.mxu0 0
  %1806 = vmatprep.subr.bf16.mxu0 0
  %1807 = vmatpush2.bf16.msra.mxu0 0
  %1808 = vmatprep.subr.bf16.mxu0 0
  %1809 = vmatpush2.bf16.msra.mxu0 0
  %1810 = vmatprep.subr.bf16.mxu0 0
  %1811 = vmatpush2.bf16.msra.mxu0 0
  %1812 = vmatprep.subr.bf16.mxu0 0
  %1813 = vmatpush2.bf16.msra.mxu0 0
  %1814 = vmatprep.subr.bf16.mxu0 0
  %1815 = vmatpush2.bf16.msra.mxu0 0
  %1816 = vmatprep.subr.bf16.mxu0 0
  %1817 = vmatpush2.bf16.msra.mxu0 0
  %1818 = vmatprep.subr.bf16.mxu0 0
  %1819 = vmatpush2.bf16.msra.mxu0 0
  %1820 = vmatprep.mubr.bf16.mxu0 0
  %1821 = vmatmul.mubr.bf16.gmra.mxu0 %v1786
  %v1822 = vpop.f32.mrf.mxu0
  %v1823 = vadd.f32 0.0, %v1822
  %v1824 = vpop.f32.mrf.mxu0
  %v1825 = vpop.f32.mrf.mxu0
  %v1826 = vpop.f32.mrf.mxu0
  %1827 = vdwg.mxu0
  %v1829 = vrot.slane %v1823, 4
  %v1831 = vadd.f32 %v1326, %v1829
  %v1832 = vtanh.pop %v1831
  %v1833 = vmul.f32 %v1832, %v47
  %v1834 = vadd.f32 %v1833, %v48
  %v1836 = vrot.slane %v1773, 6
  %v1838 = vmul.f32 %v1834, %v1836
  %1840 = vrot.lane.b32.xlu0 %v1834, 64
  %v1841 = vpop.permute.xlu0 %1840
  %v1843 = vmul.f32 %v1834, %v1841
  %1845 = vrot.lane.b32.xlu0 %v1843, 32
  %v1846 = vpop.permute.xlu0 %1845
  %v1848 = vadd.f32 %v1838, %v1846
  %v1849 = vtanh.pop %v1848
  %1851 = vrot.lane.b32.xlu0 %v1849, 64
  %v1852 = vpop.permute.xlu0 %1851
  %v1854 = vmul.f32 %v1834, %v1852
  %v1855 = vpack.c.bf16 %v1854, %v1854
  %v1857 = vrot.slane %v1855, 2
  %1858 = vrot.lane.b32.xlu0 %v1857, 32
  %v1859 = vpop.permute.xlu0 %1858
  %v1861 = vsel %vm62, %v1859, 0
  %1863 = vmatprep.subr.bf16.mxu0 0
  %1864 = vmatpush1.bf16.msra.mxu0 0
  %1865 = vmatprep.subr.bf16.mxu0 0
  %1866 = vmatpush1.bf16.msra.mxu0 0
  %1867 = vmatprep.subr.bf16.mxu0 0
  %1868 = vmatpush1.bf16.msra.mxu0 0
  %1869 = vmatprep.subr.bf16.mxu0 0
  %1870 = vmatpush1.bf16.msra.mxu0 0
  %1871 = vmatprep.subr.bf16.mxu0 0
  %1872 = vmatpush1.bf16.msra.mxu0 0
  %1873 = vmatprep.subr.bf16.mxu0 0
  %1874 = vmatpush1.bf16.msra.mxu0 0
  %1875 = vmatprep.subr.bf16.mxu0 0
  %1876 = vmatpush1.bf16.msra.mxu0 %v1346
  %1877 = vmatprep.subr.bf16.mxu0 0
  %1878 = vmatpush1.bf16.msra.mxu0 %v1345
  %1879 = vmatprep.subr.bf16.mxu0 0
  %1880 = vmatpush2.bf16.msra.mxu0 0
  %1881 = vmatprep.subr.bf16.mxu0 0
  %1882 = vmatpush2.bf16.msra.mxu0 0
  %1883 = vmatprep.subr.bf16.mxu0 0
  %1884 = vmatpush2.bf16.msra.mxu0 0
  %1885 = vmatprep.subr.bf16.mxu0 0
  %1886 = vmatpush2.bf16.msra.mxu0 0
  %1887 = vmatprep.subr.bf16.mxu0 0
  %1888 = vmatpush2.bf16.msra.mxu0 0
  %1889 = vmatprep.subr.bf16.mxu0 0
  %1890 = vmatpush2.bf16.msra.mxu0 0
  %1891 = vmatprep.subr.bf16.mxu0 0
  %1892 = vmatpush2.bf16.msra.mxu0 0
  %1893 = vmatprep.subr.bf16.mxu0 0
  %1894 = vmatpush2.bf16.msra.mxu0 0
  %1895 = vmatprep.mubr.bf16.mxu0 0
  %1896 = vmatmul.mubr.bf16.gmra.mxu0 %v1861
  %v1897 = vpop.f32.mrf.mxu0
  %v1898 = vadd.f32 0.0, %v1897
  %v1899 = vpop.f32.mrf.mxu0
  %v1900 = vpop.f32.mrf.mxu0
  %v1901 = vpop.f32.mrf.mxu0
  %1902 = vdwg.mxu0
  %v1904 = vrot.slane %v1898, 2
  %v1906 = vadd.f32 %v1326, %v1904
  %v1907 = vtanh.pop %v1906
  %v1908 = vmul.f32 %v1907, %v47
  %v1909 = vadd.f32 %v1908, %v48
  %v1911 = vrot.slane %v1848, 6
  %v1913 = vmul.f32 %v1909, %v1911
  %1915 = vrot.lane.b32.xlu0 %v1909, 64
  %v1916 = vpop.permute.xlu0 %1915
  %v1918 = vmul.f32 %v1909, %v1916
  %1920 = vrot.lane.b32.xlu0 %v1918, 32
  %v1921 = vpop.permute.xlu0 %1920
  %v1923 = vadd.f32 %v1913, %v1921
  %v1924 = vtanh.pop %v1923
  %1926 = vrot.lane.b32.xlu0 %v1924, 64
  %v1927 = vpop.permute.xlu0 %1926
  %v1929 = vmul.f32 %v1909, %v1927
  %v1930 = vpack.c.bf16 %v1929, %v1929
  %v1932 = vrot.slane %v1930, 3
  %1933 = vrot.lane.b32.xlu0 %v1932, 32
  %v1934 = vpop.permute.xlu0 %1933
  %v1936 = vsel %vm62, %v1934, 0
  %1938 = vmatprep.subr.bf16.mxu0 0
  %1939 = vmatpush1.bf16.msra.mxu0 0
  %1940 = vmatprep.subr.bf16.mxu0 0
  %1941 = vmatpush1.bf16.msra.mxu0 0
  %1942 = vmatprep.subr.bf16.mxu0 0
  %1943 = vmatpush1.bf16.msra.mxu0 0
  %1944 = vmatprep.subr.bf16.mxu0 0
  %1945 = vmatpush1.bf16.msra.mxu0 0
  %1946 = vmatprep.subr.bf16.mxu0 0
  %1947 = vmatpush1.bf16.msra.mxu0 0
  %1948 = vmatprep.subr.bf16.mxu0 0
  %1949 = vmatpush1.bf16.msra.mxu0 0
  %1950 = vmatprep.subr.bf16.mxu0 0
  %1951 = vmatpush1.bf16.msra.mxu0 %v1346
  %1952 = vmatprep.subr.bf16.mxu0 0
  %1953 = vmatpush1.bf16.msra.mxu0 %v1345
  %1954 = vmatprep.subr.bf16.mxu0 0
  %1955 = vmatpush2.bf16.msra.mxu0 0
  %1956 = vmatprep.subr.bf16.mxu0 0
  %1957 = vmatpush2.bf16.msra.mxu0 0
  %1958 = vmatprep.subr.bf16.mxu0 0
  %1959 = vmatpush2.bf16.msra.mxu0 0
  %1960 = vmatprep.subr.bf16.mxu0 0
  %1961 = vmatpush2.bf16.msra.mxu0 0
  %1962 = vmatprep.subr.bf16.mxu0 0
  %1963 = vmatpush2.bf16.msra.mxu0 0
  %1964 = vmatprep.subr.bf16.mxu0 0
  %1965 = vmatpush2.bf16.msra.mxu0 0
  %1966 = vmatprep.subr.bf16.mxu0 0
  %1967 = vmatpush2.bf16.msra.mxu0 0
  %1968 = vmatprep.subr.bf16.mxu0 0
  %1969 = vmatpush2.bf16.msra.mxu0 0
  %1970 = vmatprep.mubr.bf16.mxu0 0
  %1971 = vmatmul.mubr.bf16.gmra.mxu0 %v1936
  %v1972 = vpop.f32.mrf.mxu0
  %v1973 = vadd.f32 0.0, %v1972
  %v1974 = vpop.f32.mrf.mxu0
  %v1975 = vpop.f32.mrf.mxu0
  %v1976 = vpop.f32.mrf.mxu0
  %1977 = vdwg.mxu0
  %v1978 = vadd.f32 %v1331, %v1973
  %v1979 = vtanh.pop %v1978
  %v1980 = vmul.f32 %v1979, %v47
  %v1981 = vadd.f32 %v1980, %v48
  %v1983 = vrot.slane %v1923, 6
  %v1985 = vmul.f32 %v1981, %v1983
  %1987 = vrot.lane.b32.xlu0 %v1981, 64
  %v1988 = vpop.permute.xlu0 %1987
  %v1990 = vmul.f32 %v1981, %v1988
  %1992 = vrot.lane.b32.xlu0 %v1990, 32
  %v1993 = vpop.permute.xlu0 %1992
  %v1995 = vadd.f32 %v1985, %v1993
  %v1996 = vtanh.pop %v1995
  %1998 = vrot.lane.b32.xlu0 %v1996, 64
  %v1999 = vpop.permute.xlu0 %1998
  %v2001 = vmul.f32 %v1981, %v1999
  %v2002 = vpack.c.bf16 %v2001, %v2001
  %2004 = vrot.lane.b32.xlu0 %v2002, 32
  %v2005 = vpop.permute.xlu0 %2004
  %v2007 = vsel %vm62, %v2005, 0
  %2009 = vmatprep.subr.bf16.mxu0 0
  %2010 = vmatpush1.bf16.msra.mxu0 0
  %2011 = vmatprep.subr.bf16.mxu0 0
  %2012 = vmatpush1.bf16.msra.mxu0 0
  %2013 = vmatprep.subr.bf16.mxu0 0
  %2014 = vmatpush1.bf16.msra.mxu0 0
  %2015 = vmatprep.subr.bf16.mxu0 0
  %2016 = vmatpush1.bf16.msra.mxu0 0
  %2017 = vmatprep.subr.bf16.mxu0 0
  %2018 = vmatpush1.bf16.msra.mxu0 0
  %2019 = vmatprep.subr.bf16.mxu0 0
  %2020 = vmatpush1.bf16.msra.mxu0 0
  %2021 = vmatprep.subr.bf16.mxu0 0
  %2022 = vmatpush1.bf16.msra.mxu0 %v1346
  %2023 = vmatprep.subr.bf16.mxu0 0
  %2024 = vmatpush1.bf16.msra.mxu0 %v1345
  %2025 = vmatprep.subr.bf16.mxu0 0
  %2026 = vmatpush2.bf16.msra.mxu0 0
  %2027 = vmatprep.subr.bf16.mxu0 0
  %2028 = vmatpush2.bf16.msra.mxu0 0
  %2029 = vmatprep.subr.bf16.mxu0 0
  %2030 = vmatpush2.bf16.msra.mxu0 0
  %2031 = vmatprep.subr.bf16.mxu0 0
  %2032 = vmatpush2.bf16.msra.mxu0 0
  %2033 = vmatprep.subr.bf16.mxu0 0
  %2034 = vmatpush2.bf16.msra.mxu0 0
  %2035 = vmatprep.subr.bf16.mxu0 0
  %2036 = vmatpush2.bf16.msra.mxu0 0
  %2037 = vmatprep.subr.bf16.mxu0 0
  %2038 = vmatpush2.bf16.msra.mxu0 0
  %2039 = vmatprep.subr.bf16.mxu0 0
  %2040 = vmatpush2.bf16.msra.mxu0 0
  %2041 = vmatprep.mubr.bf16.mxu0 0
  %2042 = vmatmul.mubr.bf16.gmra.mxu0 %v2007
  %v2043 = vpop.f32.mrf.mxu0
  %v2044 = vadd.f32 0.0, %v2043
  %v2045 = vpop.f32.mrf.mxu0
  %v2046 = vpop.f32.mrf.mxu0
  %v2047 = vpop.f32.mrf.mxu0
  %2048 = vdwg.mxu0
  %v2050 = vrot.slane %v2044, 6
  %v2052 = vadd.f32 %v1331, %v2050
  %v2053 = vtanh.pop %v2052
  %v2054 = vmul.f32 %v2053, %v47
  %v2055 = vadd.f32 %v2054, %v48
  %v2057 = vrot.slane %v1995, 6
  %v2059 = vmul.f32 %v2055, %v2057
  %2061 = vrot.lane.b32.xlu0 %v2055, 64
  %v2062 = vpop.permute.xlu0 %2061
  %v2064 = vmul.f32 %v2055, %v2062
  %2066 = vrot.lane.b32.xlu0 %v2064, 32
  %v2067 = vpop.permute.xlu0 %2066
  %v2069 = vadd.f32 %v2059, %v2067
  %v2070 = vtanh.pop %v2069
  %2072 = vrot.lane.b32.xlu0 %v2070, 64
  %v2073 = vpop.permute.xlu0 %2072
  %v2075 = vmul.f32 %v2055, %v2073
  %v2076 = vpack.c.bf16 %v2075, %v2075
  %v2078 = vrot.slane %v2076, 1
  %2079 = vrot.lane.b32.xlu0 %v2078, 32
  %v2080 = vpop.permute.xlu0 %2079
  %v2082 = vsel %vm62, %v2080, 0
  %2084 = vmatprep.subr.bf16.mxu0 0
  %2085 = vmatpush1.bf16.msra.mxu0 0
  %2086 = vmatprep.subr.bf16.mxu0 0
  %2087 = vmatpush1.bf16.msra.mxu0 0
  %2088 = vmatprep.subr.bf16.mxu0 0
  %2089 = vmatpush1.bf16.msra.mxu0 0
  %2090 = vmatprep.subr.bf16.mxu0 0
  %2091 = vmatpush1.bf16.msra.mxu0 0
  %2092 = vmatprep.subr.bf16.mxu0 0
  %2093 = vmatpush1.bf16.msra.mxu0 0
  %2094 = vmatprep.subr.bf16.mxu0 0
  %2095 = vmatpush1.bf16.msra.mxu0 0
  %2096 = vmatprep.subr.bf16.mxu0 0
  %2097 = vmatpush1.bf16.msra.mxu0 %v1346
  %2098 = vmatprep.subr.bf16.mxu0 0
  %2099 = vmatpush1.bf16.msra.mxu0 %v1345
  %2100 = vmatprep.subr.bf16.mxu0 0
  %2101 = vmatpush2.bf16.msra.mxu0 0
  %2102 = vmatprep.subr.bf16.mxu0 0
  %2103 = vmatpush2.bf16.msra.mxu0 0
  %2104 = vmatprep.subr.bf16.mxu0 0
  %2105 = vmatpush2.bf16.msra.mxu0 0
  %2106 = vmatprep.subr.bf16.mxu0 0
  %2107 = vmatpush2.bf16.msra.mxu0 0
  %2108 = vmatprep.subr.bf16.mxu0 0
  %2109 = vmatpush2.bf16.msra.mxu0 0
  %2110 = vmatprep.subr.bf16.mxu0 0
  %2111 = vmatpush2.bf16.msra.mxu0 0
  %2112 = vmatprep.subr.bf16.mxu0 0
  %2113 = vmatpush2.bf16.msra.mxu0 0
  %2114 = vmatprep.subr.bf16.mxu0 0
  %2115 = vmatpush2.bf16.msra.mxu0 0
  %2116 = vmatprep.mubr.bf16.mxu0 0
  %2117 = vmatmul.mubr.bf16.gmra.mxu0 %v2082
  %v2118 = vpop.f32.mrf.mxu0
  %v2119 = vadd.f32 0.0, %v2118
  %v2120 = vpop.f32.mrf.mxu0
  %v2121 = vpop.f32.mrf.mxu0
  %v2122 = vpop.f32.mrf.mxu0
  %2123 = vdwg.mxu0
  %v2125 = vrot.slane %v2119, 4
  %v2127 = vadd.f32 %v1331, %v2125
  %v2128 = vtanh.pop %v2127
  %v2129 = vmul.f32 %v2128, %v47
  %v2130 = vadd.f32 %v2129, %v48
  %v2132 = vrot.slane %v2069, 6
  %v2134 = vmul.f32 %v2130, %v2132
  %2136 = vrot.lane.b32.xlu0 %v2130, 64
  %v2137 = vpop.permute.xlu0 %2136
  %v2139 = vmul.f32 %v2130, %v2137
  %2141 = vrot.lane.b32.xlu0 %v2139, 32
  %v2142 = vpop.permute.xlu0 %2141
  %v2144 = vadd.f32 %v2134, %v2142
  %v2145 = vtanh.pop %v2144
  %2147 = vrot.lane.b32.xlu0 %v2145, 64
  %v2148 = vpop.permute.xlu0 %2147
  %v2150 = vmul.f32 %v2130, %v2148
  %v2151 = vpack.c.bf16 %v2150, %v2150
  %v2153 = vrot.slane %v2151, 2
  %2154 = vrot.lane.b32.xlu0 %v2153, 32
  %v2155 = vpop.permute.xlu0 %2154
  %v2157 = vsel %vm62, %v2155, 0
  %2159 = vmatprep.subr.bf16.mxu0 0
  %2160 = vmatpush1.bf16.msra.mxu0 0
  %2161 = vmatprep.subr.bf16.mxu0 0
  %2162 = vmatpush1.bf16.msra.mxu0 0
  %2163 = vmatprep.subr.bf16.mxu0 0
  %2164 = vmatpush1.bf16.msra.mxu0 0
  %2165 = vmatprep.subr.bf16.mxu0 0
  %2166 = vmatpush1.bf16.msra.mxu0 0
  %2167 = vmatprep.subr.bf16.mxu0 0
  %2168 = vmatpush1.bf16.msra.mxu0 0
  %2169 = vmatprep.subr.bf16.mxu0 0
  %2170 = vmatpush1.bf16.msra.mxu0 0
  %2171 = vmatprep.subr.bf16.mxu0 0
  %2172 = vmatpush1.bf16.msra.mxu0 %v1346
  %2173 = vmatprep.subr.bf16.mxu0 0
  %2174 = vmatpush1.bf16.msra.mxu0 %v1345
  %2175 = vmatprep.subr.bf16.mxu0 0
  %2176 = vmatpush2.bf16.msra.mxu0 0
  %2177 = vmatprep.subr.bf16.mxu0 0
  %2178 = vmatpush2.bf16.msra.mxu0 0
  %2179 = vmatprep.subr.bf16.mxu0 0
  %2180 = vmatpush2.bf16.msra.mxu0 0
  %2181 = vmatprep.subr.bf16.mxu0 0
  %2182 = vmatpush2.bf16.msra.mxu0 0
  %2183 = vmatprep.subr.bf16.mxu0 0
  %2184 = vmatpush2.bf16.msra.mxu0 0
  %2185 = vmatprep.subr.bf16.mxu0 0
  %2186 = vmatpush2.bf16.msra.mxu0 0
  %2187 = vmatprep.subr.bf16.mxu0 0
  %2188 = vmatpush2.bf16.msra.mxu0 0
  %2189 = vmatprep.subr.bf16.mxu0 0
  %2190 = vmatpush2.bf16.msra.mxu0 0
  %2191 = vmatprep.mubr.bf16.mxu0 0
  %2192 = vmatmul.mubr.bf16.gmra.mxu0 %v2157
  %v2193 = vpop.f32.mrf.mxu0
  %v2194 = vadd.f32 0.0, %v2193
  %v2195 = vpop.f32.mrf.mxu0
  %v2196 = vpop.f32.mrf.mxu0
  %v2197 = vpop.f32.mrf.mxu0
  %2198 = vdwg.mxu0
  %v2200 = vrot.slane %v2194, 2
  %v2202 = vadd.f32 %v1331, %v2200
  %v2203 = vtanh.pop %v2202
  %v2204 = vmul.f32 %v2203, %v47
  %v2205 = vadd.f32 %v2204, %v48
  %v2207 = vrot.slane %v2144, 6
  %v2209 = vmul.f32 %v2205, %v2207
  %2211 = vrot.lane.b32.xlu0 %v2205, 64
  %v2212 = vpop.permute.xlu0 %2211
  %v2214 = vmul.f32 %v2205, %v2212
  %2216 = vrot.lane.b32.xlu0 %v2214, 32
  %v2217 = vpop.permute.xlu0 %2216
  %v2219 = vadd.f32 %v2209, %v2217
  %v2220 = vtanh.pop %v2219
  %2222 = vrot.lane.b32.xlu0 %v2220, 64
  %v2223 = vpop.permute.xlu0 %2222
  %v2225 = vmul.f32 %v2205, %v2223
  %v2226 = vpack.c.bf16 %v2225, %v2225
  %v2228 = vrot.slane %v2226, 3
  %2229 = vrot.lane.b32.xlu0 %v2228, 32
  %v2230 = vpop.permute.xlu0 %2229
  %v2232 = vsel %vm62, %v2230, 0
  %2234 = vmatprep.subr.bf16.mxu0 0
  %2235 = vmatpush1.bf16.msra.mxu0 0
  %2236 = vmatprep.subr.bf16.mxu0 0
  %2237 = vmatpush1.bf16.msra.mxu0 0
  %2238 = vmatprep.subr.bf16.mxu0 0
  %2239 = vmatpush1.bf16.msra.mxu0 0
  %2240 = vmatprep.subr.bf16.mxu0 0
  %2241 = vmatpush1.bf16.msra.mxu0 0
  %2242 = vmatprep.subr.bf16.mxu0 0
  %2243 = vmatpush1.bf16.msra.mxu0 0
  %2244 = vmatprep.subr.bf16.mxu0 0
  %2245 = vmatpush1.bf16.msra.mxu0 0
  %2246 = vmatprep.subr.bf16.mxu0 0
  %2247 = vmatpush1.bf16.msra.mxu0 %v1346
  %2248 = vmatprep.subr.bf16.mxu0 0
  %2249 = vmatpush1.bf16.msra.mxu0 %v1345
  %2250 = vmatprep.subr.bf16.mxu0 0
  %2251 = vmatpush2.bf16.msra.mxu0 0
  %2252 = vmatprep.subr.bf16.mxu0 0
  %2253 = vmatpush2.bf16.msra.mxu0 0
  %2254 = vmatprep.subr.bf16.mxu0 0
  %2255 = vmatpush2.bf16.msra.mxu0 0
  %2256 = vmatprep.subr.bf16.mxu0 0
  %2257 = vmatpush2.bf16.msra.mxu0 0
  %2258 = vmatprep.subr.bf16.mxu0 0
  %2259 = vmatpush2.bf16.msra.mxu0 0
  %2260 = vmatprep.subr.bf16.mxu0 0
  %2261 = vmatpush2.bf16.msra.mxu0 0
  %2262 = vmatprep.subr.bf16.mxu0 0
  %2263 = vmatpush2.bf16.msra.mxu0 0
  %2264 = vmatprep.subr.bf16.mxu0 0
  %2265 = vmatpush2.bf16.msra.mxu0 0
  %2266 = vmatprep.mubr.bf16.mxu0 0
  %2267 = vmatmul.mubr.bf16.gmra.mxu0 %v2232
  %v2268 = vpop.f32.mrf.mxu0
  %v2269 = vadd.f32 0.0, %v2268
  %v2270 = vpop.f32.mrf.mxu0
  %v2271 = vpop.f32.mrf.mxu0
  %v2272 = vpop.f32.mrf.mxu0
  %2273 = vdwg.mxu0
  %v2274 = vadd.f32 %v1334, %v2269
  %v2275 = vtanh.pop %v2274
  %v2276 = vmul.f32 %v2275, %v47
  %v2277 = vadd.f32 %v2276, %v48
  %v2279 = vrot.slane %v2219, 6
  %v2281 = vmul.f32 %v2277, %v2279
  %2283 = vrot.lane.b32.xlu0 %v2277, 64
  %v2284 = vpop.permute.xlu0 %2283
  %v2286 = vmul.f32 %v2277, %v2284
  %2288 = vrot.lane.b32.xlu0 %v2286, 32
  %v2289 = vpop.permute.xlu0 %2288
  %v2291 = vadd.f32 %v2281, %v2289
  %v2292 = vtanh.pop %v2291
  %2294 = vrot.lane.b32.xlu0 %v2292, 64
  %v2295 = vpop.permute.xlu0 %2294
  %v2297 = vmul.f32 %v2277, %v2295
  %v2298 = vpack.c.bf16 %v2297, %v2297
  %2300 = vrot.lane.b32.xlu0 %v2298, 32
  %v2301 = vpop.permute.xlu0 %2300
  %v2303 = vsel %vm62, %v2301, 0
  %2305 = vmatprep.subr.bf16.mxu0 0
  %2306 = vmatpush1.bf16.msra.mxu0 0
  %2307 = vmatprep.subr.bf16.mxu0 0
  %2308 = vmatpush1.bf16.msra.mxu0 0
  %2309 = vmatprep.subr.bf16.mxu0 0
  %2310 = vmatpush1.bf16.msra.mxu0 0
  %2311 = vmatprep.subr.bf16.mxu0 0
  %2312 = vmatpush1.bf16.msra.mxu0 0
  %2313 = vmatprep.subr.bf16.mxu0 0
  %2314 = vmatpush1.bf16.msra.mxu0 0
  %2315 = vmatprep.subr.bf16.mxu0 0
  %2316 = vmatpush1.bf16.msra.mxu0 0
  %2317 = vmatprep.subr.bf16.mxu0 0
  %2318 = vmatpush1.bf16.msra.mxu0 %v1346
  %2319 = vmatprep.subr.bf16.mxu0 0
  %2320 = vmatpush1.bf16.msra.mxu0 %v1345
  %2321 = vmatprep.subr.bf16.mxu0 0
  %2322 = vmatpush2.bf16.msra.mxu0 0
  %2323 = vmatprep.subr.bf16.mxu0 0
  %2324 = vmatpush2.bf16.msra.mxu0 0
  %2325 = vmatprep.subr.bf16.mxu0 0
  %2326 = vmatpush2.bf16.msra.mxu0 0
  %2327 = vmatprep.subr.bf16.mxu0 0
  %2328 = vmatpush2.bf16.msra.mxu0 0
  %2329 = vmatprep.subr.bf16.mxu0 0
  %2330 = vmatpush2.bf16.msra.mxu0 0
  %2331 = vmatprep.subr.bf16.mxu0 0
  %2332 = vmatpush2.bf16.msra.mxu0 0
  %2333 = vmatprep.subr.bf16.mxu0 0
  %2334 = vmatpush2.bf16.msra.mxu0 0
  %2335 = vmatprep.subr.bf16.mxu0 0
  %2336 = vmatpush2.bf16.msra.mxu0 0
  %2337 = vmatprep.mubr.bf16.mxu0 0
  %2338 = vmatmul.mubr.bf16.gmra.mxu0 %v2303
  %v2339 = vpop.f32.mrf.mxu0
  %v2340 = vadd.f32 0.0, %v2339
  %v2341 = vpop.f32.mrf.mxu0
  %v2342 = vpop.f32.mrf.mxu0
  %v2343 = vpop.f32.mrf.mxu0
  %2344 = vdwg.mxu0
  %v2346 = vrot.slane %v2340, 6
  %v2348 = vadd.f32 %v1334, %v2346
  %v2349 = vtanh.pop %v2348
  %v2350 = vmul.f32 %v2349, %v47
  %v2351 = vadd.f32 %v2350, %v48
  %v2353 = vrot.slane %v2291, 6
  %v2355 = vmul.f32 %v2351, %v2353
  %2357 = vrot.lane.b32.xlu0 %v2351, 64
  %v2358 = vpop.permute.xlu0 %2357
  %v2360 = vmul.f32 %v2351, %v2358
  %2362 = vrot.lane.b32.xlu0 %v2360, 32
  %v2363 = vpop.permute.xlu0 %2362
  %v2365 = vadd.f32 %v2355, %v2363
  %v2366 = vtanh.pop %v2365
  %2368 = vrot.lane.b32.xlu0 %v2366, 64
  %v2369 = vpop.permute.xlu0 %2368
  %v2371 = vmul.f32 %v2351, %v2369
  %v2372 = vpack.c.bf16 %v2371, %v2371
  %v2374 = vrot.slane %v2372, 1
  %2375 = vrot.lane.b32.xlu0 %v2374, 32
  %v2376 = vpop.permute.xlu0 %2375
  %v2378 = vsel %vm62, %v2376, 0
  %2380 = vmatprep.subr.bf16.mxu0 0
  %2381 = vmatpush1.bf16.msra.mxu0 0
  %2382 = vmatprep.subr.bf16.mxu0 0
  %2383 = vmatpush1.bf16.msra.mxu0 0
  %2384 = vmatprep.subr.bf16.mxu0 0
  %2385 = vmatpush1.bf16.msra.mxu0 0
  %2386 = vmatprep.subr.bf16.mxu0 0
  %2387 = vmatpush1.bf16.msra.mxu0 0
  %2388 = vmatprep.subr.bf16.mxu0 0
  %2389 = vmatpush1.bf16.msra.mxu0 0
  %2390 = vmatprep.subr.bf16.mxu0 0
  %2391 = vmatpush1.bf16.msra.mxu0 0
  %2392 = vmatprep.subr.bf16.mxu0 0
  %2393 = vmatpush1.bf16.msra.mxu0 %v1346
  %2394 = vmatprep.subr.bf16.mxu0 0
  %2395 = vmatpush1.bf16.msra.mxu0 %v1345
  %2396 = vmatprep.subr.bf16.mxu0 0
  %2397 = vmatpush2.bf16.msra.mxu0 0
  %2398 = vmatprep.subr.bf16.mxu0 0
  %2399 = vmatpush2.bf16.msra.mxu0 0
  %2400 = vmatprep.subr.bf16.mxu0 0
  %2401 = vmatpush2.bf16.msra.mxu0 0
  %2402 = vmatprep.subr.bf16.mxu0 0
  %2403 = vmatpush2.bf16.msra.mxu0 0
  %2404 = vmatprep.subr.bf16.mxu0 0
  %2405 = vmatpush2.bf16.msra.mxu0 0
  %2406 = vmatprep.subr.bf16.mxu0 0
  %2407 = vmatpush2.bf16.msra.mxu0 0
  %2408 = vmatprep.subr.bf16.mxu0 0
  %2409 = vmatpush2.bf16.msra.mxu0 0
  %2410 = vmatprep.subr.bf16.mxu0 0
  %2411 = vmatpush2.bf16.msra.mxu0 0
  %2412 = vmatprep.mubr.bf16.mxu0 0
  %2413 = vmatmul.mubr.bf16.gmra.mxu0 %v2378
  %v2414 = vpop.f32.mrf.mxu0
  %v2415 = vadd.f32 0.0, %v2414
  %v2416 = vpop.f32.mrf.mxu0
  %v2417 = vpop.f32.mrf.mxu0
  %v2418 = vpop.f32.mrf.mxu0
  %2419 = vdwg.mxu0
  %v2421 = vrot.slane %v2415, 4
  %v2423 = vadd.f32 %v1334, %v2421
  %v2424 = vtanh.pop %v2423
  %v2425 = vmul.f32 %v2424, %v47
  %v2426 = vadd.f32 %v2425, %v48
  %v2428 = vrot.slane %v2365, 6
  %v2430 = vmul.f32 %v2426, %v2428
  %2432 = vrot.lane.b32.xlu0 %v2426, 64
  %v2433 = vpop.permute.xlu0 %2432
  %v2435 = vmul.f32 %v2426, %v2433
  %2437 = vrot.lane.b32.xlu0 %v2435, 32
  %v2438 = vpop.permute.xlu0 %2437
  %v2440 = vadd.f32 %v2430, %v2438
  %v2441 = vtanh.pop %v2440
  %2443 = vrot.lane.b32.xlu0 %v2441, 64
  %v2444 = vpop.permute.xlu0 %2443
  %v2446 = vmul.f32 %v2426, %v2444
  %v2447 = vpack.c.bf16 %v2446, %v2446
  %v2449 = vrot.slane %v2447, 2
  %2450 = vrot.lane.b32.xlu0 %v2449, 32
  %v2451 = vpop.permute.xlu0 %2450
  %v2453 = vsel %vm62, %v2451, 0
  %2455 = vmatprep.subr.bf16.mxu0 0
  %2456 = vmatpush1.bf16.msra.mxu0 0
  %2457 = vmatprep.subr.bf16.mxu0 0
  %2458 = vmatpush1.bf16.msra.mxu0 0
  %2459 = vmatprep.subr.bf16.mxu0 0
  %2460 = vmatpush1.bf16.msra.mxu0 0
  %2461 = vmatprep.subr.bf16.mxu0 0
  %2462 = vmatpush1.bf16.msra.mxu0 0
  %2463 = vmatprep.subr.bf16.mxu0 0
  %2464 = vmatpush1.bf16.msra.mxu0 0
  %2465 = vmatprep.subr.bf16.mxu0 0
  %2466 = vmatpush1.bf16.msra.mxu0 0
  %2467 = vmatprep.subr.bf16.mxu0 0
  %2468 = vmatpush1.bf16.msra.mxu0 %v1346
  %2469 = vmatprep.subr.bf16.mxu0 0
  %2470 = vmatpush1.bf16.msra.mxu0 %v1345
  %2471 = vmatprep.subr.bf16.mxu0 0
  %2472 = vmatpush2.bf16.msra.mxu0 0
  %2473 = vmatprep.subr.bf16.mxu0 0
  %2474 = vmatpush2.bf16.msra.mxu0 0
  %2475 = vmatprep.subr.bf16.mxu0 0
  %2476 = vmatpush2.bf16.msra.mxu0 0
  %2477 = vmatprep.subr.bf16.mxu0 0
  %2478 = vmatpush2.bf16.msra.mxu0 0
  %2479 = vmatprep.subr.bf16.mxu0 0
  %2480 = vmatpush2.bf16.msra.mxu0 0
  %2481 = vmatprep.subr.bf16.mxu0 0
  %2482 = vmatpush2.bf16.msra.mxu0 0
  %2483 = vmatprep.subr.bf16.mxu0 0
  %2484 = vmatpush2.bf16.msra.mxu0 0
  %2485 = vmatprep.subr.bf16.mxu0 0
  %2486 = vmatpush2.bf16.msra.mxu0 0
  %2487 = vmatprep.mubr.bf16.mxu0 0
  %2488 = vmatmul.mubr.bf16.gmra.mxu0 %v2453
  %v2489 = vpop.f32.mrf.mxu0
  %v2490 = vadd.f32 0.0, %v2489
  %v2491 = vpop.f32.mrf.mxu0
  %v2492 = vpop.f32.mrf.mxu0
  %v2493 = vpop.f32.mrf.mxu0
  %2494 = vdwg.mxu0
  %v2496 = vrot.slane %v2490, 2
  %v2498 = vadd.f32 %v1334, %v2496
  %v2499 = vtanh.pop %v2498
  %v2500 = vmul.f32 %v2499, %v47
  %v2501 = vadd.f32 %v2500, %v48
  %v2503 = vrot.slane %v2440, 6
  %v2505 = vmul.f32 %v2501, %v2503
  %2507 = vrot.lane.b32.xlu0 %v2501, 64
  %v2508 = vpop.permute.xlu0 %2507
  %v2510 = vmul.f32 %v2501, %v2508
  %2512 = vrot.lane.b32.xlu0 %v2510, 32
  %v2513 = vpop.permute.xlu0 %2512
  %v2515 = vadd.f32 %v2505, %v2513
  %v2516 = vtanh.pop %v2515
  %2518 = vrot.lane.b32.xlu0 %v2516, 64
  %v2519 = vpop.permute.xlu0 %2518
  %v2521 = vmul.f32 %v2501, %v2519
  %v2522 = vld [vmem:[%s5] sm:$0x1]
  %v2524 = vlaneseq
  %v2525 = vshrl.u32 %v2524, 7
  %v2526 = vsub.s32 0, %v2525
  %v2527 = vrot.slane %v2522, %v2526
  %2528 = vrot.lane.b32.xlu0 %v2527, 96
  %v2529 = vpop.permute.xlu0 %2528
  %v2531 = vmul.f32 %v2521, %v2529
  %2533 = vrot.lane.b32.xlu0 %v2531, 32
  %v2534 = vpop.permute.xlu0 %2533
  %vm2536 = vcmask 261126
  %v2537 = vsel %vm2536, %v2534, 0.0
  %2538 = vadd.xlane.f32.xlu0 %v2537
  %v2539 = vpop.xlane.xlu0 %2538
  %v2540 = vld [vmem:[#allocation3] sm:$0x1]
  %v2542 = vlaneseq
  %v2543 = vshrl.u32 %v2542, 7
  %v2544 = vsub.s32 0, %v2543
  %v2545 = vrot.slane %v2540, %v2544
  %v2547 = vadd.f32 %v2539, %v2545
  %v2548 = vsub.f32 %v2547, %v2547
  %v2549 = vmul.f32 %v2548, 1.442695
  %v2550 = vpow.pop %v2549
  %v2551 = vadd.f32 %v2550, 0.0
  %v2552 = vrcp.pop %v2551
  %v2553 = vmul.f32 %v2550, %v2552
  %vm2554 = vcmask 7174
  %2555 = vst.msk [vmem:[%s7 - $0x6] sm:$0xc0] %vm2554, %v2553
  // Predicated region
  $region30: #{lstm_classifier_forward.1} parent=0 // pred_check
    _
  $region31: #{lstm_classifier_forward.1} parent=0 // pred_check_branch
    %2557 = sbr.rel (0) target = $region33
  $region32: #{lstm_classifier_forward.1} parent=0 // pred_region
    _
  $region33: #{lstm_classifier_forward.1} parent=0 // pred_fallthru
    _
  // Predicated region
  $region34: #{lstm_classifier_forward.1} parent=0 // pred_check
    _
  $region35: #{lstm_classifier_forward.1} parent=0 // pred_check_branch
    %2559 = sbr.rel (0) target = $region37
  $region36: #{lstm_classifier_forward.1} parent=0 // pred_region
    _
  $region37: #{lstm_classifier_forward.1} parent=0 // pred_fallthru
    _

</llo_original>
